<compile_context>
chip_gen: v7x
topology: tpu7x:2x2x1
jax: 0.10.0
libtpu: 0.0.40
codegen_flags: <defaults>
</compile_context>

<pallas_src>
import numpy as np
import jax
import jax.numpy as jnp
from jax.experimental import pallas as pl
from jax.experimental.pallas import tpu as pltpu

# ----- constants from the PyTorch module -----
COND_DIM = 6
COND_OUT_DIM = 12
GLOW_COUPLINGBLOCK_FACTOR = 1
ENCODING_LENGTH = 20
LATENT_DIM = 6 * ENCODING_LENGTH - 6          # 114
N_DIM = LATENT_DIM + 6                        # 120
HIDDEN = 1024 * GLOW_COUPLINGBLOCK_FACTOR     # 1024
SPLIT1 = N_DIM // 2                           # 60
SPLIT2 = N_DIM - SPLIT1                       # 60
SUB_IN = SPLIT2 + COND_OUT_DIM                # 72  (coupling-half + condition)
CLAMP = 2.0
N_BLOCKS = 6
COND_HIDDEN = 256
S_SCALE = CLAMP * 0.636

# ----- lane-padded geometry used by the kernel -----
HALF_PAD = 64                                 # each 60-wide coupling half -> 64 lanes
N_PAD = 2 * HALF_PAD                          # 120 -> 128
COND_DIM_PAD = 8                              # 6  -> 8
COND_OUT_PAD = 16                             # 12 -> 16
SUB_IN_PAD = 128                              # fused operand: [x-half 64 | cond 16 | zeros 48]

MAX_BM = 512                                  # batch-tile cap (sweepable)


def _round_up(n, m):
    return (n + m - 1) // m * m


def _atan(x):
    """float32-accurate arctan (Cephes atanf) built only from ops with guaranteed
    Mosaic lowerings (mul/add/div/abs/where)."""
    sgn = jnp.where(x < 0.0, -1.0, 1.0)
    ax = jnp.abs(x)
    big = ax > 2.414213562373095          # tan(3*pi/8)
    mid = ax > 0.4142135623730950         # tan(pi/8)
    safe_big = jnp.where(big, ax, jnp.float32(2.0))
    safe_mid = jnp.where(mid, ax + 1.0, jnp.float32(2.0))
    xr = jnp.where(big, -1.0 / safe_big,
                   jnp.where(mid, (ax - 1.0) / safe_mid, ax))
    y0 = jnp.where(big, jnp.float32(np.pi / 2.0),
                   jnp.where(mid, jnp.float32(np.pi / 4.0), jnp.float32(0.0)))
    z = xr * xr
    p = (((8.05374449538e-2 * z - 1.38776856032e-1) * z
          + 1.99777106478e-1) * z - 3.33329491539e-1)
    return sgn * (y0 + (p * z * xr + xr))


# ----------------- fused kernel: cond_net + 6 x (GLOW coupling + permute) -----------------
def _fused_inn_kernel(x_ref, cond_ref,
                      cw1_ref, cb1_ref, cw2_ref, cb2_ref,
                      w2f_ref, b2a_ref, w2b_ref, b2b_ref,
                      w1f_ref, b1a_ref, w1b_ref, b1b_ref,
                      perm_ref,
                      y_ref, jac_ref,
                      xc_sc):
    k = pl.program_id(1)
    f32 = jnp.float32
    bf16 = jnp.bfloat16

    @pl.when(k == 0)
    def _init():
        # cond_net: Linear(6,256) -> ReLU -> Linear(256,12), once per batch tile.
        h = jnp.dot(cond_ref[...].astype(bf16), cw1_ref[...],
                    preferred_element_type=f32) + cb1_ref[...]
        c = jnp.dot(jnp.maximum(h.astype(bf16), 0.0), cw2_ref[...],
                    preferred_element_type=f32) + cb2_ref[...]
        # fused-operand scratch: [x-half | cond | zeros]; cond lanes written once/tile.
        xc_sc[...] = jnp.zeros_like(xc_sc)
        xc_sc[:, HALF_PAD:HALF_PAD + COND_OUT_PAD] = c
        y_ref[...] = x_ref[...]            # INN state lives in the VMEM-resident output
        jac_ref[...] = jnp.zeros_like(jac_ref)

    z = y_ref[...]
    x1 = z[:, :HALF_PAD]
    x2 = z[:, HALF_PAD:]

    # GLOW coupling 1:  y1 = exp(s2) * x1 + t2,  [s2 | t2] = subnet2([x2, c]).
    # The [x2, c] operand is assembled in the scratch (aligned lane writes) so the
    # first layer is a single K=128 MXU dot against the row-stacked weight w2f[k].
    xc_sc[:, :HALF_PAD] = x2
    h2 = jnp.dot(xc_sc[...].astype(bf16), w2f_ref[k],
                 preferred_element_type=f32) + b2a_ref[k]
    a2 = jnp.dot(jnp.maximum(h2.astype(bf16), 0.0), w2b_ref[k],
                 preferred_element_type=f32) + b2b_ref[k]
    s2 = S_SCALE * _atan(a2[:, :HALF_PAD])          # pad lanes of a2 are exactly 0
    y1 = jnp.exp(s2) * x1 + a2[:, HALF_PAD:]

    # GLOW coupling 2:  y2 = exp(s1) * x2 + t1,  [s1 | t1] = subnet1([y1, c]).
    xc_sc[:, :HALF_PAD] = y1
    h1 = jnp.dot(xc_sc[...].astype(bf16), w1f_ref[k],
                 preferred_element_type=f32) + b1a_ref[k]
    a1 = jnp.dot(jnp.maximum(h1.astype(bf16), 0.0), w1b_ref[k],
                 preferred_element_type=f32) + b1b_ref[k]
    s1 = S_SCALE * _atan(a1[:, :HALF_PAD])
    y2 = jnp.exp(s1) * x2 + a1[:, HALF_PAD:]

    # running log|det J| (pad lanes of s1/s2 are exactly 0 -> contribute nothing)
    jac_ref[...] = jac_ref[...] + (jnp.sum(s2, axis=1, keepdims=True)
                                   + jnp.sum(s1, axis=1, keepdims=True))

    # PermuteRandom(seed=k) as ONE (BM,128)x(128,128) dot with a 0/1 permutation matrix
    # (exactly one nonzero per column -> exact bf16 round of the source lane).
    y_ref[:, :HALF_PAD] = y1
    y_ref[:, HALF_PAD:] = y2
    y_ref[...] = jnp.dot(y_ref[...].astype(bf16), perm_ref[k],
                         preferred_element_type=f32)


# ----------------- parameters (deterministic synthetic init) -----------------
def init_params(key):
    """Returns (kernel_params, ref_params).

    kernel_params: lane-padded, block-stacked, bf16 weights for the fused kernel.
    ref_params:    raw (unpadded, f32) weights + permutations for the pure-JAX reference.
    """
    keys = jax.random.split(key, 1 + N_BLOCKS)

    kc1, kc2 = jax.random.split(keys[0])
    cw1 = jax.random.normal(kc1, (COND_DIM, COND_HIDDEN), jnp.float32) / np.sqrt(COND_DIM)
    cb1 = jnp.zeros((1, COND_HIDDEN), jnp.float32)
    cw2 = jax.random.normal(kc2, (COND_HIDDEN, COND_OUT_DIM), jnp.float32) / np.sqrt(COND_HIDDEN)
    cb2 = jnp.zeros((1, COND_OUT_DIM), jnp.float32)

    # INN trainable params were reset to 0.05 * randn in the PyTorch __init__.
    std = 0.05
    raw_blocks = []
    for k in range(N_BLOCKS):
        ks = jax.random.split(keys[1 + k], 8)
        nrm = lambda kk, shape: std * jax.random.normal(kk, shape, jnp.float32)
        raw_blocks.append(dict(
            # subnet2 (drives coupling of x1): Linear(72,1024) -> ReLU -> Linear(1024,120)
            w2a=nrm(ks[0], (SUB_IN, HIDDEN)), b2a=nrm(ks[1], (1, HIDDEN)),
            w2b=nrm(ks[2], (HIDDEN, 2 * SPLIT1)), b2b=nrm(ks[3], (1, 2 * SPLIT1)),
            # subnet1 (drives coupling of x2)
            w1a=nrm(ks[4], (SUB_IN, HIDDEN)), b1a=nrm(ks[5], (1, HIDDEN)),
            w1b=nrm(ks[6], (HIDDEN, 2 * SPLIT2)), b1b=nrm(ks[7], (1, 2 * SPLIT2)),
        ))

    # PermuteRandom(seed=k) -> np.random.seed(k); np.random.permutation(N_DIM)
    perms = []
    for k in range(N_BLOCKS):
        np.random.seed(k)
        perms.append(np.random.permutation(N_DIM).astype(np.int32))

    # ---- kernel-layout params ----
    def pad_half_cols(w):
        # (..., 120) -> (..., 128): [first 60 | 4 zeros | last 60 | 4 zeros]
        zpad = jnp.zeros(w.shape[:-1] + (HALF_PAD - SPLIT1,), w.dtype)
        return jnp.concatenate([w[..., :SPLIT1], zpad, w[..., SPLIT1:], zpad], axis=-1)

    def fuse_first_layer(w):
        # (72, 1024) -> (128, 1024): rows [0:60]=x-half, [64:76]=cond, rest zero.
        # Zero pad rows keep the pad/zero lanes of the fused operand inert.
        out = jnp.zeros((SUB_IN_PAD, HIDDEN), w.dtype)
        out = out.at[:SPLIT2, :].set(w[:SPLIT2])
        out = out.at[HALF_PAD:HALF_PAD + COND_OUT_DIM, :].set(w[SPLIT2:])
        return out

    stack = {n: [] for n in ("w2f", "b2a", "w2b", "b2b",
                             "w1f", "b1a", "w1b", "b1b")}
    for p in raw_blocks:
        stack["w2f"].append(fuse_first_layer(p["w2a"]))
        stack["b2a"].append(p["b2a"])
        stack["w2b"].append(pad_half_cols(p["w2b"]))
        stack["b2b"].append(pad_half_cols(p["b2b"]))
        stack["w1f"].append(fuse_first_layer(p["w1a"]))
        stack["b1a"].append(p["b1a"])
        stack["w1b"].append(pad_half_cols(p["w1b"]))
        stack["b1b"].append(pad_half_cols(p["b1b"]))

    kernel_params = {}
    for name, arrs in stack.items():
        s = jnp.stack(arrs)
        kernel_params[name] = s if name.startswith("b") else s.astype(jnp.bfloat16)

    # 0/1 permutation matrices in the padded index space:  out = y_pad @ P.
    pad_idx = lambda i: np.where(i < SPLIT1, i, i + (HALF_PAD - SPLIT1))
    pmats = np.zeros((N_BLOCKS, N_PAD, N_PAD), np.float32)
    for k, perm in enumerate(perms):
        pmats[k, pad_idx(perm), pad_idx(np.arange(N_DIM))] = 1.0
    kernel_params["perm"] = jnp.asarray(pmats).astype(jnp.bfloat16)

    # cond_net weights, padded + bf16 for the kernel
    kernel_params["cw1"] = jnp.pad(
        cw1, ((0, COND_DIM_PAD - COND_DIM), (0, 0))).astype(jnp.bfloat16)             # (8, 256)
    kernel_params["cb1"] = cb1                                                        # (1, 256)
    kernel_params["cw2"] = jnp.pad(
        cw2, ((0, 0), (0, COND_OUT_PAD - COND_OUT_DIM))).astype(jnp.bfloat16)         # (256, 16)
    kernel_params["cb2"] = jnp.pad(cb2, ((0, 0), (0, COND_OUT_PAD - COND_OUT_DIM)))   # (1, 16)

    ref_params = dict(cw1=cw1, cb1=cb1, cw2=cw2, cb2=cb2,
                      blocks=raw_blocks, perms=perms)
    return kernel_params, ref_params


def _choose_batch_tile(b8):
    """Batch tile: as large as possible (cap 512), but split into >= 2 tiles when the
    batch allows so the 'parallel' axis feeds both v7x TensorCores."""
    if b8 < 128:
        return b8                                    # one small tile
    if b8 <= 2 * MAX_BM:
        return _round_up((b8 + 1) // 2, 8)           # exactly two tiles
    return MAX_BM


# ----------------- full Local_INN.forward -----------------
def local_inn_forward(x, cond, kp):
    B = x.shape[0]
    B8 = _round_up(B, 8)
    BM = _choose_batch_tile(B8)
    B_pad = _round_up(B8, BM)
    nb = B_pad // BM

    # lane-pad: [x[:, :60] | 0*4 | x[:, 60:] | 0*4], batch padded to a tile multiple
    xp = jnp.concatenate(
        [jnp.pad(x[:, :SPLIT1], ((0, B_pad - B), (0, HALF_PAD - SPLIT1))),
         jnp.pad(x[:, SPLIT1:], ((0, B_pad - B), (0, HALF_PAD - SPLIT2)))], axis=1)
    cp = jnp.pad(cond, ((0, B_pad - B), (0, COND_DIM_PAD - COND_DIM)))

    def batch_spec(feat):
        return pl.BlockSpec((BM, feat), lambda b, k: (b, 0))

    def const_spec(arr):
        # Full-array block + constant index map -> DMA'd into VMEM once, resident
        # for the whole call (no per-tile weight re-streaming).
        zeros = (0,) * arr.ndim
        return pl.BlockSpec(arr.shape, lambda b, k, _z=zeros: _z)

    weight_names = ("cw1", "cb1", "cw2", "cb2",
                    "w2f", "b2a", "w2b", "b2b",
                    "w1f", "b1a", "w1b", "b1b", "perm")
    weight_arrays = tuple(kp[n] for n in weight_names)
    in_arrays = (xp, cp) + weight_arrays
    in_specs = ([batch_spec(N_PAD), batch_spec(COND_DIM_PAD)]
                + [const_spec(a) for a in weight_arrays])

    weight_bytes = sum(int(np.prod(a.shape)) * a.dtype.itemsize for a in weight_arrays)

    # advisory cost hint for the XLA scheduler (weights counted once: VMEM-resident)
    mm_macs_block = 2 * SUB_IN_PAD * HIDDEN + 2 * HIDDEN * N_PAD + N_PAD * N_PAD
    cond_macs = COND_DIM_PAD * COND_HIDDEN + COND_HIDDEN * COND_OUT_PAD
    cost = pl.CostEstimate(
        flops=int(2 * B_pad * (N_BLOCKS * mm_macs_block + cond_macs)),
        transcendentals=int(B_pad * N_BLOCKS * 2 * HALF_PAD),
        bytes_accessed=int(weight_bytes + 4 * B_pad * (2 * N_PAD + COND_DIM_PAD + 1)))

    # explicit VMEM budget: double-buffered resident weights + per-tile I/O blocks +
    # fused-operand scratch + headroom for the (BM,1024) matmul temporaries.
    vmem_est = (2 * weight_bytes
                + 2 * 4 * BM * (N_PAD + COND_DIM_PAD + N_PAD + 128)
                + 4 * BM * SUB_IN_PAD
                + 10 * 4 * BM * HIDDEN)
    vmem_limit = int(min(max(vmem_est, 32 * 1024 * 1024), 48 * 1024 * 1024))

    zp, jac = pl.pallas_call(
        _fused_inn_kernel,
        grid_spec=pltpu.PrefetchScalarGridSpec(
            num_scalar_prefetch=0,
            grid=(nb, N_BLOCKS),
            in_specs=in_specs,
            out_specs=(batch_spec(N_PAD), batch_spec(1)),
            scratch_shapes=[pltpu.VMEM((BM, SUB_IN_PAD), jnp.float32)],
        ),
        out_shape=(jax.ShapeDtypeStruct((B_pad, N_PAD), jnp.float32),
                   jax.ShapeDtypeStruct((B_pad, 1), jnp.float32)),
        compiler_params=pltpu.CompilerParams(
            dimension_semantics=("parallel", "arbitrary"),
            vmem_limit_bytes=vmem_limit),
        cost_estimate=cost,
    )(*in_arrays)

    z = jnp.concatenate([zp[:B, :SPLIT1], zp[:B, HALF_PAD:HALF_PAD + SPLIT2]], axis=1)
    return z, jac[:B, 0]


# ----------------- matched-precision pure-JAX reference -----------------
def reference_forward(x, cond, rp):
    """Same math, same mixed-precision policy as the kernel (bf16 weights & matmul
    inputs, f32 accumulation & elementwise, state rounded to bf16 at block boundaries),
    but using the original unpadded layout, concats and gather permutations."""
    f32 = jnp.float32
    bf = lambda a: a.astype(jnp.bfloat16)
    h = jnp.dot(bf(cond), bf(rp["cw1"]), preferred_element_type=f32) + rp["cb1"]
    c = jnp.dot(bf(jnp.maximum(h, 0.0)), bf(rp["cw2"]), preferred_element_type=f32) + rp["cb2"]
    c_b = bf(c)
    z = x
    jac = jnp.zeros((x.shape[0],), f32)
    for k, p in enumerate(rp["blocks"]):
        x1, x2 = z[:, :SPLIT1], z[:, SPLIT1:]
        h2 = jnp.dot(jnp.concatenate([bf(x2), c_b], axis=1), bf(p["w2a"]),
                     preferred_element_type=f32) + p["b2a"]
        a2 = jnp.dot(bf(jnp.maximum(h2, 0.0)), bf(p["w2b"]),
                     preferred_element_type=f32) + p["b2b"]
        s2, t2 = S_SCALE * _atan(a2[:, :SPLIT1]), a2[:, SPLIT1:]
        y1 = jnp.exp(s2) * x1 + t2
        h1 = jnp.dot(jnp.concatenate([bf(y1), c_b], axis=1), bf(p["w1a"]),
                     preferred_element_type=f32) + p["b1a"]
        a1 = jnp.dot(bf(jnp.maximum(h1, 0.0)), bf(p["w1b"]),
                     preferred_element_type=f32) + p["b1b"]
        s1, t1 = S_SCALE * _atan(a1[:, :SPLIT2]), a1[:, SPLIT2:]
        y2 = jnp.exp(s1) * x2 + t1
        jac = jac + jnp.sum(s2, axis=1) + jnp.sum(s1, axis=1)
        y = jnp.concatenate([y1, y2], axis=1)
        z = bf(y).astype(f32)[:, rp["perms"][k]]     # == kernel's bf16 permutation matmul
    return z, jac


if __name__ == "__main__":
    key = jax.random.PRNGKey(0)
    k_par, k_x, k_c = jax.random.split(key, 3)
    kernel_params, ref_params = init_params(k_par)

    B = 8
    x = jax.random.normal(k_x, (B, N_DIM), jnp.float32)        # (8, 120)
    cond = jax.random.normal(k_c, (B, COND_DIM), jnp.float32)  # (8, 6)

    fwd = jax.jit(lambda xx, cc: local_inn_forward(xx, cc, kernel_params))
    z, log_jac = fwd(x, cond)
    jax.block_until_ready((z, log_jac))

    assert z.shape == (B, N_DIM) and z.dtype == jnp.float32
    assert log_jac.shape == (B,) and log_jac.dtype == jnp.float32
    assert bool(jnp.all(jnp.isfinite(z))) and bool(jnp.all(jnp.isfinite(log_jac)))

    # validate the fused kernel against the matched-precision pure-JAX reference
    z_exp, jac_exp = reference_forward(x, cond, ref_params)
    err_z = float(jnp.max(jnp.abs(z - z_exp)))
    err_j = float(jnp.max(jnp.abs(log_jac - jac_exp)))
    assert err_z < 1e-2, f"z mismatch vs reference: {err_z}"
    assert err_j < 1e-2, f"log_jac mismatch vs reference: {err_j}"

    print("KERNEL_OK")
</pallas_src>

<mosaic_0001>
module attributes {stable_mosaic.version = 11 : i64} {
  func.func @_fused_inn_kernel(%arg0: i32, %arg1: i32, %arg2: memref<8x128xf32, #tpu.memory_space<vmem>>, %arg3: memref<8x8xf32, #tpu.memory_space<vmem>>, %arg4: memref<8x256xbf16, #tpu.memory_space<vmem>>, %arg5: memref<1x256xf32, #tpu.memory_space<vmem>>, %arg6: memref<256x16xbf16, #tpu.memory_space<vmem>>, %arg7: memref<1x16xf32, #tpu.memory_space<vmem>>, %arg8: memref<6x128x1024xbf16, #tpu.memory_space<vmem>>, %arg9: memref<6x1x1024xf32, #tpu.memory_space<vmem>>, %arg10: memref<6x1024x128xbf16, #tpu.memory_space<vmem>>, %arg11: memref<6x1x128xf32, #tpu.memory_space<vmem>>, %arg12: memref<6x128x1024xbf16, #tpu.memory_space<vmem>>, %arg13: memref<6x1x1024xf32, #tpu.memory_space<vmem>>, %arg14: memref<6x1024x128xbf16, #tpu.memory_space<vmem>>, %arg15: memref<6x1x128xf32, #tpu.memory_space<vmem>>, %arg16: memref<6x128x128xbf16, #tpu.memory_space<vmem>>, %arg17: memref<8x128xf32, #tpu.memory_space<vmem>>, %arg18: memref<8x1xf32, #tpu.memory_space<vmem>>, %arg19: memref<8x128xf32, #tpu.memory_space<vmem>>) attributes {dimension_semantics = [#tpu.dimension_semantics<parallel>, #tpu.dimension_semantics<arbitrary>], iteration_bounds = array<i64: 1, 6>, scalar_prefetch = 0 : i64, scratch_operands = 1 : i64, tpu.core_type = #tpu.core_type<tc>, window_params = [{transform_indices = @transform_0, window_bounds = array<i64: 8, 128>}, {transform_indices = @transform_1, window_bounds = array<i64: 8, 8>}, {pipeline_mode = #tpu.pipeline_mode<synchronous>, transform_indices = @transform_2, window_bounds = array<i64: 8, 256>}, {pipeline_mode = #tpu.pipeline_mode<synchronous>, transform_indices = @transform_3, window_bounds = array<i64: 1, 256>}, {pipeline_mode = #tpu.pipeline_mode<synchronous>, transform_indices = @transform_4, window_bounds = array<i64: 256, 16>}, {pipeline_mode = #tpu.pipeline_mode<synchronous>, transform_indices = @transform_5, window_bounds = array<i64: 1, 16>}, {pipeline_mode = #tpu.pipeline_mode<synchronous>, transform_indices = @transform_6, window_bounds = array<i64: 6, 128, 1024>}, {pipeline_mode = #tpu.pipeline_mode<synchronous>, transform_indices = @transform_7, window_bounds = array<i64: 6, 1, 1024>}, {pipeline_mode = #tpu.pipeline_mode<synchronous>, transform_indices = @transform_8, window_bounds = array<i64: 6, 1024, 128>}, {pipeline_mode = #tpu.pipeline_mode<synchronous>, transform_indices = @transform_9, window_bounds = array<i64: 6, 1, 128>}, {pipeline_mode = #tpu.pipeline_mode<synchronous>, transform_indices = @transform_10, window_bounds = array<i64: 6, 128, 1024>}, {pipeline_mode = #tpu.pipeline_mode<synchronous>, transform_indices = @transform_11, window_bounds = array<i64: 6, 1, 1024>}, {pipeline_mode = #tpu.pipeline_mode<synchronous>, transform_indices = @transform_12, window_bounds = array<i64: 6, 1024, 128>}, {pipeline_mode = #tpu.pipeline_mode<synchronous>, transform_indices = @transform_13, window_bounds = array<i64: 6, 1, 128>}, {pipeline_mode = #tpu.pipeline_mode<synchronous>, transform_indices = @transform_14, window_bounds = array<i64: 6, 128, 128>}, {transform_indices = @transform_15, window_bounds = array<i64: 8, 128>}, {transform_indices = @transform_16, window_bounds = array<i64: 8, 1>}]} {
    %c0_i32 = arith.constant 0 : i32
    %0 = arith.cmpi eq, %arg1, %c0_i32 : i32
    %1 = arith.extui %0 : i1 to i32
    %c0_i32_0 = arith.constant 0 : i32
    %2 = arith.cmpi ne, %1, %c0_i32_0 : i32
    scf.if %2 {
      %c0_83 = arith.constant 0 : index
      %c0_84 = arith.constant 0 : index
      %173 = vector.load %arg3[%c0_83, %c0_84] : memref<8x8xf32, #tpu.memory_space<vmem>>, vector<8x8xf32>
      %174 = arith.truncf %173 : vector<8x8xf32> to vector<8x8xbf16>
      %c0_85 = arith.constant 0 : index
      %c0_86 = arith.constant 0 : index
      %175 = vector.load %arg4[%c0_85, %c0_86] : memref<8x256xbf16, #tpu.memory_space<vmem>>, vector<8x256xbf16>
      %cst_87 = arith.constant dense<0.000000e+00> : vector<8x256xf32>
      %176 = tpu.matmul %174, %175, %cst_87 {dimension_numbers = #tpu.dot_dimension_numbers<[1], [0], [0], [1], [0, 0, 1, 1], [], []>} : vector<8x8xbf16>, vector<8x256xbf16>, vector<8x256xf32> -> vector<8x256xf32>
      %c0_88 = arith.constant 0 : index
      %c0_89 = arith.constant 0 : index
      %177 = vector.load %arg5[%c0_88, %c0_89] : memref<1x256xf32, #tpu.memory_space<vmem>>, vector<1x256xf32>
      %178 = vector.broadcast %177 : vector<1x256xf32> to vector<8x256xf32>
      %179 = arith.addf %176, %178 : vector<8x256xf32>
      %180 = arith.truncf %179 : vector<8x256xf32> to vector<8x256xbf16>
      %cst_90 = arith.constant 0.000000e+00 : bf16
      %181 = vector.broadcast %cst_90 : bf16 to vector<8x256xbf16>
      %182 = arith.maximumf %180, %181 : vector<8x256xbf16>
      %c0_91 = arith.constant 0 : index
      %c0_92 = arith.constant 0 : index
      %183 = vector.load %arg6[%c0_91, %c0_92] : memref<256x16xbf16, #tpu.memory_space<vmem>>, vector<256x16xbf16>
      %cst_93 = arith.constant dense<0.000000e+00> : vector<8x16xf32>
      %184 = tpu.matmul %182, %183, %cst_93 {dimension_numbers = #tpu.dot_dimension_numbers<[1], [0], [0], [1], [0, 0, 1, 1], [], []>} : vector<8x256xbf16>, vector<256x16xbf16>, vector<8x16xf32> -> vector<8x16xf32>
      %c0_94 = arith.constant 0 : index
      %c0_95 = arith.constant 0 : index
      %185 = vector.load %arg7[%c0_94, %c0_95] : memref<1x16xf32, #tpu.memory_space<vmem>>, vector<1x16xf32>
      %186 = vector.broadcast %185 : vector<1x16xf32> to vector<8x16xf32>
      %187 = arith.addf %184, %186 : vector<8x16xf32>
      %cst_96 = arith.constant 0.000000e+00 : f32
      %188 = vector.broadcast %cst_96 : f32 to vector<8x128xf32>
      %c0_97 = arith.constant 0 : index
      %c0_98 = arith.constant 0 : index
      %189 = vector.load %arg19[%c0_97, %c0_98] : memref<8x128xf32, #tpu.memory_space<vmem>>, vector<8x128xf32>
      tpu.vector_store %arg19[%c0_97, %c0_98], %188 {strides = array<i32>} : memref<8x128xf32, #tpu.memory_space<vmem>>, vector<8x128xf32>,
      %c0_99 = arith.constant 0 : index
      %c64_100 = arith.constant 64 : index
      %190 = vector.load %arg19[%c0_99, %c64_100] : memref<8x128xf32, #tpu.memory_space<vmem>>, vector<8x16xf32>
      tpu.vector_store %arg19[%c0_99, %c64_100], %187 {strides = array<i32>} : memref<8x128xf32, #tpu.memory_space<vmem>>, vector<8x16xf32>,
      %c0_101 = arith.constant 0 : index
      %c0_102 = arith.constant 0 : index
      %191 = vector.load %arg2[%c0_101, %c0_102] : memref<8x128xf32, #tpu.memory_space<vmem>>, vector<8x128xf32>
      %c0_103 = arith.constant 0 : index
      %c0_104 = arith.constant 0 : index
      %192 = vector.load %arg17[%c0_103, %c0_104] : memref<8x128xf32, #tpu.memory_space<vmem>>, vector<8x128xf32>
      tpu.vector_store %arg17[%c0_103, %c0_104], %191 {strides = array<i32>} : memref<8x128xf32, #tpu.memory_space<vmem>>, vector<8x128xf32>,
      %cst_105 = arith.constant 0.000000e+00 : f32
      %193 = vector.broadcast %cst_105 : f32 to vector<8x1xf32>
      %c0_106 = arith.constant 0 : index
      %c0_107 = arith.constant 0 : index
      %194 = vector.load %arg18[%c0_106, %c0_107] : memref<8x1xf32, #tpu.memory_space<vmem>>, vector<8x1xf32>
      tpu.vector_store %arg18[%c0_106, %c0_107], %193 {strides = array<i32>} : memref<8x1xf32, #tpu.memory_space<vmem>>, vector<8x1xf32>,
    } else {
    }
    %c0 = arith.constant 0 : index
    %c0_1 = arith.constant 0 : index
    %3 = vector.load %arg17[%c0, %c0_1] : memref<8x128xf32, #tpu.memory_space<vmem>>, vector<8x128xf32>
    %4 = vector.extract_strided_slice %3 {offsets = [0, 0], sizes = [8, 64], strides = [1, 1]} : vector<8x128xf32> to vector<8x64xf32>
    %5 = vector.extract_strided_slice %3 {offsets = [0, 64], sizes = [8, 64], strides = [1, 1]} : vector<8x128xf32> to vector<8x64xf32>
    %c0_2 = arith.constant 0 : index
    %c0_3 = arith.constant 0 : index
    %6 = vector.load %arg19[%c0_2, %c0_3] : memref<8x128xf32, #tpu.memory_space<vmem>>, vector<8x64xf32>
    tpu.vector_store %arg19[%c0_2, %c0_3], %5 {strides = array<i32>} : memref<8x128xf32, #tpu.memory_space<vmem>>, vector<8x64xf32>,
    %c0_4 = arith.constant 0 : index
    %c0_5 = arith.constant 0 : index
    %7 = vector.load %arg19[%c0_4, %c0_5] : memref<8x128xf32, #tpu.memory_space<vmem>>, vector<8x128xf32>
    %8 = arith.truncf %7 : vector<8x128xf32> to vector<8x128xbf16>
    %9 = arith.index_cast %arg1 : i32 to index
    %c0_6 = arith.constant 0 : index
    %c0_7 = arith.constant 0 : index
    %10 = vector.load %arg8[%9, %c0_6, %c0_7] : memref<6x128x1024xbf16, #tpu.memory_space<vmem>>, vector<1x128x1024xbf16>
    %11 = vector.shape_cast %10 : vector<1x128x1024xbf16> to vector<128x1024xbf16>
    %cst = arith.constant dense<0.000000e+00> : vector<8x1024xf32>
    %12 = tpu.matmul %8, %11, %cst {dimension_numbers = #tpu.dot_dimension_numbers<[1], [0], [0], [1], [0, 0, 1, 1], [], []>} : vector<8x128xbf16>, vector<128x1024xbf16>, vector<8x1024xf32> -> vector<8x1024xf32>
    %13 = arith.index_cast %arg1 : i32 to index
    %c0_8 = arith.constant 0 : index
    %c0_9 = arith.constant 0 : index
    %14 = vector.load %arg9[%13, %c0_8, %c0_9] : memref<6x1x1024xf32, #tpu.memory_space<vmem>>, vector<1x1x1024xf32>
    %15 = vector.shape_cast %14 : vector<1x1x1024xf32> to vector<1x1024xf32>
    %16 = vector.broadcast %15 : vector<1x1024xf32> to vector<8x1024xf32>
    %17 = arith.addf %12, %16 : vector<8x1024xf32>
    %18 = arith.truncf %17 : vector<8x1024xf32> to vector<8x1024xbf16>
    %cst_10 = arith.constant 0.000000e+00 : bf16
    %19 = vector.broadcast %cst_10 : bf16 to vector<8x1024xbf16>
    %20 = arith.maximumf %18, %19 : vector<8x1024xbf16>
    %21 = arith.index_cast %arg1 : i32 to index
    %c0_11 = arith.constant 0 : index
    %c0_12 = arith.constant 0 : index
    %22 = vector.load %arg10[%21, %c0_11, %c0_12] : memref<6x1024x128xbf16, #tpu.memory_space<vmem>>, vector<1x1024x128xbf16>
    %23 = vector.shape_cast %22 : vector<1x1024x128xbf16> to vector<1024x128xbf16>
    %cst_13 = arith.constant dense<0.000000e+00> : vector<8x128xf32>
    %24 = tpu.matmul %20, %23, %cst_13 {dimension_numbers = #tpu.dot_dimension_numbers<[1], [0], [0], [1], [0, 0, 1, 1], [], []>} : vector<8x1024xbf16>, vector<1024x128xbf16>, vector<8x128xf32> -> vector<8x128xf32>
    %25 = arith.index_cast %arg1 : i32 to index
    %c0_14 = arith.constant 0 : index
    %c0_15 = arith.constant 0 : index
    %26 = vector.load %arg11[%25, %c0_14, %c0_15] : memref<6x1x128xf32, #tpu.memory_space<vmem>>, vector<1x1x128xf32>
    %27 = vector.shape_cast %26 : vector<1x1x128xf32> to vector<1x128xf32>
    %28 = vector.broadcast %27 : vector<1x128xf32> to vector<8x128xf32>
    %29 = arith.addf %24, %28 : vector<8x128xf32>
    %30 = vector.extract_strided_slice %29 {offsets = [0, 0], sizes = [8, 64], strides = [1, 1]} : vector<8x128xf32> to vector<8x64xf32>
    %cst_16 = arith.constant 0.000000e+00 : f32
    %31 = vector.broadcast %cst_16 : f32 to vector<8x64xf32>
    %32 = arith.cmpf olt, %30, %31 : vector<8x64xf32>
    %cst_17 = arith.constant -1.000000e+00 : f32
    %cst_18 = arith.constant 1.000000e+00 : f32
    %33 = vector.broadcast %cst_17 : f32 to vector<8x64xf32>
    %34 = vector.broadcast %cst_18 : f32 to vector<8x64xf32>
    %35 = arith.select %32, %33, %34 : vector<8x64xi1>, vector<8x64xf32>
    %36 = math.absf %30 : vector<8x64xf32>
    %cst_19 = arith.constant 2.41421366 : f32
    %37 = vector.broadcast %cst_19 : f32 to vector<8x64xf32>
    %38 = arith.cmpf ogt, %36, %37 : vector<8x64xf32>
    %cst_20 = arith.constant 0.414213568 : f32
    %39 = vector.broadcast %cst_20 : f32 to vector<8x64xf32>
    %40 = arith.cmpf ogt, %36, %39 : vector<8x64xf32>
    %cst_21 = arith.constant 2.000000e+00 : f32
    %41 = vector.broadcast %cst_21 : f32 to vector<8x64xf32>
    %42 = arith.select %38, %36, %41 : vector<8x64xi1>, vector<8x64xf32>
    %cst_22 = arith.constant 1.000000e+00 : f32
    %43 = vector.broadcast %cst_22 : f32 to vector<8x64xf32>
    %44 = arith.addf %36, %43 : vector<8x64xf32>
    %cst_23 = arith.constant 2.000000e+00 : f32
    %45 = vector.broadcast %cst_23 : f32 to vector<8x64xf32>
    %46 = arith.select %40, %44, %45 : vector<8x64xi1>, vector<8x64xf32>
    %cst_24 = arith.constant -1.000000e+00 : f32
    %47 = vector.broadcast %cst_24 : f32 to vector<8x64xf32>
    %48 = arith.divf %47, %42 : vector<8x64xf32>
    %cst_25 = arith.constant 1.000000e+00 : f32
    %49 = vector.broadcast %cst_25 : f32 to vector<8x64xf32>
    %50 = arith.subf %36, %49 : vector<8x64xf32>
    %51 = arith.divf %50, %46 : vector<8x64xf32>
    %52 = arith.select %40, %51, %36 : vector<8x64xi1>, vector<8x64xf32>
    %53 = arith.select %38, %48, %52 : vector<8x64xi1>, vector<8x64xf32>
    %cst_26 = arith.constant 0.785398185 : f32
    %cst_27 = arith.constant 0.000000e+00 : f32
    %54 = vector.broadcast %cst_26 : f32 to vector<8x64xf32>
    %55 = vector.broadcast %cst_27 : f32 to vector<8x64xf32>
    %56 = arith.select %40, %54, %55 : vector<8x64xi1>, vector<8x64xf32>
    %cst_28 = arith.constant 1.57079637 : f32
    %57 = vector.broadcast %cst_28 : f32 to vector<8x64xf32>
    %58 = arith.select %38, %57, %56 : vector<8x64xi1>, vector<8x64xf32>
    %59 = arith.mulf %53, %53 : vector<8x64xf32>
    %cst_29 = arith.constant 0.0805374458 : f32
    %60 = vector.broadcast %cst_29 : f32 to vector<8x64xf32>
    %61 = arith.mulf %60, %59 : vector<8x64xf32>
    %cst_30 = arith.constant 0.138776854 : f32
    %62 = vector.broadcast %cst_30 : f32 to vector<8x64xf32>
    %63 = arith.subf %61, %62 : vector<8x64xf32>
    %64 = arith.mulf %63, %59 : vector<8x64xf32>
    %cst_31 = arith.constant 0.199777111 : f32
    %65 = vector.broadcast %cst_31 : f32 to vector<8x64xf32>
    %66 = arith.addf %64, %65 : vector<8x64xf32>
    %67 = arith.mulf %66, %59 : vector<8x64xf32>
    %cst_32 = arith.constant 0.333329499 : f32
    %68 = vector.broadcast %cst_32 : f32 to vector<8x64xf32>
    %69 = arith.subf %67, %68 : vector<8x64xf32>
    %70 = arith.mulf %69, %59 : vector<8x64xf32>
    %71 = arith.mulf %70, %53 : vector<8x64xf32>
    %72 = arith.addf %71, %53 : vector<8x64xf32>
    %73 = arith.addf %58, %72 : vector<8x64xf32>
    %74 = arith.mulf %35, %73 : vector<8x64xf32>
    %cst_33 = arith.constant 1.272000e+00 : f32
    %75 = vector.broadcast %cst_33 : f32 to vector<8x64xf32>
    %76 = arith.mulf %75, %74 : vector<8x64xf32>
    %77 = math.exp %76 : vector<8x64xf32>
    %78 = arith.mulf %77, %4 : vector<8x64xf32>
    %79 = vector.extract_strided_slice %29 {offsets = [0, 64], sizes = [8, 64], strides = [1, 1]} : vector<8x128xf32> to vector<8x64xf32>
    %80 = arith.addf %78, %79 : vector<8x64xf32>
    %c0_34 = arith.constant 0 : index
    %c0_35 = arith.constant 0 : index
    %81 = vector.load %arg19[%c0_34, %c0_35] : memref<8x128xf32, #tpu.memory_space<vmem>>, vector<8x64xf32>
    tpu.vector_store %arg19[%c0_34, %c0_35], %80 {strides = array<i32>} : memref<8x128xf32, #tpu.memory_space<vmem>>, vector<8x64xf32>,
    %c0_36 = arith.constant 0 : index
    %c0_37 = arith.constant 0 : index
    %82 = vector.load %arg19[%c0_36, %c0_37] : memref<8x128xf32, #tpu.memory_space<vmem>>, vector<8x128xf32>
    %83 = arith.truncf %82 : vector<8x128xf32> to vector<8x128xbf16>
    %84 = arith.index_cast %arg1 : i32 to index
    %c0_38 = arith.constant 0 : index
    %c0_39 = arith.constant 0 : index
    %85 = vector.load %arg12[%84, %c0_38, %c0_39] : memref<6x128x1024xbf16, #tpu.memory_space<vmem>>, vector<1x128x1024xbf16>
    %86 = vector.shape_cast %85 : vector<1x128x1024xbf16> to vector<128x1024xbf16>
    %cst_40 = arith.constant dense<0.000000e+00> : vector<8x1024xf32>
    %87 = tpu.matmul %83, %86, %cst_40 {dimension_numbers = #tpu.dot_dimension_numbers<[1], [0], [0], [1], [0, 0, 1, 1], [], []>} : vector<8x128xbf16>, vector<128x1024xbf16>, vector<8x1024xf32> -> vector<8x1024xf32>
    %88 = arith.index_cast %arg1 : i32 to index
    %c0_41 = arith.constant 0 : index
    %c0_42 = arith.constant 0 : index
    %89 = vector.load %arg13[%88, %c0_41, %c0_42] : memref<6x1x1024xf32, #tpu.memory_space<vmem>>, vector<1x1x1024xf32>
    %90 = vector.shape_cast %89 : vector<1x1x1024xf32> to vector<1x1024xf32>
    %91 = vector.broadcast %90 : vector<1x1024xf32> to vector<8x1024xf32>
    %92 = arith.addf %87, %91 : vector<8x1024xf32>
    %93 = arith.truncf %92 : vector<8x1024xf32> to vector<8x1024xbf16>
    %cst_43 = arith.constant 0.000000e+00 : bf16
    %94 = vector.broadcast %cst_43 : bf16 to vector<8x1024xbf16>
    %95 = arith.maximumf %93, %94 : vector<8x1024xbf16>
    %96 = arith.index_cast %arg1 : i32 to index
    %c0_44 = arith.constant 0 : index
    %c0_45 = arith.constant 0 : index
    %97 = vector.load %arg14[%96, %c0_44, %c0_45] : memref<6x1024x128xbf16, #tpu.memory_space<vmem>>, vector<1x1024x128xbf16>
    %98 = vector.shape_cast %97 : vector<1x1024x128xbf16> to vector<1024x128xbf16>
    %cst_46 = arith.constant dense<0.000000e+00> : vector<8x128xf32>
    %99 = tpu.matmul %95, %98, %cst_46 {dimension_numbers = #tpu.dot_dimension_numbers<[1], [0], [0], [1], [0, 0, 1, 1], [], []>} : vector<8x1024xbf16>, vector<1024x128xbf16>, vector<8x128xf32> -> vector<8x128xf32>
    %100 = arith.index_cast %arg1 : i32 to index
    %c0_47 = arith.constant 0 : index
    %c0_48 = arith.constant 0 : index
    %101 = vector.load %arg15[%100, %c0_47, %c0_48] : memref<6x1x128xf32, #tpu.memory_space<vmem>>, vector<1x1x128xf32>
    %102 = vector.shape_cast %101 : vector<1x1x128xf32> to vector<1x128xf32>
    %103 = vector.broadcast %102 : vector<1x128xf32> to vector<8x128xf32>
    %104 = arith.addf %99, %103 : vector<8x128xf32>
    %105 = vector.extract_strided_slice %104 {offsets = [0, 0], sizes = [8, 64], strides = [1, 1]} : vector<8x128xf32> to vector<8x64xf32>
    %cst_49 = arith.constant 0.000000e+00 : f32
    %106 = vector.broadcast %cst_49 : f32 to vector<8x64xf32>
    %107 = arith.cmpf olt, %105, %106 : vector<8x64xf32>
    %cst_50 = arith.constant -1.000000e+00 : f32
    %cst_51 = arith.constant 1.000000e+00 : f32
    %108 = vector.broadcast %cst_50 : f32 to vector<8x64xf32>
    %109 = vector.broadcast %cst_51 : f32 to vector<8x64xf32>
    %110 = arith.select %107, %108, %109 : vector<8x64xi1>, vector<8x64xf32>
    %111 = math.absf %105 : vector<8x64xf32>
    %cst_52 = arith.constant 2.41421366 : f32
    %112 = vector.broadcast %cst_52 : f32 to vector<8x64xf32>
    %113 = arith.cmpf ogt, %111, %112 : vector<8x64xf32>
    %cst_53 = arith.constant 0.414213568 : f32
    %114 = vector.broadcast %cst_53 : f32 to vector<8x64xf32>
    %115 = arith.cmpf ogt, %111, %114 : vector<8x64xf32>
    %cst_54 = arith.constant 2.000000e+00 : f32
    %116 = vector.broadcast %cst_54 : f32 to vector<8x64xf32>
    %117 = arith.select %113, %111, %116 : vector<8x64xi1>, vector<8x64xf32>
    %cst_55 = arith.constant 1.000000e+00 : f32
    %118 = vector.broadcast %cst_55 : f32 to vector<8x64xf32>
    %119 = arith.addf %111, %118 : vector<8x64xf32>
    %cst_56 = arith.constant 2.000000e+00 : f32
    %120 = vector.broadcast %cst_56 : f32 to vector<8x64xf32>
    %121 = arith.select %115, %119, %120 : vector<8x64xi1>, vector<8x64xf32>
    %cst_57 = arith.constant -1.000000e+00 : f32
    %122 = vector.broadcast %cst_57 : f32 to vector<8x64xf32>
    %123 = arith.divf %122, %117 : vector<8x64xf32>
    %cst_58 = arith.constant 1.000000e+00 : f32
    %124 = vector.broadcast %cst_58 : f32 to vector<8x64xf32>
    %125 = arith.subf %111, %124 : vector<8x64xf32>
    %126 = arith.divf %125, %121 : vector<8x64xf32>
    %127 = arith.select %115, %126, %111 : vector<8x64xi1>, vector<8x64xf32>
    %128 = arith.select %113, %123, %127 : vector<8x64xi1>, vector<8x64xf32>
    %cst_59 = arith.constant 0.785398185 : f32
    %cst_60 = arith.constant 0.000000e+00 : f32
    %129 = vector.broadcast %cst_59 : f32 to vector<8x64xf32>
    %130 = vector.broadcast %cst_60 : f32 to vector<8x64xf32>
    %131 = arith.select %115, %129, %130 : vector<8x64xi1>, vector<8x64xf32>
    %cst_61 = arith.constant 1.57079637 : f32
    %132 = vector.broadcast %cst_61 : f32 to vector<8x64xf32>
    %133 = arith.select %113, %132, %131 : vector<8x64xi1>, vector<8x64xf32>
    %134 = arith.mulf %128, %128 : vector<8x64xf32>
    %cst_62 = arith.constant 0.0805374458 : f32
    %135 = vector.broadcast %cst_62 : f32 to vector<8x64xf32>
    %136 = arith.mulf %135, %134 : vector<8x64xf32>
    %cst_63 = arith.constant 0.138776854 : f32
    %137 = vector.broadcast %cst_63 : f32 to vector<8x64xf32>
    %138 = arith.subf %136, %137 : vector<8x64xf32>
    %139 = arith.mulf %138, %134 : vector<8x64xf32>
    %cst_64 = arith.constant 0.199777111 : f32
    %140 = vector.broadcast %cst_64 : f32 to vector<8x64xf32>
    %141 = arith.addf %139, %140 : vector<8x64xf32>
    %142 = arith.mulf %141, %134 : vector<8x64xf32>
    %cst_65 = arith.constant 0.333329499 : f32
    %143 = vector.broadcast %cst_65 : f32 to vector<8x64xf32>
    %144 = arith.subf %142, %143 : vector<8x64xf32>
    %145 = arith.mulf %144, %134 : vector<8x64xf32>
    %146 = arith.mulf %145, %128 : vector<8x64xf32>
    %147 = arith.addf %146, %128 : vector<8x64xf32>
    %148 = arith.addf %133, %147 : vector<8x64xf32>
    %149 = arith.mulf %110, %148 : vector<8x64xf32>
    %cst_66 = arith.constant 1.272000e+00 : f32
    %150 = vector.broadcast %cst_66 : f32 to vector<8x64xf32>
    %151 = arith.mulf %150, %149 : vector<8x64xf32>
    %152 = math.exp %151 : vector<8x64xf32>
    %153 = arith.mulf %152, %5 : vector<8x64xf32>
    %154 = vector.extract_strided_slice %104 {offsets = [0, 64], sizes = [8, 64], strides = [1, 1]} : vector<8x128xf32> to vector<8x64xf32>
    %155 = arith.addf %153, %154 : vector<8x64xf32>
    %c0_67 = arith.constant 0 : index
    %c0_68 = arith.constant 0 : index
    %156 = vector.load %arg18[%c0_67, %c0_68] : memref<8x1xf32, #tpu.memory_space<vmem>>, vector<8x1xf32>
    %cst_69 = arith.constant dense<0.000000e+00> : vector<8xf32>
    %157 = vector.multi_reduction <add>, %76, %cst_69 [1] : vector<8x64xf32> to vector<8xf32>
    %158 = vector.shape_cast %157 : vector<8xf32> to vector<8x1xf32>
    %cst_70 = arith.constant dense<0.000000e+00> : vector<8xf32>
    %159 = vector.multi_reduction <add>, %151, %cst_70 [1] : vector<8x64xf32> to vector<8xf32>
    %160 = vector.shape_cast %159 : vector<8xf32> to vector<8x1xf32>
    %161 = arith.addf %158, %160 : vector<8x1xf32>
    %162 = arith.addf %156, %161 : vector<8x1xf32>
    %c0_71 = arith.constant 0 : index
    %c0_72 = arith.constant 0 : index
    %163 = vector.load %arg18[%c0_71, %c0_72] : memref<8x1xf32, #tpu.memory_space<vmem>>, vector<8x1xf32>
    tpu.vector_store %arg18[%c0_71, %c0_72], %162 {strides = array<i32>} : memref<8x1xf32, #tpu.memory_space<vmem>>, vector<8x1xf32>,
    %c0_73 = arith.constant 0 : index
    %c0_74 = arith.constant 0 : index
    %164 = vector.load %arg17[%c0_73, %c0_74] : memref<8x128xf32, #tpu.memory_space<vmem>>, vector<8x64xf32>
    tpu.vector_store %arg17[%c0_73, %c0_74], %80 {strides = array<i32>} : memref<8x128xf32, #tpu.memory_space<vmem>>, vector<8x64xf32>,
    %c0_75 = arith.constant 0 : index
    %c64 = arith.constant 64 : index
    %165 = vector.load %arg17[%c0_75, %c64] : memref<8x128xf32, #tpu.memory_space<vmem>>, vector<8x64xf32>
    tpu.vector_store %arg17[%c0_75, %c64], %155 {strides = array<i32>} : memref<8x128xf32, #tpu.memory_space<vmem>>, vector<8x64xf32>,
    %c0_76 = arith.constant 0 : index
    %c0_77 = arith.constant 0 : index
    %166 = vector.load %arg17[%c0_76, %c0_77] : memref<8x128xf32, #tpu.memory_space<vmem>>, vector<8x128xf32>
    %167 = arith.truncf %166 : vector<8x128xf32> to vector<8x128xbf16>
    %168 = arith.index_cast %arg1 : i32 to index
    %c0_78 = arith.constant 0 : index
    %c0_79 = arith.constant 0 : index
    %169 = vector.load %arg16[%168, %c0_78, %c0_79] : memref<6x128x128xbf16, #tpu.memory_space<vmem>>, vector<1x128x128xbf16>
    %170 = vector.shape_cast %169 : vector<1x128x128xbf16> to vector<128x128xbf16>
    %cst_80 = arith.constant dense<0.000000e+00> : vector<8x128xf32>
    %171 = tpu.matmul %167, %170, %cst_80 {dimension_numbers = #tpu.dot_dimension_numbers<[1], [0], [0], [1], [0, 0, 1, 1], [], []>} : vector<8x128xbf16>, vector<128x128xbf16>, vector<8x128xf32> -> vector<8x128xf32>
    %c0_81 = arith.constant 0 : index
    %c0_82 = arith.constant 0 : index
    %172 = vector.load %arg17[%c0_81, %c0_82] : memref<8x128xf32, #tpu.memory_space<vmem>>, vector<8x128xf32>
    tpu.vector_store %arg17[%c0_81, %c0_82], %171 {strides = array<i32>} : memref<8x128xf32, #tpu.memory_space<vmem>>, vector<8x128xf32>,
    return
  }
  func.func @transform_0(%arg0: i32, %arg1: i32) -> (i32, i32) {
    %c0_i32 = arith.constant 0 : i32
    %c0_i32_0 = arith.constant 0 : i32
    return %arg0, %c0_i32 : i32, i32
  }
  func.func @transform_1(%arg0: i32, %arg1: i32) -> (i32, i32) {
    %c0_i32 = arith.constant 0 : i32
    %c0_i32_0 = arith.constant 0 : i32
    return %arg0, %c0_i32 : i32, i32
  }
  func.func @transform_2(%arg0: i32, %arg1: i32) -> (i32, i32) {
    %c0_i32 = arith.constant 0 : i32
    %c0_i32_0 = arith.constant 0 : i32
    %c0_i32_1 = arith.constant 0 : i32
    return %c0_i32, %c0_i32_0 : i32, i32
  }
  func.func @transform_3(%arg0: i32, %arg1: i32) -> (i32, i32) {
    %c0_i32 = arith.constant 0 : i32
    %c0_i32_0 = arith.constant 0 : i32
    %c0_i32_1 = arith.constant 0 : i32
    return %c0_i32, %c0_i32_0 : i32, i32
  }
  func.func @transform_4(%arg0: i32, %arg1: i32) -> (i32, i32) {
    %c0_i32 = arith.constant 0 : i32
    %c0_i32_0 = arith.constant 0 : i32
    %c0_i32_1 = arith.constant 0 : i32
    return %c0_i32, %c0_i32_0 : i32, i32
  }
  func.func @transform_5(%arg0: i32, %arg1: i32) -> (i32, i32) {
    %c0_i32 = arith.constant 0 : i32
    %c0_i32_0 = arith.constant 0 : i32
    %c0_i32_1 = arith.constant 0 : i32
    return %c0_i32, %c0_i32_0 : i32, i32
  }
  func.func @transform_6(%arg0: i32, %arg1: i32) -> (i32, i32, i32) {
    %c0_i32 = arith.constant 0 : i32
    %c0_i32_0 = arith.constant 0 : i32
    %c0_i32_1 = arith.constant 0 : i32
    %c0_i32_2 = arith.constant 0 : i32
    return %c0_i32, %c0_i32_0, %c0_i32_1 : i32, i32, i32
  }
  func.func @transform_7(%arg0: i32, %arg1: i32) -> (i32, i32, i32) {
    %c0_i32 = arith.constant 0 : i32
    %c0_i32_0 = arith.constant 0 : i32
    %c0_i32_1 = arith.constant 0 : i32
    %c0_i32_2 = arith.constant 0 : i32
    return %c0_i32, %c0_i32_0, %c0_i32_1 : i32, i32, i32
  }
  func.func @transform_8(%arg0: i32, %arg1: i32) -> (i32, i32, i32) {
    %c0_i32 = arith.constant 0 : i32
    %c0_i32_0 = arith.constant 0 : i32
    %c0_i32_1 = arith.constant 0 : i32
    %c0_i32_2 = arith.constant 0 : i32
    return %c0_i32, %c0_i32_0, %c0_i32_1 : i32, i32, i32
  }
  func.func @transform_9(%arg0: i32, %arg1: i32) -> (i32, i32, i32) {
    %c0_i32 = arith.constant 0 : i32
    %c0_i32_0 = arith.constant 0 : i32
    %c0_i32_1 = arith.constant 0 : i32
    %c0_i32_2 = arith.constant 0 : i32
    return %c0_i32, %c0_i32_0, %c0_i32_1 : i32, i32, i32
  }
  func.func @transform_10(%arg0: i32, %arg1: i32) -> (i32, i32, i32) {
    %c0_i32 = arith.constant 0 : i32
    %c0_i32_0 = arith.constant 0 : i32
    %c0_i32_1 = arith.constant 0 : i32
    %c0_i32_2 = arith.constant 0 : i32
    return %c0_i32, %c0_i32_0, %c0_i32_1 : i32, i32, i32
  }
  func.func @transform_11(%arg0: i32, %arg1: i32) -> (i32, i32, i32) {
    %c0_i32 = arith.constant 0 : i32
    %c0_i32_0 = arith.constant 0 : i32
    %c0_i32_1 = arith.constant 0 : i32
    %c0_i32_2 = arith.constant 0 : i32
    return %c0_i32, %c0_i32_0, %c0_i32_1 : i32, i32, i32
  }
  func.func @transform_12(%arg0: i32, %arg1: i32) -> (i32, i32, i32) {
    %c0_i32 = arith.constant 0 : i32
    %c0_i32_0 = arith.constant 0 : i32
    %c0_i32_1 = arith.constant 0 : i32
    %c0_i32_2 = arith.constant 0 : i32
    return %c0_i32, %c0_i32_0, %c0_i32_1 : i32, i32, i32
  }
  func.func @transform_13(%arg0: i32, %arg1: i32) -> (i32, i32, i32) {
    %c0_i32 = arith.constant 0 : i32
    %c0_i32_0 = arith.constant 0 : i32
    %c0_i32_1 = arith.constant 0 : i32
    %c0_i32_2 = arith.constant 0 : i32
    return %c0_i32, %c0_i32_0, %c0_i32_1 : i32, i32, i32
  }
  func.func @transform_14(%arg0: i32, %arg1: i32) -> (i32, i32, i32) {
    %c0_i32 = arith.constant 0 : i32
    %c0_i32_0 = arith.constant 0 : i32
    %c0_i32_1 = arith.constant 0 : i32
    %c0_i32_2 = arith.constant 0 : i32
    return %c0_i32, %c0_i32_0, %c0_i32_1 : i32, i32, i32
  }
  func.func @transform_15(%arg0: i32, %arg1: i32) -> (i32, i32) {
    %c0_i32 = arith.constant 0 : i32
    %c0_i32_0 = arith.constant 0 : i32
    return %arg0, %c0_i32 : i32, i32
  }
  func.func @transform_16(%arg0: i32, %arg1: i32) -> (i32, i32) {
    %c0_i32 = arith.constant 0 : i32
    %c0_i32_0 = arith.constant 0 : i32
    return %arg0, %c0_i32 : i32, i32
  }
}

</mosaic_0001>

<llo_original>
// kernel: _lambda_.1
$region0: #{_lambda_.1}
  #allocation0 [shape = 'u32[]', space=smem, size = 0x4, offset = 0x4, fixed_abs, tag = 'smem constant byte address 0x4 - core index']
  #allocation1 [shape = 'u32[144,128]{1,0:T(1,128)}', space=vmem, size = 0x12000, scoped, tag = 'internal scratch']
  #allocation2 [shape = 'f32[8,128]{1,0:T(8,128)}', space=vmem, size = 0x1000, scoped, tag = 'scratch operand']
  %s0 = inlined_call_operand.vmem [shape: f32[8,128], index: 0, kind: input, shape index: {}]
  %s1 = inlined_call_operand.vmem [shape: f32[8,8], index: 1, kind: input, shape index: {}]
  %s2 = inlined_call_operand.vmem [shape: bf16[8,256], index: 2, kind: input, shape index: {}]
  %s3 = inlined_call_operand.vmem [shape: f32[1,256], index: 3, kind: input, shape index: {}]
  %s4 = inlined_call_operand.vmem [shape: bf16[256,16], index: 4, kind: input, shape index: {}]
  %s5 = inlined_call_operand.vmem [shape: f32[1,16], index: 5, kind: input, shape index: {}]
  %s6 = inlined_call_operand.vmem [shape: bf16[6,128,1024], index: 6, kind: input, shape index: {}]
  %s7 = inlined_call_operand.vmem [shape: f32[6,1,1024], index: 7, kind: input, shape index: {}]
  %s8 = inlined_call_operand.vmem [shape: bf16[6,1024,128], index: 8, kind: input, shape index: {}]
  %s9 = inlined_call_operand.vmem [shape: f32[6,1,128], index: 9, kind: input, shape index: {}]
  %s10 = inlined_call_operand.vmem [shape: bf16[6,128,1024], index: 10, kind: input, shape index: {}]
  %s11 = inlined_call_operand.vmem [shape: f32[6,1,1024], index: 11, kind: input, shape index: {}]
  %s12 = inlined_call_operand.vmem [shape: bf16[6,1024,128], index: 12, kind: input, shape index: {}]
  %s13 = inlined_call_operand.vmem [shape: f32[6,1,128], index: 13, kind: input, shape index: {}]
  %s14 = inlined_call_operand.vmem [shape: bf16[6,128,128], index: 14, kind: input, shape index: {}]
  %s15 = inlined_call_operand.vmem [shape: f32[8,128], index: 15, kind: output, shape index: {0}]
  %s16 = inlined_call_operand.vmem [shape: f32[8,1], index: 16, kind: output, shape index: {1}]
  %17 = xla_tuple %s15, %s16
  %s18 = sld [smem:[#allocation0]]
  $region105: #{_lambda_.1} parent=0
    _
  %s20 = ssub.s32 1, %s18
  %s21 = scalar_select 0, %s20, %s18
  loop: start=0, step=1, limit=8
  $region2: #{_lambda_.1} parent=0 // loop_pre_header
    _
  $region3: #{_lambda_.1} parent=0 // loop_header
    %s23 = sphi 0, %s27
    %p24 = scmp.ge.s32.totalorder %s23, 8
    %s30 = sphi 0, %s42
    %s31 = sphi 0, %s38
    %s32 = sphi 0, %s30
    %s33 = sphi 0, %s31
    %s34 = sphi 0, %s32
    %s35 = sphi 0, %s33
    %s45 = sphi 0, %s47
    %s48 = sphi 0, %s45
    %s49 = sphi 0, %s48
    %s65 = sphi 0, %s49
    %s71 = sphi 0, %s73
    %s74 = sphi 0, %s71
    %s75 = sphi 0, %s74
    %s91 = sphi 0, %s75
    %s95 = sphi 0, %s95
    %s97 = sphi 0, %s95
    %s98 = sphi 0, %s97
    %s112 = sphi 0, %s98
    %s116 = sphi 0, %s116
    %s118 = sphi 0, %s116
    %s119 = sphi 0, %s118
    %s133 = sphi 0, %s119
    %s137 = sphi 0, %s137
    %s139 = sphi 0, %s137
    %s140 = sphi 0, %s139
    %s154 = sphi 0, %s140
    %s158 = sphi 0, %s158
    %s160 = sphi 0, %s158
    %s161 = sphi 0, %s160
    %s175 = sphi 0, %s161
    %s179 = sphi 0, %s179
    %s181 = sphi 0, %s179
    %s182 = sphi 0, %s181
    %s196 = sphi 0, %s182
    %s200 = sphi 0, %s200
    %s202 = sphi 0, %s200
    %s203 = sphi 0, %s202
    %s217 = sphi 0, %s203
    %s221 = sphi 0, %s221
    %s223 = sphi 0, %s221
    %s224 = sphi 0, %s223
    %s238 = sphi 0, %s224
    %s242 = sphi 0, %s242
    %s244 = sphi 0, %s242
    %s245 = sphi 0, %s244
    %s259 = sphi 0, %s245
    %s263 = sphi 0, %s263
    %s265 = sphi 0, %s263
    %s266 = sphi 0, %s265
    %s280 = sphi 0, %s266
    %s284 = sphi 0, %s284
    %s286 = sphi 0, %s284
    %s287 = sphi 0, %s286
    %s301 = sphi 0, %s287
    %s305 = sphi 0, %s305
    %s307 = sphi 0, %s305
    %s308 = sphi 0, %s307
    %s322 = sphi 0, %s308
    %s326 = sphi 0, %s326
    %s328 = sphi 0, %s326
    %s329 = sphi 0, %s328
    %s343 = sphi 0, %s329
    %s347 = sphi 0, %s347
    %s349 = sphi 0, %s347
    %s350 = sphi 0, %s349
    %s364 = sphi 0, %s350
    %s370 = sphi 0, %s372
    %s373 = sphi 0, %s370
    %s374 = sphi 0, %s373
    %s390 = sphi 0, %s374
    %s396 = sphi 0, %s398
    %s399 = sphi 0, %s396
    %s400 = sphi 0, %s399
    %s416 = sphi 0, %s400
  $region4: #{_lambda_.1} parent=0 // loop_header_branch
    %26 = sbr.rel (%p24) target = $region8
  $region5: #{_lambda_.1} parent=0 // loop_body
    %s28 = ssub.s32 %s23, 1
    %s29 = ssub.s32 %s23, 2
    %s36 = sadd.s32 1, %s31
    %p37 = scmp.ge.s32.totalorder %s36, 6
    %s38 = scalar_select %p37, 0, %s36
    %s39 = sadd.s32 1, %s30
    %s40 = scalar_select %p37, %s39, %s30
    %p41 = scmp.ge.s32.totalorder %s40, 1
    %s42 = scalar_select %p41, 0, %s40
    %s43 = ssub.s32 %s30, %s42
    %p44 = scmp.eq.s32.totalorder %s43, 0
    %s46 = sadd.s32 %s45, 1
    %s47 = scalar_select %p44, %s45, %s46
    %p50 = pneg %p44
    %p51 = scmp.eq.s32.totalorder %s23, 5
    %p52 = por %p50, %p51
    %p53 = scmp.ne.s32.totalorder %s45, %s48
    %p54 = scmp.eq.s32.totalorder %s23, 0
    %p55 = por %p53, %p54
    %p56 = scmp.ne.s32.totalorder %s45, %s48
    %p57 = scmp.eq.s32.totalorder %s28, 5
    %p58 = por %p56, %p57
    %p59 = scmp.ne.s32.totalorder %s48, %s49
    %p60 = scmp.eq.s32.totalorder %s28, 0
    %p61 = por %p59, %p60
    %p62 = scmp.ne.s32.totalorder %s48, %s49
    %p63 = scmp.eq.s32.totalorder %s29, 5
    %p64 = por %p62, %p63
    %p66 = scmp.ne.s32.totalorder %s49, %s65
    %p67 = scmp.eq.s32.totalorder %s29, 0
    %p68 = por %p66, %p67
    %s69 = ssub.s32 %s30, %s42
    %p70 = scmp.eq.s32.totalorder %s69, 0
    %s72 = sadd.s32 %s71, 1
    %s73 = scalar_select %p70, %s71, %s72
    %p76 = pneg %p70
    %p77 = scmp.eq.s32.totalorder %s23, 5
    %p78 = por %p76, %p77
    %p79 = scmp.ne.s32.totalorder %s71, %s74
    %p80 = scmp.eq.s32.totalorder %s23, 0
    %p81 = por %p79, %p80
    %p82 = scmp.ne.s32.totalorder %s71, %s74
    %p83 = scmp.eq.s32.totalorder %s28, 5
    %p84 = por %p82, %p83
    %p85 = scmp.ne.s32.totalorder %s74, %s75
    %p86 = scmp.eq.s32.totalorder %s28, 0
    %p87 = por %p85, %p86
    %p88 = scmp.ne.s32.totalorder %s74, %s75
    %p89 = scmp.eq.s32.totalorder %s29, 5
    %p90 = por %p88, %p89
    %p92 = scmp.ne.s32.totalorder %s75, %s91
    %p93 = scmp.eq.s32.totalorder %s29, 0
    %p94 = por %p92, %p93
    %s96 = sadd.s32 %s95, 1
    %p99 = scmp.eq.s32.totalorder %s23, 5
    %p100 = scmp.ne.s32.totalorder %s95, %s97
    %p101 = scmp.eq.s32.totalorder %s23, 0
    %p102 = por %p100, %p101
    %p103 = scmp.ne.s32.totalorder %s95, %s97
    %p104 = scmp.eq.s32.totalorder %s28, 5
    %p105 = por %p103, %p104
    %p106 = scmp.ne.s32.totalorder %s97, %s98
    %p107 = scmp.eq.s32.totalorder %s28, 0
    %p108 = por %p106, %p107
    %p109 = scmp.ne.s32.totalorder %s97, %s98
    %p110 = scmp.eq.s32.totalorder %s29, 5
    %p111 = por %p109, %p110
    %p113 = scmp.ne.s32.totalorder %s98, %s112
    %p114 = scmp.eq.s32.totalorder %s29, 0
    %p115 = por %p113, %p114
    %s117 = sadd.s32 %s116, 1
    %p120 = scmp.eq.s32.totalorder %s23, 5
    %p121 = scmp.ne.s32.totalorder %s116, %s118
    %p122 = scmp.eq.s32.totalorder %s23, 0
    %p123 = por %p121, %p122
    %p124 = scmp.ne.s32.totalorder %s116, %s118
    %p125 = scmp.eq.s32.totalorder %s28, 5
    %p126 = por %p124, %p125
    %p127 = scmp.ne.s32.totalorder %s118, %s119
    %p128 = scmp.eq.s32.totalorder %s28, 0
    %p129 = por %p127, %p128
    %p130 = scmp.ne.s32.totalorder %s118, %s119
    %p131 = scmp.eq.s32.totalorder %s29, 5
    %p132 = por %p130, %p131
    %p134 = scmp.ne.s32.totalorder %s119, %s133
    %p135 = scmp.eq.s32.totalorder %s29, 0
    %p136 = por %p134, %p135
    %s138 = sadd.s32 %s137, 1
    %p141 = scmp.eq.s32.totalorder %s23, 5
    %p142 = scmp.ne.s32.totalorder %s137, %s139
    %p143 = scmp.eq.s32.totalorder %s23, 0
    %p144 = por %p142, %p143
    %p145 = scmp.ne.s32.totalorder %s137, %s139
    %p146 = scmp.eq.s32.totalorder %s28, 5
    %p147 = por %p145, %p146
    %p148 = scmp.ne.s32.totalorder %s139, %s140
    %p149 = scmp.eq.s32.totalorder %s28, 0
    %p150 = por %p148, %p149
    %p151 = scmp.ne.s32.totalorder %s139, %s140
    %p152 = scmp.eq.s32.totalorder %s29, 5
    %p153 = por %p151, %p152
    %p155 = scmp.ne.s32.totalorder %s140, %s154
    %p156 = scmp.eq.s32.totalorder %s29, 0
    %p157 = por %p155, %p156
    %s159 = sadd.s32 %s158, 1
    %p162 = scmp.eq.s32.totalorder %s23, 5
    %p163 = scmp.ne.s32.totalorder %s158, %s160
    %p164 = scmp.eq.s32.totalorder %s23, 0
    %p165 = por %p163, %p164
    %p166 = scmp.ne.s32.totalorder %s158, %s160
    %p167 = scmp.eq.s32.totalorder %s28, 5
    %p168 = por %p166, %p167
    %p169 = scmp.ne.s32.totalorder %s160, %s161
    %p170 = scmp.eq.s32.totalorder %s28, 0
    %p171 = por %p169, %p170
    %p172 = scmp.ne.s32.totalorder %s160, %s161
    %p173 = scmp.eq.s32.totalorder %s29, 5
    %p174 = por %p172, %p173
    %p176 = scmp.ne.s32.totalorder %s161, %s175
    %p177 = scmp.eq.s32.totalorder %s29, 0
    %p178 = por %p176, %p177
    %s180 = sadd.s32 %s179, 1
    %p183 = scmp.eq.s32.totalorder %s23, 5
    %p184 = scmp.ne.s32.totalorder %s179, %s181
    %p185 = scmp.eq.s32.totalorder %s23, 0
    %p186 = por %p184, %p185
    %p187 = scmp.ne.s32.totalorder %s179, %s181
    %p188 = scmp.eq.s32.totalorder %s28, 5
    %p189 = por %p187, %p188
    %p190 = scmp.ne.s32.totalorder %s181, %s182
    %p191 = scmp.eq.s32.totalorder %s28, 0
    %p192 = por %p190, %p191
    %p193 = scmp.ne.s32.totalorder %s181, %s182
    %p194 = scmp.eq.s32.totalorder %s29, 5
    %p195 = por %p193, %p194
    %p197 = scmp.ne.s32.totalorder %s182, %s196
    %p198 = scmp.eq.s32.totalorder %s29, 0
    %p199 = por %p197, %p198
    %s201 = sadd.s32 %s200, 1
    %p204 = scmp.eq.s32.totalorder %s23, 5
    %p205 = scmp.ne.s32.totalorder %s200, %s202
    %p206 = scmp.eq.s32.totalorder %s23, 0
    %p207 = por %p205, %p206
    %p208 = scmp.ne.s32.totalorder %s200, %s202
    %p209 = scmp.eq.s32.totalorder %s28, 5
    %p210 = por %p208, %p209
    %p211 = scmp.ne.s32.totalorder %s202, %s203
    %p212 = scmp.eq.s32.totalorder %s28, 0
    %p213 = por %p211, %p212
    %p214 = scmp.ne.s32.totalorder %s202, %s203
    %p215 = scmp.eq.s32.totalorder %s29, 5
    %p216 = por %p214, %p215
    %p218 = scmp.ne.s32.totalorder %s203, %s217
    %p219 = scmp.eq.s32.totalorder %s29, 0
    %p220 = por %p218, %p219
    %s222 = sadd.s32 %s221, 1
    %p225 = scmp.eq.s32.totalorder %s23, 5
    %p226 = scmp.ne.s32.totalorder %s221, %s223
    %p227 = scmp.eq.s32.totalorder %s23, 0
    %p228 = por %p226, %p227
    %p229 = scmp.ne.s32.totalorder %s221, %s223
    %p230 = scmp.eq.s32.totalorder %s28, 5
    %p231 = por %p229, %p230
    %p232 = scmp.ne.s32.totalorder %s223, %s224
    %p233 = scmp.eq.s32.totalorder %s28, 0
    %p234 = por %p232, %p233
    %p235 = scmp.ne.s32.totalorder %s223, %s224
    %p236 = scmp.eq.s32.totalorder %s29, 5
    %p237 = por %p235, %p236
    %p239 = scmp.ne.s32.totalorder %s224, %s238
    %p240 = scmp.eq.s32.totalorder %s29, 0
    %p241 = por %p239, %p240
    %s243 = sadd.s32 %s242, 1
    %p246 = scmp.eq.s32.totalorder %s23, 5
    %p247 = scmp.ne.s32.totalorder %s242, %s244
    %p248 = scmp.eq.s32.totalorder %s23, 0
    %p249 = por %p247, %p248
    %p250 = scmp.ne.s32.totalorder %s242, %s244
    %p251 = scmp.eq.s32.totalorder %s28, 5
    %p252 = por %p250, %p251
    %p253 = scmp.ne.s32.totalorder %s244, %s245
    %p254 = scmp.eq.s32.totalorder %s28, 0
    %p255 = por %p253, %p254
    %p256 = scmp.ne.s32.totalorder %s244, %s245
    %p257 = scmp.eq.s32.totalorder %s29, 5
    %p258 = por %p256, %p257
    %p260 = scmp.ne.s32.totalorder %s245, %s259
    %p261 = scmp.eq.s32.totalorder %s29, 0
    %p262 = por %p260, %p261
    %s264 = sadd.s32 %s263, 1
    %p267 = scmp.eq.s32.totalorder %s23, 5
    %p268 = scmp.ne.s32.totalorder %s263, %s265
    %p269 = scmp.eq.s32.totalorder %s23, 0
    %p270 = por %p268, %p269
    %p271 = scmp.ne.s32.totalorder %s263, %s265
    %p272 = scmp.eq.s32.totalorder %s28, 5
    %p273 = por %p271, %p272
    %p274 = scmp.ne.s32.totalorder %s265, %s266
    %p275 = scmp.eq.s32.totalorder %s28, 0
    %p276 = por %p274, %p275
    %p277 = scmp.ne.s32.totalorder %s265, %s266
    %p278 = scmp.eq.s32.totalorder %s29, 5
    %p279 = por %p277, %p278
    %p281 = scmp.ne.s32.totalorder %s266, %s280
    %p282 = scmp.eq.s32.totalorder %s29, 0
    %p283 = por %p281, %p282
    %s285 = sadd.s32 %s284, 1
    %p288 = scmp.eq.s32.totalorder %s23, 5
    %p289 = scmp.ne.s32.totalorder %s284, %s286
    %p290 = scmp.eq.s32.totalorder %s23, 0
    %p291 = por %p289, %p290
    %p292 = scmp.ne.s32.totalorder %s284, %s286
    %p293 = scmp.eq.s32.totalorder %s28, 5
    %p294 = por %p292, %p293
    %p295 = scmp.ne.s32.totalorder %s286, %s287
    %p296 = scmp.eq.s32.totalorder %s28, 0
    %p297 = por %p295, %p296
    %p298 = scmp.ne.s32.totalorder %s286, %s287
    %p299 = scmp.eq.s32.totalorder %s29, 5
    %p300 = por %p298, %p299
    %p302 = scmp.ne.s32.totalorder %s287, %s301
    %p303 = scmp.eq.s32.totalorder %s29, 0
    %p304 = por %p302, %p303
    %s306 = sadd.s32 %s305, 1
    %p309 = scmp.eq.s32.totalorder %s23, 5
    %p310 = scmp.ne.s32.totalorder %s305, %s307
    %p311 = scmp.eq.s32.totalorder %s23, 0
    %p312 = por %p310, %p311
    %p313 = scmp.ne.s32.totalorder %s305, %s307
    %p314 = scmp.eq.s32.totalorder %s28, 5
    %p315 = por %p313, %p314
    %p316 = scmp.ne.s32.totalorder %s307, %s308
    %p317 = scmp.eq.s32.totalorder %s28, 0
    %p318 = por %p316, %p317
    %p319 = scmp.ne.s32.totalorder %s307, %s308
    %p320 = scmp.eq.s32.totalorder %s29, 5
    %p321 = por %p319, %p320
    %p323 = scmp.ne.s32.totalorder %s308, %s322
    %p324 = scmp.eq.s32.totalorder %s29, 0
    %p325 = por %p323, %p324
    %s327 = sadd.s32 %s326, 1
    %p330 = scmp.eq.s32.totalorder %s23, 5
    %p331 = scmp.ne.s32.totalorder %s326, %s328
    %p332 = scmp.eq.s32.totalorder %s23, 0
    %p333 = por %p331, %p332
    %p334 = scmp.ne.s32.totalorder %s326, %s328
    %p335 = scmp.eq.s32.totalorder %s28, 5
    %p336 = por %p334, %p335
    %p337 = scmp.ne.s32.totalorder %s328, %s329
    %p338 = scmp.eq.s32.totalorder %s28, 0
    %p339 = por %p337, %p338
    %p340 = scmp.ne.s32.totalorder %s328, %s329
    %p341 = scmp.eq.s32.totalorder %s29, 5
    %p342 = por %p340, %p341
    %p344 = scmp.ne.s32.totalorder %s329, %s343
    %p345 = scmp.eq.s32.totalorder %s29, 0
    %p346 = por %p344, %p345
    %s348 = sadd.s32 %s347, 1
    %p351 = scmp.eq.s32.totalorder %s23, 5
    %p352 = scmp.ne.s32.totalorder %s347, %s349
    %p353 = scmp.eq.s32.totalorder %s23, 0
    %p354 = por %p352, %p353
    %p355 = scmp.ne.s32.totalorder %s347, %s349
    %p356 = scmp.eq.s32.totalorder %s28, 5
    %p357 = por %p355, %p356
    %p358 = scmp.ne.s32.totalorder %s349, %s350
    %p359 = scmp.eq.s32.totalorder %s28, 0
    %p360 = por %p358, %p359
    %p361 = scmp.ne.s32.totalorder %s349, %s350
    %p362 = scmp.eq.s32.totalorder %s29, 5
    %p363 = por %p361, %p362
    %p365 = scmp.ne.s32.totalorder %s350, %s364
    %p366 = scmp.eq.s32.totalorder %s29, 0
    %p367 = por %p365, %p366
    %s368 = ssub.s32 %s30, %s42
    %p369 = scmp.eq.s32.totalorder %s368, 0
    %s371 = sadd.s32 %s370, 1
    %s372 = scalar_select %p369, %s370, %s371
    %p375 = pneg %p369
    %p376 = scmp.eq.s32.totalorder %s23, 5
    %p377 = por %p375, %p376
    %p378 = scmp.ne.s32.totalorder %s370, %s373
    %p379 = scmp.eq.s32.totalorder %s23, 0
    %p380 = por %p378, %p379
    %p381 = scmp.ne.s32.totalorder %s370, %s373
    %p382 = scmp.eq.s32.totalorder %s28, 5
    %p383 = por %p381, %p382
    %p384 = scmp.ne.s32.totalorder %s373, %s374
    %p385 = scmp.eq.s32.totalorder %s28, 0
    %p386 = por %p384, %p385
    %p387 = scmp.ne.s32.totalorder %s373, %s374
    %p388 = scmp.eq.s32.totalorder %s29, 5
    %p389 = por %p387, %p388
    %p391 = scmp.ne.s32.totalorder %s374, %s390
    %p392 = scmp.eq.s32.totalorder %s29, 0
    %p393 = por %p391, %p392
    %s394 = ssub.s32 %s30, %s42
    %p395 = scmp.eq.s32.totalorder %s394, 0
    %s397 = sadd.s32 %s396, 1
    %s398 = scalar_select %p395, %s396, %s397
    %p401 = pneg %p395
    %p402 = scmp.eq.s32.totalorder %s23, 5
    %p403 = por %p401, %p402
    %p404 = scmp.ne.s32.totalorder %s396, %s399
    %p405 = scmp.eq.s32.totalorder %s23, 0
    %p406 = por %p404, %p405
    %p407 = scmp.ne.s32.totalorder %s396, %s399
    %p408 = scmp.eq.s32.totalorder %s28, 5
    %p409 = por %p407, %p408
    %p410 = scmp.ne.s32.totalorder %s399, %s400
    %p411 = scmp.eq.s32.totalorder %s28, 0
    %p412 = por %p410, %p411
    %p413 = scmp.ne.s32.totalorder %s399, %s400
    %p414 = scmp.eq.s32.totalorder %s29, 5
    %p415 = por %p413, %p414
    %p417 = scmp.ne.s32.totalorder %s400, %s416
    %p418 = scmp.eq.s32.totalorder %s29, 0
    %p419 = por %p417, %p418
    %p420 = scmp.le.s32.totalorder 1, %s23
    %p421 = scmp.lt.s32.totalorder %s23, 7
    %p422 = pnand %p420, %p421
    %p423 = pneg %p422
    // Predicated region
    $region9: #{_lambda_.1} parent=5 // pred_check
      _
    $region10: #{_lambda_.1} parent=5 // pred_check_branch
      %425 = sbr.rel (%p422) target = $region12
    $region11: #{_lambda_.1} parent=5 // pred_region
      %s426 = ssub.s32 %s23, 1
      // Predicated region
      $region13: #{_lambda_.1} parent=11 // pred_check
        %p427 = pneg %p61
      $region14: #{_lambda_.1} parent=11 // pred_check_branch
        %429 = sbr.rel (%p427) target = $region16
      $region15: #{_lambda_.1} parent=11 // pred_region
        %p430 = scmp.lt.s32.totalorder %s32, 0
        %s431 = scalar_select %p430, %s32, 0
        %s432 = smul.addr %s431, 8
        %s433 = scalar_lea.vmem %s0, %s432
      $region16: #{_lambda_.1} parent=11 // pred_fallthru
        _
      // Predicated region
      $region17: #{_lambda_.1} parent=11 // pred_check
        %p434 = pneg %p87
      $region18: #{_lambda_.1} parent=11 // pred_check_branch
        %436 = sbr.rel (%p434) target = $region20
      $region19: #{_lambda_.1} parent=11 // pred_region
        %p437 = scmp.lt.s32.totalorder %s32, 0
        %s438 = scalar_select %p437, %s32, 0
        %s439 = smul.addr %s438, 8
        %s440 = scalar_lea.vmem %s1, %s439
      $region20: #{_lambda_.1} parent=11 // pred_fallthru
        _
      // Predicated region
      $region21: #{_lambda_.1} parent=11 // pred_check
        %p441 = pneg %p108
      $region22: #{_lambda_.1} parent=11 // pred_check_branch
        %443 = sbr.rel (%p441) target = $region24
      $region23: #{_lambda_.1} parent=11 // pred_region
        _
      $region24: #{_lambda_.1} parent=11 // pred_fallthru
        _
      // Predicated region
      $region25: #{_lambda_.1} parent=11 // pred_check
        %p444 = pneg %p129
      $region26: #{_lambda_.1} parent=11 // pred_check_branch
        %446 = sbr.rel (%p444) target = $region28
      $region27: #{_lambda_.1} parent=11 // pred_region
        _
      $region28: #{_lambda_.1} parent=11 // pred_fallthru
        _
      // Predicated region
      $region29: #{_lambda_.1} parent=11 // pred_check
        %p447 = pneg %p150
      $region30: #{_lambda_.1} parent=11 // pred_check_branch
        %449 = sbr.rel (%p447) target = $region32
      $region31: #{_lambda_.1} parent=11 // pred_region
        _
      $region32: #{_lambda_.1} parent=11 // pred_fallthru
        _
      // Predicated region
      $region33: #{_lambda_.1} parent=11 // pred_check
        %p450 = pneg %p171
      $region34: #{_lambda_.1} parent=11 // pred_check_branch
        %452 = sbr.rel (%p450) target = $region36
      $region35: #{_lambda_.1} parent=11 // pred_region
        _
      $region36: #{_lambda_.1} parent=11 // pred_fallthru
        _
      // Predicated region
      $region37: #{_lambda_.1} parent=11 // pred_check
        %p453 = pneg %p192
      $region38: #{_lambda_.1} parent=11 // pred_check_branch
        %455 = sbr.rel (%p453) target = $region40
      $region39: #{_lambda_.1} parent=11 // pred_region
        _
      $region40: #{_lambda_.1} parent=11 // pred_fallthru
        _
      // Predicated region
      $region41: #{_lambda_.1} parent=11 // pred_check
        %p456 = pneg %p213
      $region42: #{_lambda_.1} parent=11 // pred_check_branch
        %458 = sbr.rel (%p456) target = $region44
      $region43: #{_lambda_.1} parent=11 // pred_region
        _
      $region44: #{_lambda_.1} parent=11 // pred_fallthru
        _
      // Predicated region
      $region45: #{_lambda_.1} parent=11 // pred_check
        %p459 = pneg %p234
      $region46: #{_lambda_.1} parent=11 // pred_check_branch
        %461 = sbr.rel (%p459) target = $region48
      $region47: #{_lambda_.1} parent=11 // pred_region
        _
      $region48: #{_lambda_.1} parent=11 // pred_fallthru
        _
      // Predicated region
      $region49: #{_lambda_.1} parent=11 // pred_check
        %p462 = pneg %p255
      $region50: #{_lambda_.1} parent=11 // pred_check_branch
        %464 = sbr.rel (%p462) target = $region52
      $region51: #{_lambda_.1} parent=11 // pred_region
        _
      $region52: #{_lambda_.1} parent=11 // pred_fallthru
        _
      // Predicated region
      $region53: #{_lambda_.1} parent=11 // pred_check
        %p465 = pneg %p276
      $region54: #{_lambda_.1} parent=11 // pred_check_branch
        %467 = sbr.rel (%p465) target = $region56
      $region55: #{_lambda_.1} parent=11 // pred_region
        _
      $region56: #{_lambda_.1} parent=11 // pred_fallthru
        _
      // Predicated region
      $region57: #{_lambda_.1} parent=11 // pred_check
        %p468 = pneg %p297
      $region58: #{_lambda_.1} parent=11 // pred_check_branch
        %470 = sbr.rel (%p468) target = $region60
      $region59: #{_lambda_.1} parent=11 // pred_region
        _
      $region60: #{_lambda_.1} parent=11 // pred_fallthru
        _
      // Predicated region
      $region61: #{_lambda_.1} parent=11 // pred_check
        %p471 = pneg %p318
      $region62: #{_lambda_.1} parent=11 // pred_check_branch
        %473 = sbr.rel (%p471) target = $region64
      $region63: #{_lambda_.1} parent=11 // pred_region
        _
      $region64: #{_lambda_.1} parent=11 // pred_fallthru
        _
      // Predicated region
      $region65: #{_lambda_.1} parent=11 // pred_check
        %p474 = pneg %p339
      $region66: #{_lambda_.1} parent=11 // pred_check_branch
        %476 = sbr.rel (%p474) target = $region68
      $region67: #{_lambda_.1} parent=11 // pred_region
        _
      $region68: #{_lambda_.1} parent=11 // pred_fallthru
        _
      // Predicated region
      $region69: #{_lambda_.1} parent=11 // pred_check
        %p477 = pneg %p360
      $region70: #{_lambda_.1} parent=11 // pred_check_branch
        %479 = sbr.rel (%p477) target = $region72
      $region71: #{_lambda_.1} parent=11 // pred_region
        _
      $region72: #{_lambda_.1} parent=11 // pred_fallthru
        _
    $region12: #{_lambda_.1} parent=5 // pred_fallthru
      _
    %p480 = scmp.lt.s32.totalorder %s23, 6
    // Predicated region
    $region73: #{_lambda_.1} parent=5 // pred_check
      %p481 = pneg %p480
    $region74: #{_lambda_.1} parent=5 // pred_check_branch
      %483 = sbr.rel (%p481) target = $region76
    $region75: #{_lambda_.1} parent=5 // pred_region
      _
    $region76: #{_lambda_.1} parent=5 // pred_fallthru
      _
    %p484 = scmp.le.s32.totalorder 1, %s23
    %p485 = scmp.lt.s32.totalorder %s23, 7
    %p486 = pnand %p484, %p485
    %p487 = pneg %p486
    // Predicated region
    $region77: #{_lambda_.1} parent=5 // pred_check
      _
    $region78: #{_lambda_.1} parent=5 // pred_check_branch
      %489 = sbr.rel (%p486) target = $region80
    $region79: #{_lambda_.1} parent=5 // pred_region
      %s490 = ssub.s32 %s23, 1
      %p491 = scmp.lt.s32.totalorder %s32, 0
      %s492 = scalar_select %p491, %s32, 0
      %s493 = smul.addr %s492, 8
      %s494 = scalar_lea.vmem %s0, %s493
      %p495 = pneg %p61
      %p496 = pneg %p58
      %p497 = scmp.lt.s32.totalorder %s32, 0
      %s498 = scalar_select %p497, %s32, 0
      %s499 = smul.addr %s498, 8
      %s500 = scalar_lea.vmem %s1, %s499
      %p501 = pneg %p87
      %p502 = pneg %p84
      %p503 = pneg %p108
      %p504 = pneg %p105
      %p505 = pneg %p129
      %p506 = pneg %p126
      %p507 = pneg %p150
      %p508 = pneg %p147
      %p509 = pneg %p171
      %p510 = pneg %p168
      %p511 = pneg %p192
      %p512 = pneg %p189
      %p513 = pneg %p213
      %p514 = pneg %p210
      %p515 = pneg %p234
      %p516 = pneg %p231
      %p517 = pneg %p255
      %p518 = pneg %p252
      %p519 = pneg %p276
      %p520 = pneg %p273
      %p521 = pneg %p297
      %p522 = pneg %p294
      %p523 = pneg %p318
      %p524 = pneg %p315
      %p525 = pneg %p339
      %p526 = pneg %p336
      %p527 = pneg %p360
      %p528 = pneg %p357
      %p529 = pneg %p386
      %p530 = pneg %p383
      %p531 = scmp.lt.s32.totalorder %s32, 0
      %s532 = scalar_select %p531, %s32, 0
      %s533 = smul.addr %s532, 8
      %s534 = scalar_lea.vmem %s15, %s533
      %p535 = pneg %p412
      %p536 = pneg %p409
      %p537 = scmp.lt.s32.totalorder %s32, 0
      %s538 = scalar_select %p537, %s32, 0
      %s539 = smul.addr %s538, 8
      %s540 = scalar_lea.vmem %s16, %s539
      %p541 = scmp.lt.s32.totalorder %s32, 0
      %s542 = scalar_select %p541, %s32, 0
      %s543 = smul.addr %s542, 8
      %s544 = scalar_lea.vmem %s0, %s543
      %p545 = scmp.lt.s32.totalorder %s32, 0
      %s546 = scalar_select %p545, %s32, 0
      %s547 = smul.addr %s546, 8
      %s548 = scalar_lea.vmem %s1, %s547
      %p549 = scmp.lt.s32.totalorder %s32, 0
      %s550 = scalar_select %p549, %s32, 0
      %s551 = smul.addr %s550, 8
      %s552 = scalar_lea.vmem %s15, %s551
      %p553 = scmp.lt.s32.totalorder %s32, 0
      %s554 = scalar_select %p553, %s32, 0
      %s555 = smul.addr %s554, 8
      %s556 = scalar_lea.vmem %s16, %s555
      %p558 = scmp.eq.s32.totalorder %s33, 0
      // Predicated region
      $region81: #{_lambda_.1} parent=79 // pred_check
        %p559 = pneg %p558
      $region82: #{_lambda_.1} parent=79 // pred_check_branch
        %561 = sbr.rel (%p559) target = $region84
      $region83: #{_lambda_.1} parent=79 // pred_region
        %v562 = vld [vmem:[%s548] sm:$0xff]
        %v563 = vpack.c.bf16 %v562, %v562
        %v564 = vld [vmem:[%s2] sm:$0xff]
        %v565 = vld [vmem:[%s3] sm:$0x3]
        %v567 = vlaneseq
        %v568 = vshrl.u32 %v567, 7
        %v569 = vsub.s32 0, %v568
        %v570 = vrot.slane %v565, %v569
        %v571 = vlaneseq
        %v572 = vshrl.u32 %v571, 7
        %v573 = vsub.s32 1, %v572
        %v574 = vrot.slane %v565, %v573
        %v578 = vunpack.c.l.b16 %v564
        %v579 = vunpack.c.h.b16 %v564
        %v580 = vpack.c.b16 %v578, %v578
        %v581 = vpack.c.b16 %v579, %v579
        %vm582 = vcmask 64512
        %v584 = vsel %vm582, %v563, 0
        %vm586 = vcmask 1043456
        %v588 = vsel %vm586, %v580, 0
        %v591 = vsel %vm586, %v581, 0
        %593 = vmatprep.subr.bf16.mxu0 %v591
        %594 = vmatpush1.bf16.msra.mxu0 %v588
        %595 = vmatprep.subr.bf16.mxu0 0
        %596 = vmatpush1.bf16.msra.mxu0 0
        %597 = vmatprep.subr.bf16.mxu0 0
        %598 = vmatpush1.bf16.msra.mxu0 0
        %599 = vmatprep.subr.bf16.mxu0 0
        %600 = vmatpush1.bf16.msra.mxu0 0
        %601 = vmatprep.subr.bf16.mxu0 0
        %602 = vmatpush1.bf16.msra.mxu0 0
        %603 = vmatprep.subr.bf16.mxu0 0
        %604 = vmatpush1.bf16.msra.mxu0 0
        %605 = vmatprep.subr.bf16.mxu0 0
        %606 = vmatpush1.bf16.msra.mxu0 0
        %607 = vmatprep.subr.bf16.mxu0 0
        %608 = vmatpush1.bf16.msra.mxu0 0
        %609 = vmatprep.subr.bf16.mxu0 0
        %610 = vmatpush1.bf16.msra.mxu0 0
        %611 = vmatprep.subr.bf16.mxu0 0
        %612 = vmatpush1.bf16.msra.mxu0 0
        %613 = vmatprep.subr.bf16.mxu0 0
        %614 = vmatpush1.bf16.msra.mxu0 0
        %615 = vmatprep.subr.bf16.mxu0 0
        %616 = vmatpush1.bf16.msra.mxu0 0
        %617 = vmatprep.subr.bf16.mxu0 0
        %618 = vmatpush1.bf16.msra.mxu0 0
        %619 = vmatprep.subr.bf16.mxu0 0
        %620 = vmatpush1.bf16.msra.mxu0 0
        %621 = vmatprep.subr.bf16.mxu0 0
        %622 = vmatpush1.bf16.msra.mxu0 0
        %623 = vmatprep.subr.bf16.mxu0 0
        %624 = vmatpush1.bf16.msra.mxu0 0
        %625 = vmatprep.mubr.bf16.mxu0 0
        %626 = vmatmul.mubr.bf16.gmra.mrb[0].mxu0 %v584
        %v627 = vpop.f32.mrb[0].mxu0
        %v628 = vadd.f32 %v570, %v627
        %v629 = vpop.f32.mrb[0].mxu0
        %v630 = vadd.f32 %v574, %v629
        %v631 = vpop.f32.mrb[0].mxu0
        %v632 = vpop.f32.mrb[0].mxu0
        %633 = vdwg.mxu0
        %v634 = vpack.c.bf16 %v628, %v628
        %v635 = vpack.c.bf16 %v630, %v630
        %v636 = vmax.bf16 %v634, 0
        %v637 = vmax.bf16 %v635, 0
        %v638 = vld [vmem:[%s4] sm:$0xf]
        %v639 = vld [vmem:[%s4 + $0x4] sm:$0xf]
        %v640 = vld [vmem:[%s4 + $0x8] sm:$0xf]
        %v641 = vld [vmem:[%s4 + $0xc] sm:$0xf]
        %v642 = vld [vmem:[%s4 + $0x10] sm:$0xf]
        %v643 = vld [vmem:[%s4 + $0x14] sm:$0xf]
        %v644 = vld [vmem:[%s4 + $0x18] sm:$0xf]
        %v645 = vld [vmem:[%s4 + $0x1c] sm:$0xf]
        %v646 = vld [vmem:[%s4 + $0x20] sm:$0xf]
        %v647 = vld [vmem:[%s4 + $0x24] sm:$0xf]
        %v648 = vld [vmem:[%s4 + $0x28] sm:$0xf]
        %v649 = vld [vmem:[%s4 + $0x2c] sm:$0xf]
        %v650 = vld [vmem:[%s4 + $0x30] sm:$0xf]
        %v651 = vld [vmem:[%s4 + $0x34] sm:$0xf]
        %v652 = vld [vmem:[%s4 + $0x38] sm:$0xf]
        %v653 = vld [vmem:[%s4 + $0x3c] sm:$0xf]
        %v654 = vld [vmem:[%s4 + $0x40] sm:$0xf]
        %v655 = vld [vmem:[%s4 + $0x44] sm:$0xf]
        %v656 = vld [vmem:[%s4 + $0x48] sm:$0xf]
        %v657 = vld [vmem:[%s4 + $0x4c] sm:$0xf]
        %v658 = vld [vmem:[%s4 + $0x50] sm:$0xf]
        %v659 = vld [vmem:[%s4 + $0x54] sm:$0xf]
        %v660 = vld [vmem:[%s4 + $0x58] sm:$0xf]
        %v661 = vld [vmem:[%s4 + $0x5c] sm:$0xf]
        %v662 = vld [vmem:[%s4 + $0x60] sm:$0xf]
        %v663 = vld [vmem:[%s4 + $0x64] sm:$0xf]
        %v664 = vld [vmem:[%s4 + $0x68] sm:$0xf]
        %v665 = vld [vmem:[%s4 + $0x6c] sm:$0xf]
        %v666 = vld [vmem:[%s4 + $0x70] sm:$0xf]
        %v667 = vld [vmem:[%s4 + $0x74] sm:$0xf]
        %v668 = vld [vmem:[%s4 + $0x78] sm:$0xf]
        %v669 = vld [vmem:[%s4 + $0x7c] sm:$0xf]
        %v670 = vld [vmem:[%s5] sm:$0x1]
        %v672 = vlaneseq
        %v673 = vshrl.u32 %v672, 7
        %v674 = vsub.s32 0, %v673
        %v675 = vrot.slane %v670, %v674
        %v709 = vunpack.c.l.b16 %v638
        %v710 = vunpack.c.l.b16 %v639
        %v711 = vunpack.c.l.b16 %v640
        %v712 = vunpack.c.l.b16 %v641
        %v713 = vunpack.c.l.b16 %v642
        %v714 = vunpack.c.l.b16 %v643
        %v715 = vunpack.c.l.b16 %v644
        %v716 = vunpack.c.l.b16 %v645
        %v717 = vunpack.c.l.b16 %v646
        %v718 = vunpack.c.l.b16 %v647
        %v719 = vunpack.c.l.b16 %v648
        %v720 = vunpack.c.l.b16 %v649
        %v721 = vunpack.c.l.b16 %v650
        %v722 = vunpack.c.l.b16 %v651
        %v723 = vunpack.c.l.b16 %v652
        %v724 = vunpack.c.l.b16 %v653
        %v725 = vunpack.c.l.b16 %v654
        %v726 = vunpack.c.l.b16 %v655
        %v727 = vunpack.c.l.b16 %v656
        %v728 = vunpack.c.l.b16 %v657
        %v729 = vunpack.c.l.b16 %v658
        %v730 = vunpack.c.l.b16 %v659
        %v731 = vunpack.c.l.b16 %v660
        %v732 = vunpack.c.l.b16 %v661
        %v733 = vunpack.c.l.b16 %v662
        %v734 = vunpack.c.l.b16 %v663
        %v735 = vunpack.c.l.b16 %v664
        %v736 = vunpack.c.l.b16 %v665
        %v737 = vunpack.c.l.b16 %v666
        %v738 = vunpack.c.l.b16 %v667
        %v739 = vunpack.c.l.b16 %v668
        %v740 = vunpack.c.l.b16 %v669
        %v741 = vpack.c.b16 %v710, %v709
        %v742 = vpack.c.b16 %v712, %v711
        %v743 = vpack.c.b16 %v714, %v713
        %v744 = vpack.c.b16 %v716, %v715
        %v745 = vpack.c.b16 %v718, %v717
        %v746 = vpack.c.b16 %v720, %v719
        %v747 = vpack.c.b16 %v722, %v721
        %v748 = vpack.c.b16 %v724, %v723
        %v749 = vpack.c.b16 %v726, %v725
        %v750 = vpack.c.b16 %v728, %v727
        %v751 = vpack.c.b16 %v730, %v729
        %v752 = vpack.c.b16 %v732, %v731
        %v753 = vpack.c.b16 %v734, %v733
        %v754 = vpack.c.b16 %v736, %v735
        %v755 = vpack.c.b16 %v738, %v737
        %v756 = vpack.c.b16 %v740, %v739
        %773 = vmatprep.subr.bf16.mxu0 0
        %774 = vmatpush1.bf16.msra.mxu0 %v741
        %775 = vmatprep.subr.bf16.mxu0 0
        %776 = vmatpush1.bf16.msra.mxu0 %v742
        %777 = vmatprep.subr.bf16.mxu0 0
        %778 = vmatpush1.bf16.msra.mxu0 %v743
        %779 = vmatprep.subr.bf16.mxu0 0
        %780 = vmatpush1.bf16.msra.mxu0 %v744
        %781 = vmatprep.subr.bf16.mxu0 0
        %782 = vmatpush1.bf16.msra.mxu0 %v745
        %783 = vmatprep.subr.bf16.mxu0 0
        %784 = vmatpush1.bf16.msra.mxu0 %v746
        %785 = vmatprep.subr.bf16.mxu0 0
        %786 = vmatpush1.bf16.msra.mxu0 %v747
        %787 = vmatprep.subr.bf16.mxu0 0
        %788 = vmatpush1.bf16.msra.mxu0 %v748
        %789 = vmatprep.subr.bf16.mxu0 0
        %790 = vmatpush1.bf16.msra.mxu0 %v749
        %791 = vmatprep.subr.bf16.mxu0 0
        %792 = vmatpush1.bf16.msra.mxu0 %v750
        %793 = vmatprep.subr.bf16.mxu0 0
        %794 = vmatpush1.bf16.msra.mxu0 %v751
        %795 = vmatprep.subr.bf16.mxu0 0
        %796 = vmatpush1.bf16.msra.mxu0 %v752
        %797 = vmatprep.subr.bf16.mxu0 0
        %798 = vmatpush1.bf16.msra.mxu0 %v753
        %799 = vmatprep.subr.bf16.mxu0 0
        %800 = vmatpush1.bf16.msra.mxu0 %v754
        %801 = vmatprep.subr.bf16.mxu0 0
        %802 = vmatpush1.bf16.msra.mxu0 %v755
        %803 = vmatprep.subr.bf16.mxu0 0
        %804 = vmatpush1.bf16.msra.mxu0 %v756
        %805 = vmatprep.mubr.bf16.mxu0 %v637
        %806 = vmatmul.mubr.bf16.gmra.mrb[0].mxu0 %v636
        %v807 = vpop.f32.mrb[0].mxu0
        %v808 = vadd.f32 %v675, %v807
        %v809 = vpop.f32.mrb[0].mxu0
        %v810 = vpop.f32.mrb[0].mxu0
        %v811 = vpop.f32.mrb[0].mxu0
        %812 = vdwg.mxu0
        %813 = vst [vmem:[#allocation2] sm:$0xff] 0.0
        %815 = vrot.lane.b32.xlu0 %v808, 64
        %v816 = vpop.permute.xlu0 %815
        %vm818 = vcmask 654848
        %819 = vst.msk [vmem:[#allocation2] sm:$0xff] %vm818, %v816
        %v820 = vld [vmem:[%s544] sm:$0xff]
        %821 = vst [vmem:[%s552] sm:$0xff] %v820
        %vm822 = vcmask 7168
        %823 = vst.msk [vmem:[%s556] sm:$0xff] %vm822, 0.0
      $region84: #{_lambda_.1} parent=79 // pred_fallthru
        _
      %v824 = vld [vmem:[%s552] sm:$0xff]
      %826 = vrot.lane.b32.xlu0 %v824, 64
      %v827 = vpop.permute.xlu0 %826
      %vm829 = vcmask 523264
      %830 = vst.msk [vmem:[#allocation2] sm:$0xff] %vm829, %v827
      %v831 = vld [vmem:[#allocation2] sm:$0xff]
      %v832 = vpack.c.bf16 %v831, %v831
      %s833 = smul.u32 %s33, 128
      %s834 = smul.addr %s833, 4
      %s835 = scalar_lea.vmem %s6, %s834
      %v836 = vld [vmem:[%s835] sm:$0xff]
      %v837 = vld [vmem:[%s835 + $0x8] sm:$0xff]
      %v838 = vld [vmem:[%s835 + $0x10] sm:$0xff]
      %v839 = vld [vmem:[%s835 + $0x18] sm:$0xff]
      %v840 = vld [vmem:[%s835 + $0x20] sm:$0xff]
      %v841 = vld [vmem:[%s835 + $0x28] sm:$0xff]
      %v842 = vld [vmem:[%s835 + $0x30] sm:$0xff]
      %v843 = vld [vmem:[%s835 + $0x38] sm:$0xff]
      %v844 = vld [vmem:[%s835 + $0x40] sm:$0xff]
      %v845 = vld [vmem:[%s835 + $0x48] sm:$0xff]
      %v846 = vld [vmem:[%s835 + $0x50] sm:$0xff]
      %v847 = vld [vmem:[%s835 + $0x58] sm:$0xff]
      %v848 = vld [vmem:[%s835 + $0x60] sm:$0xff]
      %v849 = vld [vmem:[%s835 + $0x68] sm:$0xff]
      %v850 = vld [vmem:[%s835 + $0x70] sm:$0xff]
      %v851 = vld [vmem:[%s835 + $0x78] sm:$0xff]
      %v852 = vld [vmem:[%s835 + $0x80] sm:$0xff]
      %v853 = vld [vmem:[%s835 + $0x88] sm:$0xff]
      %v854 = vld [vmem:[%s835 + $0x90] sm:$0xff]
      %v855 = vld [vmem:[%s835 + $0x98] sm:$0xff]
      %v856 = vld [vmem:[%s835 + $0xa0] sm:$0xff]
      %v857 = vld [vmem:[%s835 + $0xa8] sm:$0xff]
      %v858 = vld [vmem:[%s835 + $0xb0] sm:$0xff]
      %v859 = vld [vmem:[%s835 + $0xb8] sm:$0xff]
      %v860 = vld [vmem:[%s835 + $0xc0] sm:$0xff]
      %v861 = vld [vmem:[%s835 + $0xc8] sm:$0xff]
      %v862 = vld [vmem:[%s835 + $0xd0] sm:$0xff]
      %v863 = vld [vmem:[%s835 + $0xd8] sm:$0xff]
      %v864 = vld [vmem:[%s835 + $0xe0] sm:$0xff]
      %v865 = vld [vmem:[%s835 + $0xe8] sm:$0xff]
      %v866 = vld [vmem:[%s835 + $0xf0] sm:$0xff]
      %v867 = vld [vmem:[%s835 + $0xf8] sm:$0xff]
      %v868 = vld [vmem:[%s835 + $0x100] sm:$0xff]
      %v869 = vld [vmem:[%s835 + $0x108] sm:$0xff]
      %v870 = vld [vmem:[%s835 + $0x110] sm:$0xff]
      %v871 = vld [vmem:[%s835 + $0x118] sm:$0xff]
      %v872 = vld [vmem:[%s835 + $0x120] sm:$0xff]
      %v873 = vld [vmem:[%s835 + $0x128] sm:$0xff]
      %v874 = vld [vmem:[%s835 + $0x130] sm:$0xff]
      %v875 = vld [vmem:[%s835 + $0x138] sm:$0xff]
      %v876 = vld [vmem:[%s835 + $0x140] sm:$0xff]
      %v877 = vld [vmem:[%s835 + $0x148] sm:$0xff]
      %v878 = vld [vmem:[%s835 + $0x150] sm:$0xff]
      %v879 = vld [vmem:[%s835 + $0x158] sm:$0xff]
      %v880 = vld [vmem:[%s835 + $0x160] sm:$0xff]
      %v881 = vld [vmem:[%s835 + $0x168] sm:$0xff]
      %v882 = vld [vmem:[%s835 + $0x170] sm:$0xff]
      %v883 = vld [vmem:[%s835 + $0x178] sm:$0xff]
      %v884 = vld [vmem:[%s835 + $0x180] sm:$0xff]
      %v885 = vld [vmem:[%s835 + $0x188] sm:$0xff]
      %v886 = vld [vmem:[%s835 + $0x190] sm:$0xff]
      %v887 = vld [vmem:[%s835 + $0x198] sm:$0xff]
      %v888 = vld [vmem:[%s835 + $0x1a0] sm:$0xff]
      %v889 = vld [vmem:[%s835 + $0x1a8] sm:$0xff]
      %v890 = vld [vmem:[%s835 + $0x1b0] sm:$0xff]
      %v891 = vld [vmem:[%s835 + $0x1b8] sm:$0xff]
      %v892 = vld [vmem:[%s835 + $0x1c0] sm:$0xff]
      %v893 = vld [vmem:[%s835 + $0x1c8] sm:$0xff]
      %v894 = vld [vmem:[%s835 + $0x1d0] sm:$0xff]
      %v895 = vld [vmem:[%s835 + $0x1d8] sm:$0xff]
      %v896 = vld [vmem:[%s835 + $0x1e0] sm:$0xff]
      %v897 = vld [vmem:[%s835 + $0x1e8] sm:$0xff]
      %v898 = vld [vmem:[%s835 + $0x1f0] sm:$0xff]
      %v899 = vld [vmem:[%s835 + $0x1f8] sm:$0xff]
      %s900 = smul.u32 %s33, 8
      %s901 = scalar_lea.vmem %s7, %s900
      %v902 = vld [vmem:[%s901] sm:$0xff]
      %v904 = vlaneseq
      %v905 = vshrl.u32 %v904, 7
      %v906 = vsub.s32 0, %v905
      %v907 = vrot.slane %v902, %v906
      %v908 = vlaneseq
      %v909 = vshrl.u32 %v908, 7
      %v910 = vsub.s32 1, %v909
      %v911 = vrot.slane %v902, %v910
      %v912 = vlaneseq
      %v913 = vshrl.u32 %v912, 7
      %v914 = vsub.s32 2, %v913
      %v915 = vrot.slane %v902, %v914
      %v916 = vlaneseq
      %v917 = vshrl.u32 %v916, 7
      %v918 = vsub.s32 3, %v917
      %v919 = vrot.slane %v902, %v918
      %v920 = vlaneseq
      %v921 = vshrl.u32 %v920, 7
      %v922 = vsub.s32 4, %v921
      %v923 = vrot.slane %v902, %v922
      %v924 = vlaneseq
      %v925 = vshrl.u32 %v924, 7
      %v926 = vsub.s32 5, %v925
      %v927 = vrot.slane %v902, %v926
      %v928 = vlaneseq
      %v929 = vshrl.u32 %v928, 7
      %v930 = vsub.s32 6, %v929
      %v931 = vrot.slane %v902, %v930
      %v932 = vlaneseq
      %v933 = vshrl.u32 %v932, 7
      %v934 = vsub.s32 7, %v933
      %v935 = vrot.slane %v902, %v934
      %v1008 = vunpack.c.l.b16 %v836
      %v1009 = vunpack.c.h.b16 %v836
      %v1010 = vunpack.c.l.b16 %v837
      %v1011 = vunpack.c.h.b16 %v837
      %v1012 = vunpack.c.l.b16 %v838
      %v1013 = vunpack.c.h.b16 %v838
      %v1014 = vunpack.c.l.b16 %v839
      %v1015 = vunpack.c.h.b16 %v839
      %v1016 = vunpack.c.l.b16 %v840
      %v1017 = vunpack.c.h.b16 %v840
      %v1018 = vunpack.c.l.b16 %v841
      %v1019 = vunpack.c.h.b16 %v841
      %v1020 = vunpack.c.l.b16 %v842
      %v1021 = vunpack.c.h.b16 %v842
      %v1022 = vunpack.c.l.b16 %v843
      %v1023 = vunpack.c.h.b16 %v843
      %v1024 = vunpack.c.l.b16 %v844
      %v1025 = vunpack.c.h.b16 %v844
      %v1026 = vunpack.c.l.b16 %v845
      %v1027 = vunpack.c.h.b16 %v845
      %v1028 = vunpack.c.l.b16 %v846
      %v1029 = vunpack.c.h.b16 %v846
      %v1030 = vunpack.c.l.b16 %v847
      %v1031 = vunpack.c.h.b16 %v847
      %v1032 = vunpack.c.l.b16 %v848
      %v1033 = vunpack.c.h.b16 %v848
      %v1034 = vunpack.c.l.b16 %v849
      %v1035 = vunpack.c.h.b16 %v849
      %v1036 = vunpack.c.l.b16 %v850
      %v1037 = vunpack.c.h.b16 %v850
      %v1038 = vunpack.c.l.b16 %v851
      %v1039 = vunpack.c.h.b16 %v851
      %v1040 = vunpack.c.l.b16 %v852
      %v1041 = vunpack.c.h.b16 %v852
      %v1042 = vunpack.c.l.b16 %v853
      %v1043 = vunpack.c.h.b16 %v853
      %v1044 = vunpack.c.l.b16 %v854
      %v1045 = vunpack.c.h.b16 %v854
      %v1046 = vunpack.c.l.b16 %v855
      %v1047 = vunpack.c.h.b16 %v855
      %v1048 = vunpack.c.l.b16 %v856
      %v1049 = vunpack.c.h.b16 %v856
      %v1050 = vunpack.c.l.b16 %v857
      %v1051 = vunpack.c.h.b16 %v857
      %v1052 = vunpack.c.l.b16 %v858
      %v1053 = vunpack.c.h.b16 %v858
      %v1054 = vunpack.c.l.b16 %v859
      %v1055 = vunpack.c.h.b16 %v859
      %v1056 = vunpack.c.l.b16 %v860
      %v1057 = vunpack.c.h.b16 %v860
      %v1058 = vunpack.c.l.b16 %v861
      %v1059 = vunpack.c.h.b16 %v861
      %v1060 = vunpack.c.l.b16 %v862
      %v1061 = vunpack.c.h.b16 %v862
      %v1062 = vunpack.c.l.b16 %v863
      %v1063 = vunpack.c.h.b16 %v863
      %v1064 = vunpack.c.l.b16 %v864
      %v1065 = vunpack.c.h.b16 %v864
      %v1066 = vunpack.c.l.b16 %v865
      %v1067 = vunpack.c.h.b16 %v865
      %v1068 = vunpack.c.l.b16 %v866
      %v1069 = vunpack.c.h.b16 %v866
      %v1070 = vunpack.c.l.b16 %v867
      %v1071 = vunpack.c.h.b16 %v867
      %v1072 = vunpack.c.l.b16 %v868
      %v1073 = vunpack.c.h.b16 %v868
      %v1074 = vunpack.c.l.b16 %v869
      %v1075 = vunpack.c.h.b16 %v869
      %v1076 = vunpack.c.l.b16 %v870
      %v1077 = vunpack.c.h.b16 %v870
      %v1078 = vunpack.c.l.b16 %v871
      %v1079 = vunpack.c.h.b16 %v871
      %v1080 = vunpack.c.l.b16 %v872
      %v1081 = vunpack.c.h.b16 %v872
      %v1082 = vunpack.c.l.b16 %v873
      %v1083 = vunpack.c.h.b16 %v873
      %v1084 = vunpack.c.l.b16 %v874
      %v1085 = vunpack.c.h.b16 %v874
      %v1086 = vunpack.c.l.b16 %v875
      %v1087 = vunpack.c.h.b16 %v875
      %v1088 = vunpack.c.l.b16 %v876
      %v1089 = vunpack.c.h.b16 %v876
      %v1090 = vunpack.c.l.b16 %v877
      %v1091 = vunpack.c.h.b16 %v877
      %v1092 = vunpack.c.l.b16 %v878
      %v1093 = vunpack.c.h.b16 %v878
      %v1094 = vunpack.c.l.b16 %v879
      %v1095 = vunpack.c.h.b16 %v879
      %v1096 = vunpack.c.l.b16 %v880
      %v1097 = vunpack.c.h.b16 %v880
      %v1098 = vunpack.c.l.b16 %v881
      %v1099 = vunpack.c.h.b16 %v881
      %v1100 = vunpack.c.l.b16 %v882
      %v1101 = vunpack.c.h.b16 %v882
      %v1102 = vunpack.c.l.b16 %v883
      %v1103 = vunpack.c.h.b16 %v883
      %v1104 = vunpack.c.l.b16 %v884
      %v1105 = vunpack.c.h.b16 %v884
      %v1106 = vunpack.c.l.b16 %v885
      %v1107 = vunpack.c.h.b16 %v885
      %v1108 = vunpack.c.l.b16 %v886
      %v1109 = vunpack.c.h.b16 %v886
      %v1110 = vunpack.c.l.b16 %v887
      %v1111 = vunpack.c.h.b16 %v887
      %v1112 = vunpack.c.l.b16 %v888
      %v1113 = vunpack.c.h.b16 %v888
      %v1114 = vunpack.c.l.b16 %v889
      %v1115 = vunpack.c.h.b16 %v889
      %v1116 = vunpack.c.l.b16 %v890
      %v1117 = vunpack.c.h.b16 %v890
      %v1118 = vunpack.c.l.b16 %v891
      %v1119 = vunpack.c.h.b16 %v891
      %v1120 = vunpack.c.l.b16 %v892
      %v1121 = vunpack.c.h.b16 %v892
      %v1122 = vunpack.c.l.b16 %v893
      %v1123 = vunpack.c.h.b16 %v893
      %v1124 = vunpack.c.l.b16 %v894
      %v1125 = vunpack.c.h.b16 %v894
      %v1126 = vunpack.c.l.b16 %v895
      %v1127 = vunpack.c.h.b16 %v895
      %v1128 = vunpack.c.l.b16 %v896
      %v1129 = vunpack.c.h.b16 %v896
      %v1130 = vunpack.c.l.b16 %v897
      %v1131 = vunpack.c.h.b16 %v897
      %v1132 = vunpack.c.l.b16 %v898
      %v1133 = vunpack.c.h.b16 %v898
      %v1134 = vunpack.c.l.b16 %v899
      %v1135 = vunpack.c.h.b16 %v899
      %v1136 = vpack.c.b16 %v1016, %v1008
      %v1137 = vpack.c.b16 %v1017, %v1009
      %v1138 = vpack.c.b16 %v1018, %v1010
      %v1139 = vpack.c.b16 %v1019, %v1011
      %v1140 = vpack.c.b16 %v1020, %v1012
      %v1141 = vpack.c.b16 %v1021, %v1013
      %v1142 = vpack.c.b16 %v1022, %v1014
      %v1143 = vpack.c.b16 %v1023, %v1015
      %v1144 = vpack.c.b16 %v1032, %v1024
      %v1145 = vpack.c.b16 %v1033, %v1025
      %v1146 = vpack.c.b16 %v1034, %v1026
      %v1147 = vpack.c.b16 %v1035, %v1027
      %v1148 = vpack.c.b16 %v1036, %v1028
      %v1149 = vpack.c.b16 %v1037, %v1029
      %v1150 = vpack.c.b16 %v1038, %v1030
      %v1151 = vpack.c.b16 %v1039, %v1031
      %v1152 = vpack.c.b16 %v1048, %v1040
      %v1153 = vpack.c.b16 %v1049, %v1041
      %v1154 = vpack.c.b16 %v1050, %v1042
      %v1155 = vpack.c.b16 %v1051, %v1043
      %v1156 = vpack.c.b16 %v1052, %v1044
      %v1157 = vpack.c.b16 %v1053, %v1045
      %v1158 = vpack.c.b16 %v1054, %v1046
      %v1159 = vpack.c.b16 %v1055, %v1047
      %v1160 = vpack.c.b16 %v1064, %v1056
      %v1161 = vpack.c.b16 %v1065, %v1057
      %v1162 = vpack.c.b16 %v1066, %v1058
      %v1163 = vpack.c.b16 %v1067, %v1059
      %v1164 = vpack.c.b16 %v1068, %v1060
      %v1165 = vpack.c.b16 %v1069, %v1061
      %v1166 = vpack.c.b16 %v1070, %v1062
      %v1167 = vpack.c.b16 %v1071, %v1063
      %v1168 = vpack.c.b16 %v1080, %v1072
      %v1169 = vpack.c.b16 %v1081, %v1073
      %v1170 = vpack.c.b16 %v1082, %v1074
      %v1171 = vpack.c.b16 %v1083, %v1075
      %v1172 = vpack.c.b16 %v1084, %v1076
      %v1173 = vpack.c.b16 %v1085, %v1077
      %v1174 = vpack.c.b16 %v1086, %v1078
      %v1175 = vpack.c.b16 %v1087, %v1079
      %v1176 = vpack.c.b16 %v1096, %v1088
      %v1177 = vpack.c.b16 %v1097, %v1089
      %v1178 = vpack.c.b16 %v1098, %v1090
      %v1179 = vpack.c.b16 %v1099, %v1091
      %v1180 = vpack.c.b16 %v1100, %v1092
      %v1181 = vpack.c.b16 %v1101, %v1093
      %v1182 = vpack.c.b16 %v1102, %v1094
      %v1183 = vpack.c.b16 %v1103, %v1095
      %v1184 = vpack.c.b16 %v1112, %v1104
      %v1185 = vpack.c.b16 %v1113, %v1105
      %v1186 = vpack.c.b16 %v1114, %v1106
      %v1187 = vpack.c.b16 %v1115, %v1107
      %v1188 = vpack.c.b16 %v1116, %v1108
      %v1189 = vpack.c.b16 %v1117, %v1109
      %v1190 = vpack.c.b16 %v1118, %v1110
      %v1191 = vpack.c.b16 %v1119, %v1111
      %v1192 = vpack.c.b16 %v1128, %v1120
      %v1193 = vpack.c.b16 %v1129, %v1121
      %v1194 = vpack.c.b16 %v1130, %v1122
      %v1195 = vpack.c.b16 %v1131, %v1123
      %v1196 = vpack.c.b16 %v1132, %v1124
      %v1197 = vpack.c.b16 %v1133, %v1125
      %v1198 = vpack.c.b16 %v1134, %v1126
      %v1199 = vpack.c.b16 %v1135, %v1127
      %1264 = vmatprep.subr.bf16.mxu0 %v1137
      %1265 = vmatpush1.bf16.msra.mxu0 %v1136
      %1266 = vmatprep.subr.bf16.mxu0 %v1145
      %1267 = vmatpush1.bf16.msra.mxu0 %v1144
      %1268 = vmatprep.subr.bf16.mxu0 %v1153
      %1269 = vmatpush1.bf16.msra.mxu0 %v1152
      %1270 = vmatprep.subr.bf16.mxu0 %v1161
      %1271 = vmatpush1.bf16.msra.mxu0 %v1160
      %1272 = vmatprep.subr.bf16.mxu0 %v1169
      %1273 = vmatpush1.bf16.msra.mxu0 %v1168
      %1274 = vmatprep.subr.bf16.mxu0 %v1177
      %1275 = vmatpush1.bf16.msra.mxu0 %v1176
      %1276 = vmatprep.subr.bf16.mxu0 %v1185
      %1277 = vmatpush1.bf16.msra.mxu0 %v1184
      %1278 = vmatprep.subr.bf16.mxu0 %v1193
      %1279 = vmatpush1.bf16.msra.mxu0 %v1192
      %1280 = vmatprep.subr.bf16.mxu0 0
      %1281 = vmatpush1.bf16.msra.mxu0 0
      %1282 = vmatprep.subr.bf16.mxu0 0
      %1283 = vmatpush1.bf16.msra.mxu0 0
      %1284 = vmatprep.subr.bf16.mxu0 0
      %1285 = vmatpush1.bf16.msra.mxu0 0
      %1286 = vmatprep.subr.bf16.mxu0 0
      %1287 = vmatpush1.bf16.msra.mxu0 0
      %1288 = vmatprep.subr.bf16.mxu0 0
      %1289 = vmatpush1.bf16.msra.mxu0 0
      %1290 = vmatprep.subr.bf16.mxu0 0
      %1291 = vmatpush1.bf16.msra.mxu0 0
      %1292 = vmatprep.subr.bf16.mxu0 0
      %1293 = vmatpush1.bf16.msra.mxu0 0
      %1294 = vmatprep.subr.bf16.mxu0 0
      %1295 = vmatpush1.bf16.msra.mxu0 0
      %1296 = vmatprep.mubr.bf16.mxu0 0
      %1297 = vmatmul.mubr.bf16.gmra.mrb[0].mxu0 %v832
      %v1298 = vpop.f32.mrb[0].mxu0
      %v1299 = vadd.f32 %v907, %v1298
      %v1300 = vpop.f32.mrb[0].mxu0
      %v1301 = vadd.f32 %v911, %v1300
      %v1302 = vpop.f32.mrb[0].mxu0
      %v1303 = vpop.f32.mrb[0].mxu0
      %1304 = vdwg.mxu0
      %1305 = vmatprep.subr.bf16.mxu0 %v1139
      %1306 = vmatpush1.bf16.msra.mxu0 %v1138
      %1307 = vmatprep.subr.bf16.mxu0 %v1147
      %1308 = vmatpush1.bf16.msra.mxu0 %v1146
      %1309 = vmatprep.subr.bf16.mxu0 %v1155
      %1310 = vmatpush1.bf16.msra.mxu0 %v1154
      %1311 = vmatprep.subr.bf16.mxu0 %v1163
      %1312 = vmatpush1.bf16.msra.mxu0 %v1162
      %1313 = vmatprep.subr.bf16.mxu0 %v1171
      %1314 = vmatpush1.bf16.msra.mxu0 %v1170
      %1315 = vmatprep.subr.bf16.mxu0 %v1179
      %1316 = vmatpush1.bf16.msra.mxu0 %v1178
      %1317 = vmatprep.subr.bf16.mxu0 %v1187
      %1318 = vmatpush1.bf16.msra.mxu0 %v1186
      %1319 = vmatprep.subr.bf16.mxu0 %v1195
      %1320 = vmatpush1.bf16.msra.mxu0 %v1194
      %1321 = vmatprep.subr.bf16.mxu0 0
      %1322 = vmatpush1.bf16.msra.mxu0 0
      %1323 = vmatprep.subr.bf16.mxu0 0
      %1324 = vmatpush1.bf16.msra.mxu0 0
      %1325 = vmatprep.subr.bf16.mxu0 0
      %1326 = vmatpush1.bf16.msra.mxu0 0
      %1327 = vmatprep.subr.bf16.mxu0 0
      %1328 = vmatpush1.bf16.msra.mxu0 0
      %1329 = vmatprep.subr.bf16.mxu0 0
      %1330 = vmatpush1.bf16.msra.mxu0 0
      %1331 = vmatprep.subr.bf16.mxu0 0
      %1332 = vmatpush1.bf16.msra.mxu0 0
      %1333 = vmatprep.subr.bf16.mxu0 0
      %1334 = vmatpush1.bf16.msra.mxu0 0
      %1335 = vmatprep.subr.bf16.mxu0 0
      %1336 = vmatpush1.bf16.msra.mxu0 0
      %1337 = vmatprep.mubr.bf16.mxu0 0
      %1338 = vmatmul.mubr.bf16.gmra.mrb[0].mxu0 %v832
      %v1339 = vpop.f32.mrb[0].mxu0
      %v1340 = vadd.f32 %v915, %v1339
      %v1341 = vpop.f32.mrb[0].mxu0
      %v1342 = vadd.f32 %v919, %v1341
      %v1343 = vpop.f32.mrb[0].mxu0
      %v1344 = vpop.f32.mrb[0].mxu0
      %1345 = vdwg.mxu0
      %1346 = vmatprep.subr.bf16.mxu0 %v1141
      %1347 = vmatpush1.bf16.msra.mxu0 %v1140
      %1348 = vmatprep.subr.bf16.mxu0 %v1149
      %1349 = vmatpush1.bf16.msra.mxu0 %v1148
      %1350 = vmatprep.subr.bf16.mxu0 %v1157
      %1351 = vmatpush1.bf16.msra.mxu0 %v1156
      %1352 = vmatprep.subr.bf16.mxu0 %v1165
      %1353 = vmatpush1.bf16.msra.mxu0 %v1164
      %1354 = vmatprep.subr.bf16.mxu0 %v1173
      %1355 = vmatpush1.bf16.msra.mxu0 %v1172
      %1356 = vmatprep.subr.bf16.mxu0 %v1181
      %1357 = vmatpush1.bf16.msra.mxu0 %v1180
      %1358 = vmatprep.subr.bf16.mxu0 %v1189
      %1359 = vmatpush1.bf16.msra.mxu0 %v1188
      %1360 = vmatprep.subr.bf16.mxu0 %v1197
      %1361 = vmatpush1.bf16.msra.mxu0 %v1196
      %1362 = vmatprep.subr.bf16.mxu0 0
      %1363 = vmatpush1.bf16.msra.mxu0 0
      %1364 = vmatprep.subr.bf16.mxu0 0
      %1365 = vmatpush1.bf16.msra.mxu0 0
      %1366 = vmatprep.subr.bf16.mxu0 0
      %1367 = vmatpush1.bf16.msra.mxu0 0
      %1368 = vmatprep.subr.bf16.mxu0 0
      %1369 = vmatpush1.bf16.msra.mxu0 0
      %1370 = vmatprep.subr.bf16.mxu0 0
      %1371 = vmatpush1.bf16.msra.mxu0 0
      %1372 = vmatprep.subr.bf16.mxu0 0
      %1373 = vmatpush1.bf16.msra.mxu0 0
      %1374 = vmatprep.subr.bf16.mxu0 0
      %1375 = vmatpush1.bf16.msra.mxu0 0
      %1376 = vmatprep.subr.bf16.mxu0 0
      %1377 = vmatpush1.bf16.msra.mxu0 0
      %1378 = vmatprep.mubr.bf16.mxu0 0
      %1379 = vmatmul.mubr.bf16.gmra.mrb[0].mxu0 %v832
      %v1380 = vpop.f32.mrb[0].mxu0
      %v1381 = vadd.f32 %v923, %v1380
      %v1382 = vpop.f32.mrb[0].mxu0
      %v1383 = vadd.f32 %v927, %v1382
      %v1384 = vpop.f32.mrb[0].mxu0
      %v1385 = vpop.f32.mrb[0].mxu0
      %1386 = vdwg.mxu0
      %1387 = vmatprep.subr.bf16.mxu0 %v1143
      %1388 = vmatpush1.bf16.msra.mxu0 %v1142
      %1389 = vmatprep.subr.bf16.mxu0 %v1151
      %1390 = vmatpush1.bf16.msra.mxu0 %v1150
      %1391 = vmatprep.subr.bf16.mxu0 %v1159
      %1392 = vmatpush1.bf16.msra.mxu0 %v1158
      %1393 = vmatprep.subr.bf16.mxu0 %v1167
      %1394 = vmatpush1.bf16.msra.mxu0 %v1166
      %1395 = vmatprep.subr.bf16.mxu0 %v1175
      %1396 = vmatpush1.bf16.msra.mxu0 %v1174
      %1397 = vmatprep.subr.bf16.mxu0 %v1183
      %1398 = vmatpush1.bf16.msra.mxu0 %v1182
      %1399 = vmatprep.subr.bf16.mxu0 %v1191
      %1400 = vmatpush1.bf16.msra.mxu0 %v1190
      %1401 = vmatprep.subr.bf16.mxu0 %v1199
      %1402 = vmatpush1.bf16.msra.mxu0 %v1198
      %1403 = vmatprep.subr.bf16.mxu0 0
      %1404 = vmatpush1.bf16.msra.mxu0 0
      %1405 = vmatprep.subr.bf16.mxu0 0
      %1406 = vmatpush1.bf16.msra.mxu0 0
      %1407 = vmatprep.subr.bf16.mxu0 0
      %1408 = vmatpush1.bf16.msra.mxu0 0
      %1409 = vmatprep.subr.bf16.mxu0 0
      %1410 = vmatpush1.bf16.msra.mxu0 0
      %1411 = vmatprep.subr.bf16.mxu0 0
      %1412 = vmatpush1.bf16.msra.mxu0 0
      %1413 = vmatprep.subr.bf16.mxu0 0
      %1414 = vmatpush1.bf16.msra.mxu0 0
      %1415 = vmatprep.subr.bf16.mxu0 0
      %1416 = vmatpush1.bf16.msra.mxu0 0
      %1417 = vmatprep.subr.bf16.mxu0 0
      %1418 = vmatpush1.bf16.msra.mxu0 0
      %1419 = vmatprep.mubr.bf16.mxu0 0
      %1420 = vmatmul.mubr.bf16.gmra.mrb[0].mxu0 %v832
      %v1421 = vpop.f32.mrb[0].mxu0
      %v1422 = vadd.f32 %v931, %v1421
      %v1423 = vpop.f32.mrb[0].mxu0
      %v1424 = vadd.f32 %v935, %v1423
      %v1425 = vpop.f32.mrb[0].mxu0
      %v1426 = vpop.f32.mrb[0].mxu0
      %1427 = vdwg.mxu0
      %v1428 = vpack.c.bf16 %v1299, %v1299
      %v1429 = vpack.c.bf16 %v1301, %v1301
      %v1430 = vpack.c.bf16 %v1340, %v1340
      %v1431 = vpack.c.bf16 %v1342, %v1342
      %v1432 = vpack.c.bf16 %v1381, %v1381
      %v1433 = vpack.c.bf16 %v1383, %v1383
      %v1434 = vpack.c.bf16 %v1422, %v1422
      %v1435 = vpack.c.bf16 %v1424, %v1424
      %v1436 = vmax.bf16 %v1428, 0
      %v1437 = vmax.bf16 %v1429, 0
      %v1438 = vmax.bf16 %v1430, 0
      %v1439 = vmax.bf16 %v1431, 0
      %v1440 = vmax.bf16 %v1432, 0
      %v1441 = vmax.bf16 %v1433, 0
      %v1442 = vmax.bf16 %v1434, 0
      %v1443 = vmax.bf16 %v1435, 0
      %s1444 = smul.addr %s833, 4
      %s1445 = scalar_lea.vmem %s8, %s1444
      %v1446 = vld [vmem:[%s1445] sm:$0xf]
      %v1447 = vld [vmem:[%s1445 + $0x4] sm:$0xf]
      %v1448 = vld [vmem:[%s1445 + $0x8] sm:$0xf]
      %v1449 = vld [vmem:[%s1445 + $0xc] sm:$0xf]
      %v1450 = vld [vmem:[%s1445 + $0x10] sm:$0xf]
      %v1451 = vld [vmem:[%s1445 + $0x14] sm:$0xf]
      %v1452 = vld [vmem:[%s1445 + $0x18] sm:$0xf]
      %v1453 = vld [vmem:[%s1445 + $0x1c] sm:$0xf]
      %v1454 = vld [vmem:[%s1445 + $0x20] sm:$0xf]
      %v1455 = vld [vmem:[%s1445 + $0x24] sm:$0xf]
      %v1456 = vld [vmem:[%s1445 + $0x28] sm:$0xf]
      %v1457 = vld [vmem:[%s1445 + $0x2c] sm:$0xf]
      %v1458 = vld [vmem:[%s1445 + $0x30] sm:$0xf]
      %v1459 = vld [vmem:[%s1445 + $0x34] sm:$0xf]
      %v1460 = vld [vmem:[%s1445 + $0x38] sm:$0xf]
      %v1461 = vld [vmem:[%s1445 + $0x3c] sm:$0xf]
      %v1462 = vld [vmem:[%s1445 + $0x40] sm:$0xf]
      %v1463 = vld [vmem:[%s1445 + $0x44] sm:$0xf]
      %v1464 = vld [vmem:[%s1445 + $0x48] sm:$0xf]
      %v1465 = vld [vmem:[%s1445 + $0x4c] sm:$0xf]
      %v1466 = vld [vmem:[%s1445 + $0x50] sm:$0xf]
      %v1467 = vld [vmem:[%s1445 + $0x54] sm:$0xf]
      %v1468 = vld [vmem:[%s1445 + $0x58] sm:$0xf]
      %v1469 = vld [vmem:[%s1445 + $0x5c] sm:$0xf]
      %v1470 = vld [vmem:[%s1445 + $0x60] sm:$0xf]
      %v1471 = vld [vmem:[%s1445 + $0x64] sm:$0xf]
      %v1472 = vld [vmem:[%s1445 + $0x68] sm:$0xf]
      %v1473 = vld [vmem:[%s1445 + $0x6c] sm:$0xf]
      %v1474 = vld [vmem:[%s1445 + $0x70] sm:$0xf]
      %v1475 = vld [vmem:[%s1445 + $0x74] sm:$0xf]
      %v1476 = vld [vmem:[%s1445 + $0x78] sm:$0xf]
      %v1477 = vld [vmem:[%s1445 + $0x7c] sm:$0xf]
      %v1478 = vld [vmem:[%s1445 + $0x80] sm:$0xf]
      %v1479 = vld [vmem:[%s1445 + $0x84] sm:$0xf]
      %v1480 = vld [vmem:[%s1445 + $0x88] sm:$0xf]
      %v1481 = vld [vmem:[%s1445 + $0x8c] sm:$0xf]
      %v1482 = vld [vmem:[%s1445 + $0x90] sm:$0xf]
      %v1483 = vld [vmem:[%s1445 + $0x94] sm:$0xf]
      %v1484 = vld [vmem:[%s1445 + $0x98] sm:$0xf]
      %v1485 = vld [vmem:[%s1445 + $0x9c] sm:$0xf]
      %v1486 = vld [vmem:[%s1445 + $0xa0] sm:$0xf]
      %v1487 = vld [vmem:[%s1445 + $0xa4] sm:$0xf]
      %v1488 = vld [vmem:[%s1445 + $0xa8] sm:$0xf]
      %v1489 = vld [vmem:[%s1445 + $0xac] sm:$0xf]
      %v1490 = vld [vmem:[%s1445 + $0xb0] sm:$0xf]
      %v1491 = vld [vmem:[%s1445 + $0xb4] sm:$0xf]
      %v1492 = vld [vmem:[%s1445 + $0xb8] sm:$0xf]
      %v1493 = vld [vmem:[%s1445 + $0xbc] sm:$0xf]
      %v1494 = vld [vmem:[%s1445 + $0xc0] sm:$0xf]
      %v1495 = vld [vmem:[%s1445 + $0xc4] sm:$0xf]
      %v1496 = vld [vmem:[%s1445 + $0xc8] sm:$0xf]
      %v1497 = vld [vmem:[%s1445 + $0xcc] sm:$0xf]
      %v1498 = vld [vmem:[%s1445 + $0xd0] sm:$0xf]
      %v1499 = vld [vmem:[%s1445 + $0xd4] sm:$0xf]
      %v1500 = vld [vmem:[%s1445 + $0xd8] sm:$0xf]
      %v1501 = vld [vmem:[%s1445 + $0xdc] sm:$0xf]
      %v1502 = vld [vmem:[%s1445 + $0xe0] sm:$0xf]
      %v1503 = vld [vmem:[%s1445 + $0xe4] sm:$0xf]
      %v1504 = vld [vmem:[%s1445 + $0xe8] sm:$0xf]
      %v1505 = vld [vmem:[%s1445 + $0xec] sm:$0xf]
      %v1506 = vld [vmem:[%s1445 + $0xf0] sm:$0xf]
      %v1507 = vld [vmem:[%s1445 + $0xf4] sm:$0xf]
      %v1508 = vld [vmem:[%s1445 + $0xf8] sm:$0xf]
      %v1509 = vld [vmem:[%s1445 + $0xfc] sm:$0xf]
      %v1510 = vld [vmem:[%s1445 + $0x100] sm:$0xf]
      %v1511 = vld [vmem:[%s1445 + $0x104] sm:$0xf]
      %v1512 = vld [vmem:[%s1445 + $0x108] sm:$0xf]
      %v1513 = vld [vmem:[%s1445 + $0x10c] sm:$0xf]
      %v1514 = vld [vmem:[%s1445 + $0x110] sm:$0xf]
      %v1515 = vld [vmem:[%s1445 + $0x114] sm:$0xf]
      %v1516 = vld [vmem:[%s1445 + $0x118] sm:$0xf]
      %v1517 = vld [vmem:[%s1445 + $0x11c] sm:$0xf]
      %v1518 = vld [vmem:[%s1445 + $0x120] sm:$0xf]
      %v1519 = vld [vmem:[%s1445 + $0x124] sm:$0xf]
      %v1520 = vld [vmem:[%s1445 + $0x128] sm:$0xf]
      %v1521 = vld [vmem:[%s1445 + $0x12c] sm:$0xf]
      %v1522 = vld [vmem:[%s1445 + $0x130] sm:$0xf]
      %v1523 = vld [vmem:[%s1445 + $0x134] sm:$0xf]
      %v1524 = vld [vmem:[%s1445 + $0x138] sm:$0xf]
      %v1525 = vld [vmem:[%s1445 + $0x13c] sm:$0xf]
      %v1526 = vld [vmem:[%s1445 + $0x140] sm:$0xf]
      %v1527 = vld [vmem:[%s1445 + $0x144] sm:$0xf]
      %v1528 = vld [vmem:[%s1445 + $0x148] sm:$0xf]
      %v1529 = vld [vmem:[%s1445 + $0x14c] sm:$0xf]
      %v1530 = vld [vmem:[%s1445 + $0x150] sm:$0xf]
      %v1531 = vld [vmem:[%s1445 + $0x154] sm:$0xf]
      %v1532 = vld [vmem:[%s1445 + $0x158] sm:$0xf]
      %v1533 = vld [vmem:[%s1445 + $0x15c] sm:$0xf]
      %v1534 = vld [vmem:[%s1445 + $0x160] sm:$0xf]
      %v1535 = vld [vmem:[%s1445 + $0x164] sm:$0xf]
      %v1536 = vld [vmem:[%s1445 + $0x168] sm:$0xf]
      %v1537 = vld [vmem:[%s1445 + $0x16c] sm:$0xf]
      %v1538 = vld [vmem:[%s1445 + $0x170] sm:$0xf]
      %v1539 = vld [vmem:[%s1445 + $0x174] sm:$0xf]
      %v1540 = vld [vmem:[%s1445 + $0x178] sm:$0xf]
      %v1541 = vld [vmem:[%s1445 + $0x17c] sm:$0xf]
      %v1542 = vld [vmem:[%s1445 + $0x180] sm:$0xf]
      %v1543 = vld [vmem:[%s1445 + $0x184] sm:$0xf]
      %v1544 = vld [vmem:[%s1445 + $0x188] sm:$0xf]
      %v1545 = vld [vmem:[%s1445 + $0x18c] sm:$0xf]
      %v1546 = vld [vmem:[%s1445 + $0x190] sm:$0xf]
      %v1547 = vld [vmem:[%s1445 + $0x194] sm:$0xf]
      %v1548 = vld [vmem:[%s1445 + $0x198] sm:$0xf]
      %v1549 = vld [vmem:[%s1445 + $0x19c] sm:$0xf]
      %v1550 = vld [vmem:[%s1445 + $0x1a0] sm:$0xf]
      %v1551 = vld [vmem:[%s1445 + $0x1a4] sm:$0xf]
      %v1552 = vld [vmem:[%s1445 + $0x1a8] sm:$0xf]
      %v1553 = vld [vmem:[%s1445 + $0x1ac] sm:$0xf]
      %v1554 = vld [vmem:[%s1445 + $0x1b0] sm:$0xf]
      %v1555 = vld [vmem:[%s1445 + $0x1b4] sm:$0xf]
      %v1556 = vld [vmem:[%s1445 + $0x1b8] sm:$0xf]
      %v1557 = vld [vmem:[%s1445 + $0x1bc] sm:$0xf]
      %v1558 = vld [vmem:[%s1445 + $0x1c0] sm:$0xf]
      %v1559 = vld [vmem:[%s1445 + $0x1c4] sm:$0xf]
      %v1560 = vld [vmem:[%s1445 + $0x1c8] sm:$0xf]
      %v1561 = vld [vmem:[%s1445 + $0x1cc] sm:$0xf]
      %v1562 = vld [vmem:[%s1445 + $0x1d0] sm:$0xf]
      %v1563 = vld [vmem:[%s1445 + $0x1d4] sm:$0xf]
      %v1564 = vld [vmem:[%s1445 + $0x1d8] sm:$0xf]
      %v1565 = vld [vmem:[%s1445 + $0x1dc] sm:$0xf]
      %v1566 = vld [vmem:[%s1445 + $0x1e0] sm:$0xf]
      %v1567 = vld [vmem:[%s1445 + $0x1e4] sm:$0xf]
      %v1568 = vld [vmem:[%s1445 + $0x1e8] sm:$0xf]
      %v1569 = vld [vmem:[%s1445 + $0x1ec] sm:$0xf]
      %v1570 = vld [vmem:[%s1445 + $0x1f0] sm:$0xf]
      %v1571 = vld [vmem:[%s1445 + $0x1f4] sm:$0xf]
      %v1572 = vld [vmem:[%s1445 + $0x1f8] sm:$0xf]
      %v1573 = vld [vmem:[%s1445 + $0x1fc] sm:$0xf]
      %s1574 = scalar_lea.vmem %s9, %s33
      %v1575 = vld [vmem:[%s1574] sm:$0x1]
      %v1577 = vlaneseq
      %v1578 = vshrl.u32 %v1577, 7
      %v1579 = vsub.s32 0, %v1578
      %v1580 = vrot.slane %v1575, %v1579
      %v1710 = vunpack.c.l.b16 %v1446
      %v1711 = vunpack.c.l.b16 %v1447
      %v1712 = vunpack.c.l.b16 %v1448
      %v1713 = vunpack.c.l.b16 %v1449
      %v1714 = vunpack.c.l.b16 %v1450
      %v1715 = vunpack.c.l.b16 %v1451
      %v1716 = vunpack.c.l.b16 %v1452
      %v1717 = vunpack.c.l.b16 %v1453
      %v1718 = vunpack.c.l.b16 %v1454
      %v1719 = vunpack.c.l.b16 %v1455
      %v1720 = vunpack.c.l.b16 %v1456
      %v1721 = vunpack.c.l.b16 %v1457
      %v1722 = vunpack.c.l.b16 %v1458
      %v1723 = vunpack.c.l.b16 %v1459
      %v1724 = vunpack.c.l.b16 %v1460
      %v1725 = vunpack.c.l.b16 %v1461
      %v1726 = vunpack.c.l.b16 %v1462
      %v1727 = vunpack.c.l.b16 %v1463
      %v1728 = vunpack.c.l.b16 %v1464
      %v1729 = vunpack.c.l.b16 %v1465
      %v1730 = vunpack.c.l.b16 %v1466
      %v1731 = vunpack.c.l.b16 %v1467
      %v1732 = vunpack.c.l.b16 %v1468
      %v1733 = vunpack.c.l.b16 %v1469
      %v1734 = vunpack.c.l.b16 %v1470
      %v1735 = vunpack.c.l.b16 %v1471
      %v1736 = vunpack.c.l.b16 %v1472
      %v1737 = vunpack.c.l.b16 %v1473
      %v1738 = vunpack.c.l.b16 %v1474
      %v1739 = vunpack.c.l.b16 %v1475
      %v1740 = vunpack.c.l.b16 %v1476
      %v1741 = vunpack.c.l.b16 %v1477
      %v1742 = vunpack.c.l.b16 %v1478
      %v1743 = vunpack.c.l.b16 %v1479
      %v1744 = vunpack.c.l.b16 %v1480
      %v1745 = vunpack.c.l.b16 %v1481
      %v1746 = vunpack.c.l.b16 %v1482
      %v1747 = vunpack.c.l.b16 %v1483
      %v1748 = vunpack.c.l.b16 %v1484
      %v1749 = vunpack.c.l.b16 %v1485
      %v1750 = vunpack.c.l.b16 %v1486
      %v1751 = vunpack.c.l.b16 %v1487
      %v1752 = vunpack.c.l.b16 %v1488
      %v1753 = vunpack.c.l.b16 %v1489
      %v1754 = vunpack.c.l.b16 %v1490
      %v1755 = vunpack.c.l.b16 %v1491
      %v1756 = vunpack.c.l.b16 %v1492
      %v1757 = vunpack.c.l.b16 %v1493
      %v1758 = vunpack.c.l.b16 %v1494
      %v1759 = vunpack.c.l.b16 %v1495
      %v1760 = vunpack.c.l.b16 %v1496
      %v1761 = vunpack.c.l.b16 %v1497
      %v1762 = vunpack.c.l.b16 %v1498
      %v1763 = vunpack.c.l.b16 %v1499
      %v1764 = vunpack.c.l.b16 %v1500
      %v1765 = vunpack.c.l.b16 %v1501
      %v1766 = vunpack.c.l.b16 %v1502
      %v1767 = vunpack.c.l.b16 %v1503
      %v1768 = vunpack.c.l.b16 %v1504
      %v1769 = vunpack.c.l.b16 %v1505
      %v1770 = vunpack.c.l.b16 %v1506
      %v1771 = vunpack.c.l.b16 %v1507
      %v1772 = vunpack.c.l.b16 %v1508
      %v1773 = vunpack.c.l.b16 %v1509
      %v1774 = vunpack.c.l.b16 %v1510
      %v1775 = vunpack.c.l.b16 %v1511
      %v1776 = vunpack.c.l.b16 %v1512
      %v1777 = vunpack.c.l.b16 %v1513
      %v1778 = vunpack.c.l.b16 %v1514
      %v1779 = vunpack.c.l.b16 %v1515
      %v1780 = vunpack.c.l.b16 %v1516
      %v1781 = vunpack.c.l.b16 %v1517
      %v1782 = vunpack.c.l.b16 %v1518
      %v1783 = vunpack.c.l.b16 %v1519
      %v1784 = vunpack.c.l.b16 %v1520
      %v1785 = vunpack.c.l.b16 %v1521
      %v1786 = vunpack.c.l.b16 %v1522
      %v1787 = vunpack.c.l.b16 %v1523
      %v1788 = vunpack.c.l.b16 %v1524
      %v1789 = vunpack.c.l.b16 %v1525
      %v1790 = vunpack.c.l.b16 %v1526
      %v1791 = vunpack.c.l.b16 %v1527
      %v1792 = vunpack.c.l.b16 %v1528
      %v1793 = vunpack.c.l.b16 %v1529
      %v1794 = vunpack.c.l.b16 %v1530
      %v1795 = vunpack.c.l.b16 %v1531
      %v1796 = vunpack.c.l.b16 %v1532
      %v1797 = vunpack.c.l.b16 %v1533
      %v1798 = vunpack.c.l.b16 %v1534
      %v1799 = vunpack.c.l.b16 %v1535
      %v1800 = vunpack.c.l.b16 %v1536
      %v1801 = vunpack.c.l.b16 %v1537
      %v1802 = vunpack.c.l.b16 %v1538
      %v1803 = vunpack.c.l.b16 %v1539
      %v1804 = vunpack.c.l.b16 %v1540
      %v1805 = vunpack.c.l.b16 %v1541
      %v1806 = vunpack.c.l.b16 %v1542
      %v1807 = vunpack.c.l.b16 %v1543
      %v1808 = vunpack.c.l.b16 %v1544
      %v1809 = vunpack.c.l.b16 %v1545
      %v1810 = vunpack.c.l.b16 %v1546
      %v1811 = vunpack.c.l.b16 %v1547
      %v1812 = vunpack.c.l.b16 %v1548
      %v1813 = vunpack.c.l.b16 %v1549
      %v1814 = vunpack.c.l.b16 %v1550
      %v1815 = vunpack.c.l.b16 %v1551
      %v1816 = vunpack.c.l.b16 %v1552
      %v1817 = vunpack.c.l.b16 %v1553
      %v1818 = vunpack.c.l.b16 %v1554
      %v1819 = vunpack.c.l.b16 %v1555
      %v1820 = vunpack.c.l.b16 %v1556
      %v1821 = vunpack.c.l.b16 %v1557
      %v1822 = vunpack.c.l.b16 %v1558
      %v1823 = vunpack.c.l.b16 %v1559
      %v1824 = vunpack.c.l.b16 %v1560
      %v1825 = vunpack.c.l.b16 %v1561
      %v1826 = vunpack.c.l.b16 %v1562
      %v1827 = vunpack.c.l.b16 %v1563
      %v1828 = vunpack.c.l.b16 %v1564
      %v1829 = vunpack.c.l.b16 %v1565
      %v1830 = vunpack.c.l.b16 %v1566
      %v1831 = vunpack.c.l.b16 %v1567
      %v1832 = vunpack.c.l.b16 %v1568
      %v1833 = vunpack.c.l.b16 %v1569
      %v1834 = vunpack.c.l.b16 %v1570
      %v1835 = vunpack.c.l.b16 %v1571
      %v1836 = vunpack.c.l.b16 %v1572
      %v1837 = vunpack.c.l.b16 %v1573
      %v1838 = vpack.c.b16 %v1711, %v1710
      %v1839 = vpack.c.b16 %v1713, %v1712
      %v1840 = vpack.c.b16 %v1715, %v1714
      %v1841 = vpack.c.b16 %v1717, %v1716
      %v1842 = vpack.c.b16 %v1719, %v1718
      %v1843 = vpack.c.b16 %v1721, %v1720
      %v1844 = vpack.c.b16 %v1723, %v1722
      %v1845 = vpack.c.b16 %v1725, %v1724
      %v1846 = vpack.c.b16 %v1727, %v1726
      %v1847 = vpack.c.b16 %v1729, %v1728
      %v1848 = vpack.c.b16 %v1731, %v1730
      %v1849 = vpack.c.b16 %v1733, %v1732
      %v1850 = vpack.c.b16 %v1735, %v1734
      %v1851 = vpack.c.b16 %v1737, %v1736
      %v1852 = vpack.c.b16 %v1739, %v1738
      %v1853 = vpack.c.b16 %v1741, %v1740
      %v1854 = vpack.c.b16 %v1743, %v1742
      %v1855 = vpack.c.b16 %v1745, %v1744
      %v1856 = vpack.c.b16 %v1747, %v1746
      %v1857 = vpack.c.b16 %v1749, %v1748
      %v1858 = vpack.c.b16 %v1751, %v1750
      %v1859 = vpack.c.b16 %v1753, %v1752
      %v1860 = vpack.c.b16 %v1755, %v1754
      %v1861 = vpack.c.b16 %v1757, %v1756
      %v1862 = vpack.c.b16 %v1759, %v1758
      %v1863 = vpack.c.b16 %v1761, %v1760
      %v1864 = vpack.c.b16 %v1763, %v1762
      %v1865 = vpack.c.b16 %v1765, %v1764
      %v1866 = vpack.c.b16 %v1767, %v1766
      %v1867 = vpack.c.b16 %v1769, %v1768
      %v1868 = vpack.c.b16 %v1771, %v1770
      %v1869 = vpack.c.b16 %v1773, %v1772
      %v1870 = vpack.c.b16 %v1775, %v1774
      %v1871 = vpack.c.b16 %v1777, %v1776
      %v1872 = vpack.c.b16 %v1779, %v1778
      %v1873 = vpack.c.b16 %v1781, %v1780
      %v1874 = vpack.c.b16 %v1783, %v1782
      %v1875 = vpack.c.b16 %v1785, %v1784
      %v1876 = vpack.c.b16 %v1787, %v1786
      %v1877 = vpack.c.b16 %v1789, %v1788
      %v1878 = vpack.c.b16 %v1791, %v1790
      %v1879 = vpack.c.b16 %v1793, %v1792
      %v1880 = vpack.c.b16 %v1795, %v1794
      %v1881 = vpack.c.b16 %v1797, %v1796
      %v1882 = vpack.c.b16 %v1799, %v1798
      %v1883 = vpack.c.b16 %v1801, %v1800
      %v1884 = vpack.c.b16 %v1803, %v1802
      %v1885 = vpack.c.b16 %v1805, %v1804
      %v1886 = vpack.c.b16 %v1807, %v1806
      %v1887 = vpack.c.b16 %v1809, %v1808
      %v1888 = vpack.c.b16 %v1811, %v1810
      %v1889 = vpack.c.b16 %v1813, %v1812
      %v1890 = vpack.c.b16 %v1815, %v1814
      %v1891 = vpack.c.b16 %v1817, %v1816
      %v1892 = vpack.c.b16 %v1819, %v1818
      %v1893 = vpack.c.b16 %v1821, %v1820
      %v1894 = vpack.c.b16 %v1823, %v1822
      %v1895 = vpack.c.b16 %v1825, %v1824
      %v1896 = vpack.c.b16 %v1827, %v1826
      %v1897 = vpack.c.b16 %v1829, %v1828
      %v1898 = vpack.c.b16 %v1831, %v1830
      %v1899 = vpack.c.b16 %v1833, %v1832
      %v1900 = vpack.c.b16 %v1835, %v1834
      %v1901 = vpack.c.b16 %v1837, %v1836
      %1966 = vmatprep.subr.bf16.mxu0 0
      %1967 = vmatpush1.bf16.msra.mxu0 %v1838
      %1968 = vmatprep.subr.bf16.mxu0 0
      %1969 = vmatpush1.bf16.msra.mxu0 %v1839
      %1970 = vmatprep.subr.bf16.mxu0 0
      %1971 = vmatpush1.bf16.msra.mxu0 %v1840
      %1972 = vmatprep.subr.bf16.mxu0 0
      %1973 = vmatpush1.bf16.msra.mxu0 %v1841
      %1974 = vmatprep.subr.bf16.mxu0 0
      %1975 = vmatpush1.bf16.msra.mxu0 %v1842
      %1976 = vmatprep.subr.bf16.mxu0 0
      %1977 = vmatpush1.bf16.msra.mxu0 %v1843
      %1978 = vmatprep.subr.bf16.mxu0 0
      %1979 = vmatpush1.bf16.msra.mxu0 %v1844
      %1980 = vmatprep.subr.bf16.mxu0 0
      %1981 = vmatpush1.bf16.msra.mxu0 %v1845
      %1982 = vmatprep.subr.bf16.mxu0 0
      %1983 = vmatpush1.bf16.msra.mxu0 %v1846
      %1984 = vmatprep.subr.bf16.mxu0 0
      %1985 = vmatpush1.bf16.msra.mxu0 %v1847
      %1986 = vmatprep.subr.bf16.mxu0 0
      %1987 = vmatpush1.bf16.msra.mxu0 %v1848
      %1988 = vmatprep.subr.bf16.mxu0 0
      %1989 = vmatpush1.bf16.msra.mxu0 %v1849
      %1990 = vmatprep.subr.bf16.mxu0 0
      %1991 = vmatpush1.bf16.msra.mxu0 %v1850
      %1992 = vmatprep.subr.bf16.mxu0 0
      %1993 = vmatpush1.bf16.msra.mxu0 %v1851
      %1994 = vmatprep.subr.bf16.mxu0 0
      %1995 = vmatpush1.bf16.msra.mxu0 %v1852
      %1996 = vmatprep.subr.bf16.mxu0 0
      %1997 = vmatpush1.bf16.msra.mxu0 %v1853
      %1998 = vmatprep.mubr.bf16.mxu0 %v1437
      %1999 = vmatmul.mubr.bf16.gmra.mrb[0].mxu0 %v1436
      %v2000 = vpop.f32.mrb[0].mxu0
      %v2001 = vadd.f32 %v1580, %v2000
      %v2002 = vpop.f32.mrb[0].mxu0
      %v2003 = vpop.f32.mrb[0].mxu0
      %v2004 = vpop.f32.mrb[0].mxu0
      %2005 = vdwg.mxu0
      %2006 = vmatprep.subr.bf16.mxu0 0
      %2007 = vmatpush1.bf16.msra.mxu0 %v1854
      %2008 = vmatprep.subr.bf16.mxu0 0
      %2009 = vmatpush1.bf16.msra.mxu0 %v1855
      %2010 = vmatprep.subr.bf16.mxu0 0
      %2011 = vmatpush1.bf16.msra.mxu0 %v1856
      %2012 = vmatprep.subr.bf16.mxu0 0
      %2013 = vmatpush1.bf16.msra.mxu0 %v1857
      %2014 = vmatprep.subr.bf16.mxu0 0
      %2015 = vmatpush1.bf16.msra.mxu0 %v1858
      %2016 = vmatprep.subr.bf16.mxu0 0
      %2017 = vmatpush1.bf16.msra.mxu0 %v1859
      %2018 = vmatprep.subr.bf16.mxu0 0
      %2019 = vmatpush1.bf16.msra.mxu0 %v1860
      %2020 = vmatprep.subr.bf16.mxu0 0
      %2021 = vmatpush1.bf16.msra.mxu0 %v1861
      %2022 = vmatprep.subr.bf16.mxu0 0
      %2023 = vmatpush1.bf16.msra.mxu0 %v1862
      %2024 = vmatprep.subr.bf16.mxu0 0
      %2025 = vmatpush1.bf16.msra.mxu0 %v1863
      %2026 = vmatprep.subr.bf16.mxu0 0
      %2027 = vmatpush1.bf16.msra.mxu0 %v1864
      %2028 = vmatprep.subr.bf16.mxu0 0
      %2029 = vmatpush1.bf16.msra.mxu0 %v1865
      %2030 = vmatprep.subr.bf16.mxu0 0
      %2031 = vmatpush1.bf16.msra.mxu0 %v1866
      %2032 = vmatprep.subr.bf16.mxu0 0
      %2033 = vmatpush1.bf16.msra.mxu0 %v1867
      %2034 = vmatprep.subr.bf16.mxu0 0
      %2035 = vmatpush1.bf16.msra.mxu0 %v1868
      %2036 = vmatprep.subr.bf16.mxu0 0
      %2037 = vmatpush1.bf16.msra.mxu0 %v1869
      %2038 = vmatprep.mubr.bf16.mxu0 %v1439
      %2039 = vmatmul.mubr.bf16.gmra.mrb[0].mxu0 %v1438
      %v2040 = vpop.f32.mrb[0].mxu0
      %v2041 = vadd.f32 %v2001, %v2040
      %v2042 = vpop.f32.mrb[0].mxu0
      %v2043 = vpop.f32.mrb[0].mxu0
      %v2044 = vpop.f32.mrb[0].mxu0
      %2045 = vdwg.mxu0
      %2046 = vmatprep.subr.bf16.mxu0 0
      %2047 = vmatpush1.bf16.msra.mxu0 %v1870
      %2048 = vmatprep.subr.bf16.mxu0 0
      %2049 = vmatpush1.bf16.msra.mxu0 %v1871
      %2050 = vmatprep.subr.bf16.mxu0 0
      %2051 = vmatpush1.bf16.msra.mxu0 %v1872
      %2052 = vmatprep.subr.bf16.mxu0 0
      %2053 = vmatpush1.bf16.msra.mxu0 %v1873
      %2054 = vmatprep.subr.bf16.mxu0 0
      %2055 = vmatpush1.bf16.msra.mxu0 %v1874
      %2056 = vmatprep.subr.bf16.mxu0 0
      %2057 = vmatpush1.bf16.msra.mxu0 %v1875
      %2058 = vmatprep.subr.bf16.mxu0 0
      %2059 = vmatpush1.bf16.msra.mxu0 %v1876
      %2060 = vmatprep.subr.bf16.mxu0 0
      %2061 = vmatpush1.bf16.msra.mxu0 %v1877
      %2062 = vmatprep.subr.bf16.mxu0 0
      %2063 = vmatpush1.bf16.msra.mxu0 %v1878
      %2064 = vmatprep.subr.bf16.mxu0 0
      %2065 = vmatpush1.bf16.msra.mxu0 %v1879
      %2066 = vmatprep.subr.bf16.mxu0 0
      %2067 = vmatpush1.bf16.msra.mxu0 %v1880
      %2068 = vmatprep.subr.bf16.mxu0 0
      %2069 = vmatpush1.bf16.msra.mxu0 %v1881
      %2070 = vmatprep.subr.bf16.mxu0 0
      %2071 = vmatpush1.bf16.msra.mxu0 %v1882
      %2072 = vmatprep.subr.bf16.mxu0 0
      %2073 = vmatpush1.bf16.msra.mxu0 %v1883
      %2074 = vmatprep.subr.bf16.mxu0 0
      %2075 = vmatpush1.bf16.msra.mxu0 %v1884
      %2076 = vmatprep.subr.bf16.mxu0 0
      %2077 = vmatpush1.bf16.msra.mxu0 %v1885
      %2078 = vmatprep.mubr.bf16.mxu0 %v1441
      %2079 = vmatmul.mubr.bf16.gmra.mrb[0].mxu0 %v1440
      %v2080 = vpop.f32.mrb[0].mxu0
      %v2081 = vadd.f32 %v2041, %v2080
      %v2082 = vpop.f32.mrb[0].mxu0
      %v2083 = vpop.f32.mrb[0].mxu0
      %v2084 = vpop.f32.mrb[0].mxu0
      %2085 = vdwg.mxu0
      %2086 = vmatprep.subr.bf16.mxu0 0
      %2087 = vmatpush1.bf16.msra.mxu0 %v1886
      %2088 = vmatprep.subr.bf16.mxu0 0
      %2089 = vmatpush1.bf16.msra.mxu0 %v1887
      %2090 = vmatprep.subr.bf16.mxu0 0
      %2091 = vmatpush1.bf16.msra.mxu0 %v1888
      %2092 = vmatprep.subr.bf16.mxu0 0
      %2093 = vmatpush1.bf16.msra.mxu0 %v1889
      %2094 = vmatprep.subr.bf16.mxu0 0
      %2095 = vmatpush1.bf16.msra.mxu0 %v1890
      %2096 = vmatprep.subr.bf16.mxu0 0
      %2097 = vmatpush1.bf16.msra.mxu0 %v1891
      %2098 = vmatprep.subr.bf16.mxu0 0
      %2099 = vmatpush1.bf16.msra.mxu0 %v1892
      %2100 = vmatprep.subr.bf16.mxu0 0
      %2101 = vmatpush1.bf16.msra.mxu0 %v1893
      %2102 = vmatprep.subr.bf16.mxu0 0
      %2103 = vmatpush1.bf16.msra.mxu0 %v1894
      %2104 = vmatprep.subr.bf16.mxu0 0
      %2105 = vmatpush1.bf16.msra.mxu0 %v1895
      %2106 = vmatprep.subr.bf16.mxu0 0
      %2107 = vmatpush1.bf16.msra.mxu0 %v1896
      %2108 = vmatprep.subr.bf16.mxu0 0
      %2109 = vmatpush1.bf16.msra.mxu0 %v1897
      %2110 = vmatprep.subr.bf16.mxu0 0
      %2111 = vmatpush1.bf16.msra.mxu0 %v1898
      %2112 = vmatprep.subr.bf16.mxu0 0
      %2113 = vmatpush1.bf16.msra.mxu0 %v1899
      %2114 = vmatprep.subr.bf16.mxu0 0
      %2115 = vmatpush1.bf16.msra.mxu0 %v1900
      %2116 = vmatprep.subr.bf16.mxu0 0
      %2117 = vmatpush1.bf16.msra.mxu0 %v1901
      %2118 = vmatprep.mubr.bf16.mxu0 %v1443
      %2119 = vmatmul.mubr.bf16.gmra.mrb[0].mxu0 %v1442
      %v2120 = vpop.f32.mrb[0].mxu0
      %v2121 = vadd.f32 %v2081, %v2120
      %v2122 = vpop.f32.mrb[0].mxu0
      %v2123 = vpop.f32.mrb[0].mxu0
      %v2124 = vpop.f32.mrb[0].mxu0
      %2125 = vdwg.mxu0
      %vm2126 = vcmp.lt.f32.partialorder %v2121, 0.0
      %v2127 = vsel %vm2126, -1.0, 1.0
      %v2128 = vand.u32 2147483647, %v2121
      %vm2129 = vcmp.gt.f32.partialorder %v2128, 2.4142137
      %vm2130 = vcmp.gt.f32.partialorder %v2128, 0.41421357
      %v2131 = vsel %vm2129, %v2128, 2.0
      %v2132 = vadd.f32 %v2128, 1.0
      %v2133 = vsel %vm2130, %v2132, 2.0
      %v2134 = vrcp.pop %v2131
      %v2135 = vmul.f32 -1.0, %v2134
      %v2136 = vsub.f32 %v2128, 1.0
      %v2137 = vrcp.pop %v2133
      %v2138 = vmul.f32 %v2136, %v2137
      %v2139 = vsel %vm2130, %v2138, %v2128
      %v2140 = vsel %vm2129, %v2135, %v2139
      %v2141 = vsel %vm2130, 0.7853982, 0.0
      %v2142 = vsel %vm2129, 1.5707964, %v2141
      %v2143 = vmul.f32 %v2140, %v2140
      %v2144 = vmul.f32 %v2143, 0.080537446
      %v2145 = vsub.f32 %v2144, 0.13877685
      %v2146 = vmul.f32 %v2145, %v2143
      %v2147 = vadd.f32 %v2146, 0.19977711
      %v2148 = vmul.f32 %v2147, %v2143
      %v2149 = vsub.f32 %v2148, 0.3333295
      %v2150 = vmul.f32 %v2149, %v2143
      %v2151 = vmul.f32 %v2150, %v2140
      %v2152 = vadd.f32 %v2151, %v2140
      %v2153 = vadd.f32 %v2142, %v2152
      %v2154 = vmul.f32 %v2127, %v2153
      %v2155 = vmul.f32 %v2154, 1.272
      %v2156 = vmul.f32 %v2155, 1.442695
      %v2157 = vpow.pop %v2156
      %v2158 = vmul.f32 %v2157, %v824
      %2160 = vrot.lane.b32.xlu0 %v2121, 64
      %v2161 = vpop.permute.xlu0 %2160
      %v2163 = vadd.f32 %v2158, %v2161
      %2164 = vst.msk [vmem:[#allocation2] sm:$0xff] %vm829, %v2163
      %v2165 = vld [vmem:[#allocation2] sm:$0xff]
      %v2166 = vpack.c.bf16 %v2165, %v2165
      %s2167 = smul.addr %s833, 4
      %s2168 = scalar_lea.vmem %s10, %s2167
      %v2169 = vld [vmem:[%s2168] sm:$0xff]
      %v2170 = vld [vmem:[%s2168 + $0x8] sm:$0xff]
      %v2171 = vld [vmem:[%s2168 + $0x10] sm:$0xff]
      %v2172 = vld [vmem:[%s2168 + $0x18] sm:$0xff]
      %v2173 = vld [vmem:[%s2168 + $0x20] sm:$0xff]
      %v2174 = vld [vmem:[%s2168 + $0x28] sm:$0xff]
      %v2175 = vld [vmem:[%s2168 + $0x30] sm:$0xff]
      %v2176 = vld [vmem:[%s2168 + $0x38] sm:$0xff]
      %v2177 = vld [vmem:[%s2168 + $0x40] sm:$0xff]
      %v2178 = vld [vmem:[%s2168 + $0x48] sm:$0xff]
      %v2179 = vld [vmem:[%s2168 + $0x50] sm:$0xff]
      %v2180 = vld [vmem:[%s2168 + $0x58] sm:$0xff]
      %v2181 = vld [vmem:[%s2168 + $0x60] sm:$0xff]
      %v2182 = vld [vmem:[%s2168 + $0x68] sm:$0xff]
      %v2183 = vld [vmem:[%s2168 + $0x70] sm:$0xff]
      %v2184 = vld [vmem:[%s2168 + $0x78] sm:$0xff]
      %v2185 = vld [vmem:[%s2168 + $0x80] sm:$0xff]
      %v2186 = vld [vmem:[%s2168 + $0x88] sm:$0xff]
      %v2187 = vld [vmem:[%s2168 + $0x90] sm:$0xff]
      %v2188 = vld [vmem:[%s2168 + $0x98] sm:$0xff]
      %v2189 = vld [vmem:[%s2168 + $0xa0] sm:$0xff]
      %v2190 = vld [vmem:[%s2168 + $0xa8] sm:$0xff]
      %v2191 = vld [vmem:[%s2168 + $0xb0] sm:$0xff]
      %v2192 = vld [vmem:[%s2168 + $0xb8] sm:$0xff]
      %v2193 = vld [vmem:[%s2168 + $0xc0] sm:$0xff]
      %v2194 = vld [vmem:[%s2168 + $0xc8] sm:$0xff]
      %v2195 = vld [vmem:[%s2168 + $0xd0] sm:$0xff]
      %v2196 = vld [vmem:[%s2168 + $0xd8] sm:$0xff]
      %v2197 = vld [vmem:[%s2168 + $0xe0] sm:$0xff]
      %v2198 = vld [vmem:[%s2168 + $0xe8] sm:$0xff]
      %v2199 = vld [vmem:[%s2168 + $0xf0] sm:$0xff]
      %v2200 = vld [vmem:[%s2168 + $0xf8] sm:$0xff]
      %v2201 = vld [vmem:[%s2168 + $0x100] sm:$0xff]
      %v2202 = vld [vmem:[%s2168 + $0x108] sm:$0xff]
      %v2203 = vld [vmem:[%s2168 + $0x110] sm:$0xff]
      %v2204 = vld [vmem:[%s2168 + $0x118] sm:$0xff]
      %v2205 = vld [vmem:[%s2168 + $0x120] sm:$0xff]
      %v2206 = vld [vmem:[%s2168 + $0x128] sm:$0xff]
      %v2207 = vld [vmem:[%s2168 + $0x130] sm:$0xff]
      %v2208 = vld [vmem:[%s2168 + $0x138] sm:$0xff]
      %v2209 = vld [vmem:[%s2168 + $0x140] sm:$0xff]
      %v2210 = vld [vmem:[%s2168 + $0x148] sm:$0xff]
      %v2211 = vld [vmem:[%s2168 + $0x150] sm:$0xff]
      %v2212 = vld [vmem:[%s2168 + $0x158] sm:$0xff]
      %v2213 = vld [vmem:[%s2168 + $0x160] sm:$0xff]
      %v2214 = vld [vmem:[%s2168 + $0x168] sm:$0xff]
      %v2215 = vld [vmem:[%s2168 + $0x170] sm:$0xff]
      %v2216 = vld [vmem:[%s2168 + $0x178] sm:$0xff]
      %v2217 = vld [vmem:[%s2168 + $0x180] sm:$0xff]
      %v2218 = vld [vmem:[%s2168 + $0x188] sm:$0xff]
      %v2219 = vld [vmem:[%s2168 + $0x190] sm:$0xff]
      %v2220 = vld [vmem:[%s2168 + $0x198] sm:$0xff]
      %v2221 = vld [vmem:[%s2168 + $0x1a0] sm:$0xff]
      %v2222 = vld [vmem:[%s2168 + $0x1a8] sm:$0xff]
      %v2223 = vld [vmem:[%s2168 + $0x1b0] sm:$0xff]
      %v2224 = vld [vmem:[%s2168 + $0x1b8] sm:$0xff]
      %v2225 = vld [vmem:[%s2168 + $0x1c0] sm:$0xff]
      %v2226 = vld [vmem:[%s2168 + $0x1c8] sm:$0xff]
      %v2227 = vld [vmem:[%s2168 + $0x1d0] sm:$0xff]
      %v2228 = vld [vmem:[%s2168 + $0x1d8] sm:$0xff]
      %v2229 = vld [vmem:[%s2168 + $0x1e0] sm:$0xff]
      %v2230 = vld [vmem:[%s2168 + $0x1e8] sm:$0xff]
      %v2231 = vld [vmem:[%s2168 + $0x1f0] sm:$0xff]
      %v2232 = vld [vmem:[%s2168 + $0x1f8] sm:$0xff]
      %s2233 = scalar_lea.vmem %s11, %s900
      %v2234 = vld [vmem:[%s2233] sm:$0xff]
      %v2236 = vlaneseq
      %v2237 = vshrl.u32 %v2236, 7
      %v2238 = vsub.s32 0, %v2237
      %v2239 = vrot.slane %v2234, %v2238
      %v2240 = vlaneseq
      %v2241 = vshrl.u32 %v2240, 7
      %v2242 = vsub.s32 1, %v2241
      %v2243 = vrot.slane %v2234, %v2242
      %v2244 = vlaneseq
      %v2245 = vshrl.u32 %v2244, 7
      %v2246 = vsub.s32 2, %v2245
      %v2247 = vrot.slane %v2234, %v2246
      %v2248 = vlaneseq
      %v2249 = vshrl.u32 %v2248, 7
      %v2250 = vsub.s32 3, %v2249
      %v2251 = vrot.slane %v2234, %v2250
      %v2252 = vlaneseq
      %v2253 = vshrl.u32 %v2252, 7
      %v2254 = vsub.s32 4, %v2253
      %v2255 = vrot.slane %v2234, %v2254
      %v2256 = vlaneseq
      %v2257 = vshrl.u32 %v2256, 7
      %v2258 = vsub.s32 5, %v2257
      %v2259 = vrot.slane %v2234, %v2258
      %v2260 = vlaneseq
      %v2261 = vshrl.u32 %v2260, 7
      %v2262 = vsub.s32 6, %v2261
      %v2263 = vrot.slane %v2234, %v2262
      %v2264 = vlaneseq
      %v2265 = vshrl.u32 %v2264, 7
      %v2266 = vsub.s32 7, %v2265
      %v2267 = vrot.slane %v2234, %v2266
      %v2340 = vunpack.c.l.b16 %v2169
      %v2341 = vunpack.c.h.b16 %v2169
      %v2342 = vunpack.c.l.b16 %v2170
      %v2343 = vunpack.c.h.b16 %v2170
      %v2344 = vunpack.c.l.b16 %v2171
      %v2345 = vunpack.c.h.b16 %v2171
      %v2346 = vunpack.c.l.b16 %v2172
      %v2347 = vunpack.c.h.b16 %v2172
      %v2348 = vunpack.c.l.b16 %v2173
      %v2349 = vunpack.c.h.b16 %v2173
      %v2350 = vunpack.c.l.b16 %v2174
      %v2351 = vunpack.c.h.b16 %v2174
      %v2352 = vunpack.c.l.b16 %v2175
      %v2353 = vunpack.c.h.b16 %v2175
      %v2354 = vunpack.c.l.b16 %v2176
      %v2355 = vunpack.c.h.b16 %v2176
      %v2356 = vunpack.c.l.b16 %v2177
      %v2357 = vunpack.c.h.b16 %v2177
      %v2358 = vunpack.c.l.b16 %v2178
      %v2359 = vunpack.c.h.b16 %v2178
      %v2360 = vunpack.c.l.b16 %v2179
      %v2361 = vunpack.c.h.b16 %v2179
      %v2362 = vunpack.c.l.b16 %v2180
      %v2363 = vunpack.c.h.b16 %v2180
      %v2364 = vunpack.c.l.b16 %v2181
      %v2365 = vunpack.c.h.b16 %v2181
      %v2366 = vunpack.c.l.b16 %v2182
      %v2367 = vunpack.c.h.b16 %v2182
      %v2368 = vunpack.c.l.b16 %v2183
      %v2369 = vunpack.c.h.b16 %v2183
      %v2370 = vunpack.c.l.b16 %v2184
      %v2371 = vunpack.c.h.b16 %v2184
      %v2372 = vunpack.c.l.b16 %v2185
      %v2373 = vunpack.c.h.b16 %v2185
      %v2374 = vunpack.c.l.b16 %v2186
      %v2375 = vunpack.c.h.b16 %v2186
      %v2376 = vunpack.c.l.b16 %v2187
      %v2377 = vunpack.c.h.b16 %v2187
      %v2378 = vunpack.c.l.b16 %v2188
      %v2379 = vunpack.c.h.b16 %v2188
      %v2380 = vunpack.c.l.b16 %v2189
      %v2381 = vunpack.c.h.b16 %v2189
      %v2382 = vunpack.c.l.b16 %v2190
      %v2383 = vunpack.c.h.b16 %v2190
      %v2384 = vunpack.c.l.b16 %v2191
      %v2385 = vunpack.c.h.b16 %v2191
      %v2386 = vunpack.c.l.b16 %v2192
      %v2387 = vunpack.c.h.b16 %v2192
      %v2388 = vunpack.c.l.b16 %v2193
      %v2389 = vunpack.c.h.b16 %v2193
      %v2390 = vunpack.c.l.b16 %v2194
      %v2391 = vunpack.c.h.b16 %v2194
      %v2392 = vunpack.c.l.b16 %v2195
      %v2393 = vunpack.c.h.b16 %v2195
      %v2394 = vunpack.c.l.b16 %v2196
      %v2395 = vunpack.c.h.b16 %v2196
      %v2396 = vunpack.c.l.b16 %v2197
      %v2397 = vunpack.c.h.b16 %v2197
      %v2398 = vunpack.c.l.b16 %v2198
      %v2399 = vunpack.c.h.b16 %v2198
      %v2400 = vunpack.c.l.b16 %v2199
      %v2401 = vunpack.c.h.b16 %v2199
      %v2402 = vunpack.c.l.b16 %v2200
      %v2403 = vunpack.c.h.b16 %v2200
      %v2404 = vunpack.c.l.b16 %v2201
      %v2405 = vunpack.c.h.b16 %v2201
      %v2406 = vunpack.c.l.b16 %v2202
      %v2407 = vunpack.c.h.b16 %v2202
      %v2408 = vunpack.c.l.b16 %v2203
      %v2409 = vunpack.c.h.b16 %v2203
      %v2410 = vunpack.c.l.b16 %v2204
      %v2411 = vunpack.c.h.b16 %v2204
      %v2412 = vunpack.c.l.b16 %v2205
      %v2413 = vunpack.c.h.b16 %v2205
      %v2414 = vunpack.c.l.b16 %v2206
      %v2415 = vunpack.c.h.b16 %v2206
      %v2416 = vunpack.c.l.b16 %v2207
      %v2417 = vunpack.c.h.b16 %v2207
      %v2418 = vunpack.c.l.b16 %v2208
      %v2419 = vunpack.c.h.b16 %v2208
      %v2420 = vunpack.c.l.b16 %v2209
      %v2421 = vunpack.c.h.b16 %v2209
      %v2422 = vunpack.c.l.b16 %v2210
      %v2423 = vunpack.c.h.b16 %v2210
      %v2424 = vunpack.c.l.b16 %v2211
      %v2425 = vunpack.c.h.b16 %v2211
      %v2426 = vunpack.c.l.b16 %v2212
      %v2427 = vunpack.c.h.b16 %v2212
      %v2428 = vunpack.c.l.b16 %v2213
      %v2429 = vunpack.c.h.b16 %v2213
      %v2430 = vunpack.c.l.b16 %v2214
      %v2431 = vunpack.c.h.b16 %v2214
      %v2432 = vunpack.c.l.b16 %v2215
      %v2433 = vunpack.c.h.b16 %v2215
      %v2434 = vunpack.c.l.b16 %v2216
      %v2435 = vunpack.c.h.b16 %v2216
      %v2436 = vunpack.c.l.b16 %v2217
      %v2437 = vunpack.c.h.b16 %v2217
      %v2438 = vunpack.c.l.b16 %v2218
      %v2439 = vunpack.c.h.b16 %v2218
      %v2440 = vunpack.c.l.b16 %v2219
      %v2441 = vunpack.c.h.b16 %v2219
      %v2442 = vunpack.c.l.b16 %v2220
      %v2443 = vunpack.c.h.b16 %v2220
      %v2444 = vunpack.c.l.b16 %v2221
      %v2445 = vunpack.c.h.b16 %v2221
      %v2446 = vunpack.c.l.b16 %v2222
      %v2447 = vunpack.c.h.b16 %v2222
      %v2448 = vunpack.c.l.b16 %v2223
      %v2449 = vunpack.c.h.b16 %v2223
      %v2450 = vunpack.c.l.b16 %v2224
      %v2451 = vunpack.c.h.b16 %v2224
      %v2452 = vunpack.c.l.b16 %v2225
      %v2453 = vunpack.c.h.b16 %v2225
      %v2454 = vunpack.c.l.b16 %v2226
      %v2455 = vunpack.c.h.b16 %v2226
      %v2456 = vunpack.c.l.b16 %v2227
      %v2457 = vunpack.c.h.b16 %v2227
      %v2458 = vunpack.c.l.b16 %v2228
      %v2459 = vunpack.c.h.b16 %v2228
      %v2460 = vunpack.c.l.b16 %v2229
      %v2461 = vunpack.c.h.b16 %v2229
      %v2462 = vunpack.c.l.b16 %v2230
      %v2463 = vunpack.c.h.b16 %v2230
      %v2464 = vunpack.c.l.b16 %v2231
      %v2465 = vunpack.c.h.b16 %v2231
      %v2466 = vunpack.c.l.b16 %v2232
      %v2467 = vunpack.c.h.b16 %v2232
      %v2468 = vpack.c.b16 %v2348, %v2340
      %v2469 = vpack.c.b16 %v2349, %v2341
      %v2470 = vpack.c.b16 %v2350, %v2342
      %v2471 = vpack.c.b16 %v2351, %v2343
      %v2472 = vpack.c.b16 %v2352, %v2344
      %v2473 = vpack.c.b16 %v2353, %v2345
      %v2474 = vpack.c.b16 %v2354, %v2346
      %v2475 = vpack.c.b16 %v2355, %v2347
      %v2476 = vpack.c.b16 %v2364, %v2356
      %v2477 = vpack.c.b16 %v2365, %v2357
      %v2478 = vpack.c.b16 %v2366, %v2358
      %v2479 = vpack.c.b16 %v2367, %v2359
      %v2480 = vpack.c.b16 %v2368, %v2360
      %v2481 = vpack.c.b16 %v2369, %v2361
      %v2482 = vpack.c.b16 %v2370, %v2362
      %v2483 = vpack.c.b16 %v2371, %v2363
      %v2484 = vpack.c.b16 %v2380, %v2372
      %v2485 = vpack.c.b16 %v2381, %v2373
      %v2486 = vpack.c.b16 %v2382, %v2374
      %v2487 = vpack.c.b16 %v2383, %v2375
      %v2488 = vpack.c.b16 %v2384, %v2376
      %v2489 = vpack.c.b16 %v2385, %v2377
      %v2490 = vpack.c.b16 %v2386, %v2378
      %v2491 = vpack.c.b16 %v2387, %v2379
      %v2492 = vpack.c.b16 %v2396, %v2388
      %v2493 = vpack.c.b16 %v2397, %v2389
      %v2494 = vpack.c.b16 %v2398, %v2390
      %v2495 = vpack.c.b16 %v2399, %v2391
      %v2496 = vpack.c.b16 %v2400, %v2392
      %v2497 = vpack.c.b16 %v2401, %v2393
      %v2498 = vpack.c.b16 %v2402, %v2394
      %v2499 = vpack.c.b16 %v2403, %v2395
      %v2500 = vpack.c.b16 %v2412, %v2404
      %v2501 = vpack.c.b16 %v2413, %v2405
      %v2502 = vpack.c.b16 %v2414, %v2406
      %v2503 = vpack.c.b16 %v2415, %v2407
      %v2504 = vpack.c.b16 %v2416, %v2408
      %v2505 = vpack.c.b16 %v2417, %v2409
      %v2506 = vpack.c.b16 %v2418, %v2410
      %v2507 = vpack.c.b16 %v2419, %v2411
      %v2508 = vpack.c.b16 %v2428, %v2420
      %v2509 = vpack.c.b16 %v2429, %v2421
      %v2510 = vpack.c.b16 %v2430, %v2422
      %v2511 = vpack.c.b16 %v2431, %v2423
      %v2512 = vpack.c.b16 %v2432, %v2424
      %v2513 = vpack.c.b16 %v2433, %v2425
      %v2514 = vpack.c.b16 %v2434, %v2426
      %v2515 = vpack.c.b16 %v2435, %v2427
      %v2516 = vpack.c.b16 %v2444, %v2436
      %v2517 = vpack.c.b16 %v2445, %v2437
      %v2518 = vpack.c.b16 %v2446, %v2438
      %v2519 = vpack.c.b16 %v2447, %v2439
      %v2520 = vpack.c.b16 %v2448, %v2440
      %v2521 = vpack.c.b16 %v2449, %v2441
      %v2522 = vpack.c.b16 %v2450, %v2442
      %v2523 = vpack.c.b16 %v2451, %v2443
      %v2524 = vpack.c.b16 %v2460, %v2452
      %v2525 = vpack.c.b16 %v2461, %v2453
      %v2526 = vpack.c.b16 %v2462, %v2454
      %v2527 = vpack.c.b16 %v2463, %v2455
      %v2528 = vpack.c.b16 %v2464, %v2456
      %v2529 = vpack.c.b16 %v2465, %v2457
      %v2530 = vpack.c.b16 %v2466, %v2458
      %v2531 = vpack.c.b16 %v2467, %v2459
      %2596 = vmatprep.subr.bf16.mxu0 %v2469
      %2597 = vmatpush1.bf16.msra.mxu0 %v2468
      %2598 = vmatprep.subr.bf16.mxu0 %v2477
      %2599 = vmatpush1.bf16.msra.mxu0 %v2476
      %2600 = vmatprep.subr.bf16.mxu0 %v2485
      %2601 = vmatpush1.bf16.msra.mxu0 %v2484
      %2602 = vmatprep.subr.bf16.mxu0 %v2493
      %2603 = vmatpush1.bf16.msra.mxu0 %v2492
      %2604 = vmatprep.subr.bf16.mxu0 %v2501
      %2605 = vmatpush1.bf16.msra.mxu0 %v2500
      %2606 = vmatprep.subr.bf16.mxu0 %v2509
      %2607 = vmatpush1.bf16.msra.mxu0 %v2508
      %2608 = vmatprep.subr.bf16.mxu0 %v2517
      %2609 = vmatpush1.bf16.msra.mxu0 %v2516
      %2610 = vmatprep.subr.bf16.mxu0 %v2525
      %2611 = vmatpush1.bf16.msra.mxu0 %v2524
      %2612 = vmatprep.subr.bf16.mxu0 0
      %2613 = vmatpush1.bf16.msra.mxu0 0
      %2614 = vmatprep.subr.bf16.mxu0 0
      %2615 = vmatpush1.bf16.msra.mxu0 0
      %2616 = vmatprep.subr.bf16.mxu0 0
      %2617 = vmatpush1.bf16.msra.mxu0 0
      %2618 = vmatprep.subr.bf16.mxu0 0
      %2619 = vmatpush1.bf16.msra.mxu0 0
      %2620 = vmatprep.subr.bf16.mxu0 0
      %2621 = vmatpush1.bf16.msra.mxu0 0
      %2622 = vmatprep.subr.bf16.mxu0 0
      %2623 = vmatpush1.bf16.msra.mxu0 0
      %2624 = vmatprep.subr.bf16.mxu0 0
      %2625 = vmatpush1.bf16.msra.mxu0 0
      %2626 = vmatprep.subr.bf16.mxu0 0
      %2627 = vmatpush1.bf16.msra.mxu0 0
      %2628 = vmatprep.mubr.bf16.mxu0 0
      %2629 = vmatmul.mubr.bf16.gmra.mrb[0].mxu0 %v2166
      %v2630 = vpop.f32.mrb[0].mxu0
      %v2631 = vadd.f32 %v2239, %v2630
      %v2632 = vpop.f32.mrb[0].mxu0
      %v2633 = vadd.f32 %v2243, %v2632
      %v2634 = vpop.f32.mrb[0].mxu0
      %v2635 = vpop.f32.mrb[0].mxu0
      %2636 = vdwg.mxu0
      %2637 = vmatprep.subr.bf16.mxu0 %v2471
      %2638 = vmatpush1.bf16.msra.mxu0 %v2470
      %2639 = vmatprep.subr.bf16.mxu0 %v2479
      %2640 = vmatpush1.bf16.msra.mxu0 %v2478
      %2641 = vmatprep.subr.bf16.mxu0 %v2487
      %2642 = vmatpush1.bf16.msra.mxu0 %v2486
      %2643 = vmatprep.subr.bf16.mxu0 %v2495
      %2644 = vmatpush1.bf16.msra.mxu0 %v2494
      %2645 = vmatprep.subr.bf16.mxu0 %v2503
      %2646 = vmatpush1.bf16.msra.mxu0 %v2502
      %2647 = vmatprep.subr.bf16.mxu0 %v2511
      %2648 = vmatpush1.bf16.msra.mxu0 %v2510
      %2649 = vmatprep.subr.bf16.mxu0 %v2519
      %2650 = vmatpush1.bf16.msra.mxu0 %v2518
      %2651 = vmatprep.subr.bf16.mxu0 %v2527
      %2652 = vmatpush1.bf16.msra.mxu0 %v2526
      %2653 = vmatprep.subr.bf16.mxu0 0
      %2654 = vmatpush1.bf16.msra.mxu0 0
      %2655 = vmatprep.subr.bf16.mxu0 0
      %2656 = vmatpush1.bf16.msra.mxu0 0
      %2657 = vmatprep.subr.bf16.mxu0 0
      %2658 = vmatpush1.bf16.msra.mxu0 0
      %2659 = vmatprep.subr.bf16.mxu0 0
      %2660 = vmatpush1.bf16.msra.mxu0 0
      %2661 = vmatprep.subr.bf16.mxu0 0
      %2662 = vmatpush1.bf16.msra.mxu0 0
      %2663 = vmatprep.subr.bf16.mxu0 0
      %2664 = vmatpush1.bf16.msra.mxu0 0
      %2665 = vmatprep.subr.bf16.mxu0 0
      %2666 = vmatpush1.bf16.msra.mxu0 0
      %2667 = vmatprep.subr.bf16.mxu0 0
      %2668 = vmatpush1.bf16.msra.mxu0 0
      %2669 = vmatprep.mubr.bf16.mxu0 0
      %2670 = vmatmul.mubr.bf16.gmra.mrb[0].mxu0 %v2166
      %v2671 = vpop.f32.mrb[0].mxu0
      %v2672 = vadd.f32 %v2247, %v2671
      %v2673 = vpop.f32.mrb[0].mxu0
      %v2674 = vadd.f32 %v2251, %v2673
      %v2675 = vpop.f32.mrb[0].mxu0
      %v2676 = vpop.f32.mrb[0].mxu0
      %2677 = vdwg.mxu0
      %2678 = vmatprep.subr.bf16.mxu0 %v2473
      %2679 = vmatpush1.bf16.msra.mxu0 %v2472
      %2680 = vmatprep.subr.bf16.mxu0 %v2481
      %2681 = vmatpush1.bf16.msra.mxu0 %v2480
      %2682 = vmatprep.subr.bf16.mxu0 %v2489
      %2683 = vmatpush1.bf16.msra.mxu0 %v2488
      %2684 = vmatprep.subr.bf16.mxu0 %v2497
      %2685 = vmatpush1.bf16.msra.mxu0 %v2496
      %2686 = vmatprep.subr.bf16.mxu0 %v2505
      %2687 = vmatpush1.bf16.msra.mxu0 %v2504
      %2688 = vmatprep.subr.bf16.mxu0 %v2513
      %2689 = vmatpush1.bf16.msra.mxu0 %v2512
      %2690 = vmatprep.subr.bf16.mxu0 %v2521
      %2691 = vmatpush1.bf16.msra.mxu0 %v2520
      %2692 = vmatprep.subr.bf16.mxu0 %v2529
      %2693 = vmatpush1.bf16.msra.mxu0 %v2528
      %2694 = vmatprep.subr.bf16.mxu0 0
      %2695 = vmatpush1.bf16.msra.mxu0 0
      %2696 = vmatprep.subr.bf16.mxu0 0
      %2697 = vmatpush1.bf16.msra.mxu0 0
      %2698 = vmatprep.subr.bf16.mxu0 0
      %2699 = vmatpush1.bf16.msra.mxu0 0
      %2700 = vmatprep.subr.bf16.mxu0 0
      %2701 = vmatpush1.bf16.msra.mxu0 0
      %2702 = vmatprep.subr.bf16.mxu0 0
      %2703 = vmatpush1.bf16.msra.mxu0 0
      %2704 = vmatprep.subr.bf16.mxu0 0
      %2705 = vmatpush1.bf16.msra.mxu0 0
      %2706 = vmatprep.subr.bf16.mxu0 0
      %2707 = vmatpush1.bf16.msra.mxu0 0
      %2708 = vmatprep.subr.bf16.mxu0 0
      %2709 = vmatpush1.bf16.msra.mxu0 0
      %2710 = vmatprep.mubr.bf16.mxu0 0
      %2711 = vmatmul.mubr.bf16.gmra.mrb[0].mxu0 %v2166
      %v2712 = vpop.f32.mrb[0].mxu0
      %v2713 = vadd.f32 %v2255, %v2712
      %v2714 = vpop.f32.mrb[0].mxu0
      %v2715 = vadd.f32 %v2259, %v2714
      %v2716 = vpop.f32.mrb[0].mxu0
      %v2717 = vpop.f32.mrb[0].mxu0
      %2718 = vdwg.mxu0
      %2719 = vmatprep.subr.bf16.mxu0 %v2475
      %2720 = vmatpush1.bf16.msra.mxu0 %v2474
      %2721 = vmatprep.subr.bf16.mxu0 %v2483
      %2722 = vmatpush1.bf16.msra.mxu0 %v2482
      %2723 = vmatprep.subr.bf16.mxu0 %v2491
      %2724 = vmatpush1.bf16.msra.mxu0 %v2490
      %2725 = vmatprep.subr.bf16.mxu0 %v2499
      %2726 = vmatpush1.bf16.msra.mxu0 %v2498
      %2727 = vmatprep.subr.bf16.mxu0 %v2507
      %2728 = vmatpush1.bf16.msra.mxu0 %v2506
      %2729 = vmatprep.subr.bf16.mxu0 %v2515
      %2730 = vmatpush1.bf16.msra.mxu0 %v2514
      %2731 = vmatprep.subr.bf16.mxu0 %v2523
      %2732 = vmatpush1.bf16.msra.mxu0 %v2522
      %2733 = vmatprep.subr.bf16.mxu0 %v2531
      %2734 = vmatpush1.bf16.msra.mxu0 %v2530
      %2735 = vmatprep.subr.bf16.mxu0 0
      %2736 = vmatpush1.bf16.msra.mxu0 0
      %2737 = vmatprep.subr.bf16.mxu0 0
      %2738 = vmatpush1.bf16.msra.mxu0 0
      %2739 = vmatprep.subr.bf16.mxu0 0
      %2740 = vmatpush1.bf16.msra.mxu0 0
      %2741 = vmatprep.subr.bf16.mxu0 0
      %2742 = vmatpush1.bf16.msra.mxu0 0
      %2743 = vmatprep.subr.bf16.mxu0 0
      %2744 = vmatpush1.bf16.msra.mxu0 0
      %2745 = vmatprep.subr.bf16.mxu0 0
      %2746 = vmatpush1.bf16.msra.mxu0 0
      %2747 = vmatprep.subr.bf16.mxu0 0
      %2748 = vmatpush1.bf16.msra.mxu0 0
      %2749 = vmatprep.subr.bf16.mxu0 0
      %2750 = vmatpush1.bf16.msra.mxu0 0
      %2751 = vmatprep.mubr.bf16.mxu0 0
      %2752 = vmatmul.mubr.bf16.gmra.mrb[0].mxu0 %v2166
      %v2753 = vpop.f32.mrb[0].mxu0
      %v2754 = vadd.f32 %v2263, %v2753
      %v2755 = vpop.f32.mrb[0].mxu0
      %v2756 = vadd.f32 %v2267, %v2755
      %v2757 = vpop.f32.mrb[0].mxu0
      %v2758 = vpop.f32.mrb[0].mxu0
      %2759 = vdwg.mxu0
      %v2760 = vpack.c.bf16 %v2631, %v2631
      %v2761 = vpack.c.bf16 %v2633, %v2633
      %v2762 = vpack.c.bf16 %v2672, %v2672
      %v2763 = vpack.c.bf16 %v2674, %v2674
      %v2764 = vpack.c.bf16 %v2713, %v2713
      %v2765 = vpack.c.bf16 %v2715, %v2715
      %v2766 = vpack.c.bf16 %v2754, %v2754
      %v2767 = vpack.c.bf16 %v2756, %v2756
      %v2768 = vmax.bf16 %v2760, 0
      %v2769 = vmax.bf16 %v2761, 0
      %v2770 = vmax.bf16 %v2762, 0
      %v2771 = vmax.bf16 %v2763, 0
      %v2772 = vmax.bf16 %v2764, 0
      %v2773 = vmax.bf16 %v2765, 0
      %v2774 = vmax.bf16 %v2766, 0
      %v2775 = vmax.bf16 %v2767, 0
      %s2776 = smul.addr %s833, 4
      %s2777 = scalar_lea.vmem %s12, %s2776
      %v2778 = vld [vmem:[%s2777] sm:$0xf]
      %v2779 = vld [vmem:[%s2777 + $0x4] sm:$0xf]
      %v2780 = vld [vmem:[%s2777 + $0x8] sm:$0xf]
      %v2781 = vld [vmem:[%s2777 + $0xc] sm:$0xf]
      %v2782 = vld [vmem:[%s2777 + $0x10] sm:$0xf]
      %v2783 = vld [vmem:[%s2777 + $0x14] sm:$0xf]
      %v2784 = vld [vmem:[%s2777 + $0x18] sm:$0xf]
      %v2785 = vld [vmem:[%s2777 + $0x1c] sm:$0xf]
      %v2786 = vld [vmem:[%s2777 + $0x20] sm:$0xf]
      %v2787 = vld [vmem:[%s2777 + $0x24] sm:$0xf]
      %v2788 = vld [vmem:[%s2777 + $0x28] sm:$0xf]
      %v2789 = vld [vmem:[%s2777 + $0x2c] sm:$0xf]
      %v2790 = vld [vmem:[%s2777 + $0x30] sm:$0xf]
      %v2791 = vld [vmem:[%s2777 + $0x34] sm:$0xf]
      %v2792 = vld [vmem:[%s2777 + $0x38] sm:$0xf]
      %v2793 = vld [vmem:[%s2777 + $0x3c] sm:$0xf]
      %v2794 = vld [vmem:[%s2777 + $0x40] sm:$0xf]
      %v2795 = vld [vmem:[%s2777 + $0x44] sm:$0xf]
      %v2796 = vld [vmem:[%s2777 + $0x48] sm:$0xf]
      %v2797 = vld [vmem:[%s2777 + $0x4c] sm:$0xf]
      %v2798 = vld [vmem:[%s2777 + $0x50] sm:$0xf]
      %v2799 = vld [vmem:[%s2777 + $0x54] sm:$0xf]
      %v2800 = vld [vmem:[%s2777 + $0x58] sm:$0xf]
      %v2801 = vld [vmem:[%s2777 + $0x5c] sm:$0xf]
      %v2802 = vld [vmem:[%s2777 + $0x60] sm:$0xf]
      %v2803 = vld [vmem:[%s2777 + $0x64] sm:$0xf]
      %v2804 = vld [vmem:[%s2777 + $0x68] sm:$0xf]
      %v2805 = vld [vmem:[%s2777 + $0x6c] sm:$0xf]
      %v2806 = vld [vmem:[%s2777 + $0x70] sm:$0xf]
      %v2807 = vld [vmem:[%s2777 + $0x74] sm:$0xf]
      %v2808 = vld [vmem:[%s2777 + $0x78] sm:$0xf]
      %v2809 = vld [vmem:[%s2777 + $0x7c] sm:$0xf]
      %v2810 = vld [vmem:[%s2777 + $0x80] sm:$0xf]
      %v2811 = vld [vmem:[%s2777 + $0x84] sm:$0xf]
      %v2812 = vld [vmem:[%s2777 + $0x88] sm:$0xf]
      %v2813 = vld [vmem:[%s2777 + $0x8c] sm:$0xf]
      %v2814 = vld [vmem:[%s2777 + $0x90] sm:$0xf]
      %v2815 = vld [vmem:[%s2777 + $0x94] sm:$0xf]
      %v2816 = vld [vmem:[%s2777 + $0x98] sm:$0xf]
      %v2817 = vld [vmem:[%s2777 + $0x9c] sm:$0xf]
      %v2818 = vld [vmem:[%s2777 + $0xa0] sm:$0xf]
      %v2819 = vld [vmem:[%s2777 + $0xa4] sm:$0xf]
      %v2820 = vld [vmem:[%s2777 + $0xa8] sm:$0xf]
      %v2821 = vld [vmem:[%s2777 + $0xac] sm:$0xf]
      %v2822 = vld [vmem:[%s2777 + $0xb0] sm:$0xf]
      %v2823 = vld [vmem:[%s2777 + $0xb4] sm:$0xf]
      %v2824 = vld [vmem:[%s2777 + $0xb8] sm:$0xf]
      %v2825 = vld [vmem:[%s2777 + $0xbc] sm:$0xf]
      %v2826 = vld [vmem:[%s2777 + $0xc0] sm:$0xf]
      %v2827 = vld [vmem:[%s2777 + $0xc4] sm:$0xf]
      %v2828 = vld [vmem:[%s2777 + $0xc8] sm:$0xf]
      %v2829 = vld [vmem:[%s2777 + $0xcc] sm:$0xf]
      %v2830 = vld [vmem:[%s2777 + $0xd0] sm:$0xf]
      %v2831 = vld [vmem:[%s2777 + $0xd4] sm:$0xf]
      %v2832 = vld [vmem:[%s2777 + $0xd8] sm:$0xf]
      %v2833 = vld [vmem:[%s2777 + $0xdc] sm:$0xf]
      %v2834 = vld [vmem:[%s2777 + $0xe0] sm:$0xf]
      %v2835 = vld [vmem:[%s2777 + $0xe4] sm:$0xf]
      %v2836 = vld [vmem:[%s2777 + $0xe8] sm:$0xf]
      %v2837 = vld [vmem:[%s2777 + $0xec] sm:$0xf]
      %v2838 = vld [vmem:[%s2777 + $0xf0] sm:$0xf]
      %v2839 = vld [vmem:[%s2777 + $0xf4] sm:$0xf]
      %v2840 = vld [vmem:[%s2777 + $0xf8] sm:$0xf]
      %v2841 = vld [vmem:[%s2777 + $0xfc] sm:$0xf]
      %v2842 = vld [vmem:[%s2777 + $0x100] sm:$0xf]
      %v2843 = vld [vmem:[%s2777 + $0x104] sm:$0xf]
      %v2844 = vld [vmem:[%s2777 + $0x108] sm:$0xf]
      %v2845 = vld [vmem:[%s2777 + $0x10c] sm:$0xf]
      %v2846 = vld [vmem:[%s2777 + $0x110] sm:$0xf]
      %v2847 = vld [vmem:[%s2777 + $0x114] sm:$0xf]
      %v2848 = vld [vmem:[%s2777 + $0x118] sm:$0xf]
      %v2849 = vld [vmem:[%s2777 + $0x11c] sm:$0xf]
      %v2850 = vld [vmem:[%s2777 + $0x120] sm:$0xf]
      %v2851 = vld [vmem:[%s2777 + $0x124] sm:$0xf]
      %v2852 = vld [vmem:[%s2777 + $0x128] sm:$0xf]
      %v2853 = vld [vmem:[%s2777 + $0x12c] sm:$0xf]
      %v2854 = vld [vmem:[%s2777 + $0x130] sm:$0xf]
      %v2855 = vld [vmem:[%s2777 + $0x134] sm:$0xf]
      %v2856 = vld [vmem:[%s2777 + $0x138] sm:$0xf]
      %v2857 = vld [vmem:[%s2777 + $0x13c] sm:$0xf]
      %v2858 = vld [vmem:[%s2777 + $0x140] sm:$0xf]
      %v2859 = vld [vmem:[%s2777 + $0x144] sm:$0xf]
      %v2860 = vld [vmem:[%s2777 + $0x148] sm:$0xf]
      %v2861 = vld [vmem:[%s2777 + $0x14c] sm:$0xf]
      %v2862 = vld [vmem:[%s2777 + $0x150] sm:$0xf]
      %v2863 = vld [vmem:[%s2777 + $0x154] sm:$0xf]
      %v2864 = vld [vmem:[%s2777 + $0x158] sm:$0xf]
      %v2865 = vld [vmem:[%s2777 + $0x15c] sm:$0xf]
      %v2866 = vld [vmem:[%s2777 + $0x160] sm:$0xf]
      %v2867 = vld [vmem:[%s2777 + $0x164] sm:$0xf]
      %v2868 = vld [vmem:[%s2777 + $0x168] sm:$0xf]
      %v2869 = vld [vmem:[%s2777 + $0x16c] sm:$0xf]
      %v2870 = vld [vmem:[%s2777 + $0x170] sm:$0xf]
      %v2871 = vld [vmem:[%s2777 + $0x174] sm:$0xf]
      %v2872 = vld [vmem:[%s2777 + $0x178] sm:$0xf]
      %v2873 = vld [vmem:[%s2777 + $0x17c] sm:$0xf]
      %v2874 = vld [vmem:[%s2777 + $0x180] sm:$0xf]
      %v2875 = vld [vmem:[%s2777 + $0x184] sm:$0xf]
      %v2876 = vld [vmem:[%s2777 + $0x188] sm:$0xf]
      %v2877 = vld [vmem:[%s2777 + $0x18c] sm:$0xf]
      %v2878 = vld [vmem:[%s2777 + $0x190] sm:$0xf]
      %v2879 = vld [vmem:[%s2777 + $0x194] sm:$0xf]
      %v2880 = vld [vmem:[%s2777 + $0x198] sm:$0xf]
      %v2881 = vld [vmem:[%s2777 + $0x19c] sm:$0xf]
      %v2882 = vld [vmem:[%s2777 + $0x1a0] sm:$0xf]
      %v2883 = vld [vmem:[%s2777 + $0x1a4] sm:$0xf]
      %v2884 = vld [vmem:[%s2777 + $0x1a8] sm:$0xf]
      %v2885 = vld [vmem:[%s2777 + $0x1ac] sm:$0xf]
      %v2886 = vld [vmem:[%s2777 + $0x1b0] sm:$0xf]
      %v2887 = vld [vmem:[%s2777 + $0x1b4] sm:$0xf]
      %v2888 = vld [vmem:[%s2777 + $0x1b8] sm:$0xf]
      %v2889 = vld [vmem:[%s2777 + $0x1bc] sm:$0xf]
      %v2890 = vld [vmem:[%s2777 + $0x1c0] sm:$0xf]
      %v2891 = vld [vmem:[%s2777 + $0x1c4] sm:$0xf]
      %v2892 = vld [vmem:[%s2777 + $0x1c8] sm:$0xf]
      %v2893 = vld [vmem:[%s2777 + $0x1cc] sm:$0xf]
      %v2894 = vld [vmem:[%s2777 + $0x1d0] sm:$0xf]
      %v2895 = vld [vmem:[%s2777 + $0x1d4] sm:$0xf]
      %v2896 = vld [vmem:[%s2777 + $0x1d8] sm:$0xf]
      %v2897 = vld [vmem:[%s2777 + $0x1dc] sm:$0xf]
      %v2898 = vld [vmem:[%s2777 + $0x1e0] sm:$0xf]
      %v2899 = vld [vmem:[%s2777 + $0x1e4] sm:$0xf]
      %v2900 = vld [vmem:[%s2777 + $0x1e8] sm:$0xf]
      %v2901 = vld [vmem:[%s2777 + $0x1ec] sm:$0xf]
      %v2902 = vld [vmem:[%s2777 + $0x1f0] sm:$0xf]
      %v2903 = vld [vmem:[%s2777 + $0x1f4] sm:$0xf]
      %v2904 = vld [vmem:[%s2777 + $0x1f8] sm:$0xf]
      %v2905 = vld [vmem:[%s2777 + $0x1fc] sm:$0xf]
      %s2906 = scalar_lea.vmem %s13, %s33
      %v2907 = vld [vmem:[%s2906] sm:$0x1]
      %v2909 = vlaneseq
      %v2910 = vshrl.u32 %v2909, 7
      %v2911 = vsub.s32 0, %v2910
      %v2912 = vrot.slane %v2907, %v2911
      %v3042 = vunpack.c.l.b16 %v2778
      %v3043 = vunpack.c.l.b16 %v2779
      %v3044 = vunpack.c.l.b16 %v2780
      %v3045 = vunpack.c.l.b16 %v2781
      %v3046 = vunpack.c.l.b16 %v2782
      %v3047 = vunpack.c.l.b16 %v2783
      %v3048 = vunpack.c.l.b16 %v2784
      %v3049 = vunpack.c.l.b16 %v2785
      %v3050 = vunpack.c.l.b16 %v2786
      %v3051 = vunpack.c.l.b16 %v2787
      %v3052 = vunpack.c.l.b16 %v2788
      %v3053 = vunpack.c.l.b16 %v2789
      %v3054 = vunpack.c.l.b16 %v2790
      %v3055 = vunpack.c.l.b16 %v2791
      %v3056 = vunpack.c.l.b16 %v2792
      %v3057 = vunpack.c.l.b16 %v2793
      %v3058 = vunpack.c.l.b16 %v2794
      %v3059 = vunpack.c.l.b16 %v2795
      %v3060 = vunpack.c.l.b16 %v2796
      %v3061 = vunpack.c.l.b16 %v2797
      %v3062 = vunpack.c.l.b16 %v2798
      %v3063 = vunpack.c.l.b16 %v2799
      %v3064 = vunpack.c.l.b16 %v2800
      %v3065 = vunpack.c.l.b16 %v2801
      %v3066 = vunpack.c.l.b16 %v2802
      %v3067 = vunpack.c.l.b16 %v2803
      %v3068 = vunpack.c.l.b16 %v2804
      %v3069 = vunpack.c.l.b16 %v2805
      %v3070 = vunpack.c.l.b16 %v2806
      %v3071 = vunpack.c.l.b16 %v2807
      %v3072 = vunpack.c.l.b16 %v2808
      %v3073 = vunpack.c.l.b16 %v2809
      %v3074 = vunpack.c.l.b16 %v2810
      %v3075 = vunpack.c.l.b16 %v2811
      %v3076 = vunpack.c.l.b16 %v2812
      %v3077 = vunpack.c.l.b16 %v2813
      %v3078 = vunpack.c.l.b16 %v2814
      %v3079 = vunpack.c.l.b16 %v2815
      %v3080 = vunpack.c.l.b16 %v2816
      %v3081 = vunpack.c.l.b16 %v2817
      %v3082 = vunpack.c.l.b16 %v2818
      %v3083 = vunpack.c.l.b16 %v2819
      %v3084 = vunpack.c.l.b16 %v2820
      %v3085 = vunpack.c.l.b16 %v2821
      %v3086 = vunpack.c.l.b16 %v2822
      %v3087 = vunpack.c.l.b16 %v2823
      %v3088 = vunpack.c.l.b16 %v2824
      %v3089 = vunpack.c.l.b16 %v2825
      %v3090 = vunpack.c.l.b16 %v2826
      %v3091 = vunpack.c.l.b16 %v2827
      %v3092 = vunpack.c.l.b16 %v2828
      %v3093 = vunpack.c.l.b16 %v2829
      %v3094 = vunpack.c.l.b16 %v2830
      %v3095 = vunpack.c.l.b16 %v2831
      %v3096 = vunpack.c.l.b16 %v2832
      %v3097 = vunpack.c.l.b16 %v2833
      %v3098 = vunpack.c.l.b16 %v2834
      %v3099 = vunpack.c.l.b16 %v2835
      %v3100 = vunpack.c.l.b16 %v2836
      %v3101 = vunpack.c.l.b16 %v2837
      %v3102 = vunpack.c.l.b16 %v2838
      %v3103 = vunpack.c.l.b16 %v2839
      %v3104 = vunpack.c.l.b16 %v2840
      %v3105 = vunpack.c.l.b16 %v2841
      %v3106 = vunpack.c.l.b16 %v2842
      %v3107 = vunpack.c.l.b16 %v2843
      %v3108 = vunpack.c.l.b16 %v2844
      %v3109 = vunpack.c.l.b16 %v2845
      %v3110 = vunpack.c.l.b16 %v2846
      %v3111 = vunpack.c.l.b16 %v2847
      %v3112 = vunpack.c.l.b16 %v2848
      %v3113 = vunpack.c.l.b16 %v2849
      %v3114 = vunpack.c.l.b16 %v2850
      %v3115 = vunpack.c.l.b16 %v2851
      %v3116 = vunpack.c.l.b16 %v2852
      %v3117 = vunpack.c.l.b16 %v2853
      %v3118 = vunpack.c.l.b16 %v2854
      %v3119 = vunpack.c.l.b16 %v2855
      %v3120 = vunpack.c.l.b16 %v2856
      %v3121 = vunpack.c.l.b16 %v2857
      %v3122 = vunpack.c.l.b16 %v2858
      %v3123 = vunpack.c.l.b16 %v2859
      %v3124 = vunpack.c.l.b16 %v2860
      %v3125 = vunpack.c.l.b16 %v2861
      %v3126 = vunpack.c.l.b16 %v2862
      %v3127 = vunpack.c.l.b16 %v2863
      %v3128 = vunpack.c.l.b16 %v2864
      %v3129 = vunpack.c.l.b16 %v2865
      %v3130 = vunpack.c.l.b16 %v2866
      %v3131 = vunpack.c.l.b16 %v2867
      %v3132 = vunpack.c.l.b16 %v2868
      %v3133 = vunpack.c.l.b16 %v2869
      %v3134 = vunpack.c.l.b16 %v2870
      %v3135 = vunpack.c.l.b16 %v2871
      %v3136 = vunpack.c.l.b16 %v2872
      %v3137 = vunpack.c.l.b16 %v2873
      %v3138 = vunpack.c.l.b16 %v2874
      %v3139 = vunpack.c.l.b16 %v2875
      %v3140 = vunpack.c.l.b16 %v2876
      %v3141 = vunpack.c.l.b16 %v2877
      %v3142 = vunpack.c.l.b16 %v2878
      %v3143 = vunpack.c.l.b16 %v2879
      %v3144 = vunpack.c.l.b16 %v2880
      %v3145 = vunpack.c.l.b16 %v2881
      %v3146 = vunpack.c.l.b16 %v2882
      %v3147 = vunpack.c.l.b16 %v2883
      %v3148 = vunpack.c.l.b16 %v2884
      %v3149 = vunpack.c.l.b16 %v2885
      %v3150 = vunpack.c.l.b16 %v2886
      %v3151 = vunpack.c.l.b16 %v2887
      %v3152 = vunpack.c.l.b16 %v2888
      %v3153 = vunpack.c.l.b16 %v2889
      %v3154 = vunpack.c.l.b16 %v2890
      %v3155 = vunpack.c.l.b16 %v2891
      %v3156 = vunpack.c.l.b16 %v2892
      %v3157 = vunpack.c.l.b16 %v2893
      %v3158 = vunpack.c.l.b16 %v2894
      %v3159 = vunpack.c.l.b16 %v2895
      %v3160 = vunpack.c.l.b16 %v2896
      %v3161 = vunpack.c.l.b16 %v2897
      %v3162 = vunpack.c.l.b16 %v2898
      %v3163 = vunpack.c.l.b16 %v2899
      %v3164 = vunpack.c.l.b16 %v2900
      %v3165 = vunpack.c.l.b16 %v2901
      %v3166 = vunpack.c.l.b16 %v2902
      %v3167 = vunpack.c.l.b16 %v2903
      %v3168 = vunpack.c.l.b16 %v2904
      %v3169 = vunpack.c.l.b16 %v2905
      %v3170 = vpack.c.b16 %v3043, %v3042
      %v3171 = vpack.c.b16 %v3045, %v3044
      %v3172 = vpack.c.b16 %v3047, %v3046
      %v3173 = vpack.c.b16 %v3049, %v3048
      %v3174 = vpack.c.b16 %v3051, %v3050
      %v3175 = vpack.c.b16 %v3053, %v3052
      %v3176 = vpack.c.b16 %v3055, %v3054
      %v3177 = vpack.c.b16 %v3057, %v3056
      %v3178 = vpack.c.b16 %v3059, %v3058
      %v3179 = vpack.c.b16 %v3061, %v3060
      %v3180 = vpack.c.b16 %v3063, %v3062
      %v3181 = vpack.c.b16 %v3065, %v3064
      %v3182 = vpack.c.b16 %v3067, %v3066
      %v3183 = vpack.c.b16 %v3069, %v3068
      %v3184 = vpack.c.b16 %v3071, %v3070
      %v3185 = vpack.c.b16 %v3073, %v3072
      %v3186 = vpack.c.b16 %v3075, %v3074
      %v3187 = vpack.c.b16 %v3077, %v3076
      %v3188 = vpack.c.b16 %v3079, %v3078
      %v3189 = vpack.c.b16 %v3081, %v3080
      %v3190 = vpack.c.b16 %v3083, %v3082
      %v3191 = vpack.c.b16 %v3085, %v3084
      %v3192 = vpack.c.b16 %v3087, %v3086
      %v3193 = vpack.c.b16 %v3089, %v3088
      %v3194 = vpack.c.b16 %v3091, %v3090
      %v3195 = vpack.c.b16 %v3093, %v3092
      %v3196 = vpack.c.b16 %v3095, %v3094
      %v3197 = vpack.c.b16 %v3097, %v3096
      %v3198 = vpack.c.b16 %v3099, %v3098
      %v3199 = vpack.c.b16 %v3101, %v3100
      %v3200 = vpack.c.b16 %v3103, %v3102
      %v3201 = vpack.c.b16 %v3105, %v3104
      %v3202 = vpack.c.b16 %v3107, %v3106
      %v3203 = vpack.c.b16 %v3109, %v3108
      %v3204 = vpack.c.b16 %v3111, %v3110
      %v3205 = vpack.c.b16 %v3113, %v3112
      %v3206 = vpack.c.b16 %v3115, %v3114
      %v3207 = vpack.c.b16 %v3117, %v3116
      %v3208 = vpack.c.b16 %v3119, %v3118
      %v3209 = vpack.c.b16 %v3121, %v3120
      %v3210 = vpack.c.b16 %v3123, %v3122
      %v3211 = vpack.c.b16 %v3125, %v3124
      %v3212 = vpack.c.b16 %v3127, %v3126
      %v3213 = vpack.c.b16 %v3129, %v3128
      %v3214 = vpack.c.b16 %v3131, %v3130
      %v3215 = vpack.c.b16 %v3133, %v3132
      %v3216 = vpack.c.b16 %v3135, %v3134
      %v3217 = vpack.c.b16 %v3137, %v3136
      %v3218 = vpack.c.b16 %v3139, %v3138
      %v3219 = vpack.c.b16 %v3141, %v3140
      %v3220 = vpack.c.b16 %v3143, %v3142
      %v3221 = vpack.c.b16 %v3145, %v3144
      %v3222 = vpack.c.b16 %v3147, %v3146
      %v3223 = vpack.c.b16 %v3149, %v3148
      %v3224 = vpack.c.b16 %v3151, %v3150
      %v3225 = vpack.c.b16 %v3153, %v3152
      %v3226 = vpack.c.b16 %v3155, %v3154
      %v3227 = vpack.c.b16 %v3157, %v3156
      %v3228 = vpack.c.b16 %v3159, %v3158
      %v3229 = vpack.c.b16 %v3161, %v3160
      %v3230 = vpack.c.b16 %v3163, %v3162
      %v3231 = vpack.c.b16 %v3165, %v3164
      %v3232 = vpack.c.b16 %v3167, %v3166
      %v3233 = vpack.c.b16 %v3169, %v3168
      %3298 = vmatprep.subr.bf16.mxu0 0
      %3299 = vmatpush1.bf16.msra.mxu0 %v3170
      %3300 = vmatprep.subr.bf16.mxu0 0
      %3301 = vmatpush1.bf16.msra.mxu0 %v3171
      %3302 = vmatprep.subr.bf16.mxu0 0
      %3303 = vmatpush1.bf16.msra.mxu0 %v3172
      %3304 = vmatprep.subr.bf16.mxu0 0
      %3305 = vmatpush1.bf16.msra.mxu0 %v3173
      %3306 = vmatprep.subr.bf16.mxu0 0
      %3307 = vmatpush1.bf16.msra.mxu0 %v3174
      %3308 = vmatprep.subr.bf16.mxu0 0
      %3309 = vmatpush1.bf16.msra.mxu0 %v3175
      %3310 = vmatprep.subr.bf16.mxu0 0
      %3311 = vmatpush1.bf16.msra.mxu0 %v3176
      %3312 = vmatprep.subr.bf16.mxu0 0
      %3313 = vmatpush1.bf16.msra.mxu0 %v3177
      %3314 = vmatprep.subr.bf16.mxu0 0
      %3315 = vmatpush1.bf16.msra.mxu0 %v3178
      %3316 = vmatprep.subr.bf16.mxu0 0
      %3317 = vmatpush1.bf16.msra.mxu0 %v3179
      %3318 = vmatprep.subr.bf16.mxu0 0
      %3319 = vmatpush1.bf16.msra.mxu0 %v3180
      %3320 = vmatprep.subr.bf16.mxu0 0
      %3321 = vmatpush1.bf16.msra.mxu0 %v3181
      %3322 = vmatprep.subr.bf16.mxu0 0
      %3323 = vmatpush1.bf16.msra.mxu0 %v3182
      %3324 = vmatprep.subr.bf16.mxu0 0
      %3325 = vmatpush1.bf16.msra.mxu0 %v3183
      %3326 = vmatprep.subr.bf16.mxu0 0
      %3327 = vmatpush1.bf16.msra.mxu0 %v3184
      %3328 = vmatprep.subr.bf16.mxu0 0
      %3329 = vmatpush1.bf16.msra.mxu0 %v3185
      %3330 = vmatprep.mubr.bf16.mxu0 %v2769
      %3331 = vmatmul.mubr.bf16.gmra.mrb[0].mxu0 %v2768
      %v3332 = vpop.f32.mrb[0].mxu0
      %v3333 = vadd.f32 %v2912, %v3332
      %v3334 = vpop.f32.mrb[0].mxu0
      %v3335 = vpop.f32.mrb[0].mxu0
      %v3336 = vpop.f32.mrb[0].mxu0
      %3337 = vdwg.mxu0
      %3338 = vmatprep.subr.bf16.mxu0 0
      %3339 = vmatpush1.bf16.msra.mxu0 %v3186
      %3340 = vmatprep.subr.bf16.mxu0 0
      %3341 = vmatpush1.bf16.msra.mxu0 %v3187
      %3342 = vmatprep.subr.bf16.mxu0 0
      %3343 = vmatpush1.bf16.msra.mxu0 %v3188
      %3344 = vmatprep.subr.bf16.mxu0 0
      %3345 = vmatpush1.bf16.msra.mxu0 %v3189
      %3346 = vmatprep.subr.bf16.mxu0 0
      %3347 = vmatpush1.bf16.msra.mxu0 %v3190
      %3348 = vmatprep.subr.bf16.mxu0 0
      %3349 = vmatpush1.bf16.msra.mxu0 %v3191
      %3350 = vmatprep.subr.bf16.mxu0 0
      %3351 = vmatpush1.bf16.msra.mxu0 %v3192
      %3352 = vmatprep.subr.bf16.mxu0 0
      %3353 = vmatpush1.bf16.msra.mxu0 %v3193
      %3354 = vmatprep.subr.bf16.mxu0 0
      %3355 = vmatpush1.bf16.msra.mxu0 %v3194
      %3356 = vmatprep.subr.bf16.mxu0 0
      %3357 = vmatpush1.bf16.msra.mxu0 %v3195
      %3358 = vmatprep.subr.bf16.mxu0 0
      %3359 = vmatpush1.bf16.msra.mxu0 %v3196
      %3360 = vmatprep.subr.bf16.mxu0 0
      %3361 = vmatpush1.bf16.msra.mxu0 %v3197
      %3362 = vmatprep.subr.bf16.mxu0 0
      %3363 = vmatpush1.bf16.msra.mxu0 %v3198
      %3364 = vmatprep.subr.bf16.mxu0 0
      %3365 = vmatpush1.bf16.msra.mxu0 %v3199
      %3366 = vmatprep.subr.bf16.mxu0 0
      %3367 = vmatpush1.bf16.msra.mxu0 %v3200
      %3368 = vmatprep.subr.bf16.mxu0 0
      %3369 = vmatpush1.bf16.msra.mxu0 %v3201
      %3370 = vmatprep.mubr.bf16.mxu0 %v2771
      %3371 = vmatmul.mubr.bf16.gmra.mrb[0].mxu0 %v2770
      %v3372 = vpop.f32.mrb[0].mxu0
      %v3373 = vadd.f32 %v3333, %v3372
      %v3374 = vpop.f32.mrb[0].mxu0
      %v3375 = vpop.f32.mrb[0].mxu0
      %v3376 = vpop.f32.mrb[0].mxu0
      %3377 = vdwg.mxu0
      %3378 = vmatprep.subr.bf16.mxu0 0
      %3379 = vmatpush1.bf16.msra.mxu0 %v3202
      %3380 = vmatprep.subr.bf16.mxu0 0
      %3381 = vmatpush1.bf16.msra.mxu0 %v3203
      %3382 = vmatprep.subr.bf16.mxu0 0
      %3383 = vmatpush1.bf16.msra.mxu0 %v3204
      %3384 = vmatprep.subr.bf16.mxu0 0
      %3385 = vmatpush1.bf16.msra.mxu0 %v3205
      %3386 = vmatprep.subr.bf16.mxu0 0
      %3387 = vmatpush1.bf16.msra.mxu0 %v3206
      %3388 = vmatprep.subr.bf16.mxu0 0
      %3389 = vmatpush1.bf16.msra.mxu0 %v3207
      %3390 = vmatprep.subr.bf16.mxu0 0
      %3391 = vmatpush1.bf16.msra.mxu0 %v3208
      %3392 = vmatprep.subr.bf16.mxu0 0
      %3393 = vmatpush1.bf16.msra.mxu0 %v3209
      %3394 = vmatprep.subr.bf16.mxu0 0
      %3395 = vmatpush1.bf16.msra.mxu0 %v3210
      %3396 = vmatprep.subr.bf16.mxu0 0
      %3397 = vmatpush1.bf16.msra.mxu0 %v3211
      %3398 = vmatprep.subr.bf16.mxu0 0
      %3399 = vmatpush1.bf16.msra.mxu0 %v3212
      %3400 = vmatprep.subr.bf16.mxu0 0
      %3401 = vmatpush1.bf16.msra.mxu0 %v3213
      %3402 = vmatprep.subr.bf16.mxu0 0
      %3403 = vmatpush1.bf16.msra.mxu0 %v3214
      %3404 = vmatprep.subr.bf16.mxu0 0
      %3405 = vmatpush1.bf16.msra.mxu0 %v3215
      %3406 = vmatprep.subr.bf16.mxu0 0
      %3407 = vmatpush1.bf16.msra.mxu0 %v3216
      %3408 = vmatprep.subr.bf16.mxu0 0
      %3409 = vmatpush1.bf16.msra.mxu0 %v3217
      %3410 = vmatprep.mubr.bf16.mxu0 %v2773
      %3411 = vmatmul.mubr.bf16.gmra.mrb[0].mxu0 %v2772
      %v3412 = vpop.f32.mrb[0].mxu0
      %v3413 = vadd.f32 %v3373, %v3412
      %v3414 = vpop.f32.mrb[0].mxu0
      %v3415 = vpop.f32.mrb[0].mxu0
      %v3416 = vpop.f32.mrb[0].mxu0
      %3417 = vdwg.mxu0
      %3418 = vmatprep.subr.bf16.mxu0 0
      %3419 = vmatpush1.bf16.msra.mxu0 %v3218
      %3420 = vmatprep.subr.bf16.mxu0 0
      %3421 = vmatpush1.bf16.msra.mxu0 %v3219
      %3422 = vmatprep.subr.bf16.mxu0 0
      %3423 = vmatpush1.bf16.msra.mxu0 %v3220
      %3424 = vmatprep.subr.bf16.mxu0 0
      %3425 = vmatpush1.bf16.msra.mxu0 %v3221
      %3426 = vmatprep.subr.bf16.mxu0 0
      %3427 = vmatpush1.bf16.msra.mxu0 %v3222
      %3428 = vmatprep.subr.bf16.mxu0 0
      %3429 = vmatpush1.bf16.msra.mxu0 %v3223
      %3430 = vmatprep.subr.bf16.mxu0 0
      %3431 = vmatpush1.bf16.msra.mxu0 %v3224
      %3432 = vmatprep.subr.bf16.mxu0 0
      %3433 = vmatpush1.bf16.msra.mxu0 %v3225
      %3434 = vmatprep.subr.bf16.mxu0 0
      %3435 = vmatpush1.bf16.msra.mxu0 %v3226
      %3436 = vmatprep.subr.bf16.mxu0 0
      %3437 = vmatpush1.bf16.msra.mxu0 %v3227
      %3438 = vmatprep.subr.bf16.mxu0 0
      %3439 = vmatpush1.bf16.msra.mxu0 %v3228
      %3440 = vmatprep.subr.bf16.mxu0 0
      %3441 = vmatpush1.bf16.msra.mxu0 %v3229
      %3442 = vmatprep.subr.bf16.mxu0 0
      %3443 = vmatpush1.bf16.msra.mxu0 %v3230
      %3444 = vmatprep.subr.bf16.mxu0 0
      %3445 = vmatpush1.bf16.msra.mxu0 %v3231
      %3446 = vmatprep.subr.bf16.mxu0 0
      %3447 = vmatpush1.bf16.msra.mxu0 %v3232
      %3448 = vmatprep.subr.bf16.mxu0 0
      %3449 = vmatpush1.bf16.msra.mxu0 %v3233
      %3450 = vmatprep.mubr.bf16.mxu0 %v2775
      %3451 = vmatmul.mubr.bf16.gmra.mrb[0].mxu0 %v2774
      %v3452 = vpop.f32.mrb[0].mxu0
      %v3453 = vadd.f32 %v3413, %v3452
      %v3454 = vpop.f32.mrb[0].mxu0
      %v3455 = vpop.f32.mrb[0].mxu0
      %v3456 = vpop.f32.mrb[0].mxu0
      %3457 = vdwg.mxu0
      %vm3458 = vcmp.lt.f32.partialorder %v3453, 0.0
      %v3459 = vsel %vm3458, -1.0, 1.0
      %v3460 = vand.u32 2147483647, %v3453
      %vm3461 = vcmp.gt.f32.partialorder %v3460, 2.4142137
      %vm3462 = vcmp.gt.f32.partialorder %v3460, 0.41421357
      %v3463 = vsel %vm3461, %v3460, 2.0
      %v3464 = vadd.f32 %v3460, 1.0
      %v3465 = vsel %vm3462, %v3464, 2.0
      %v3466 = vrcp.pop %v3463
      %v3467 = vmul.f32 -1.0, %v3466
      %v3468 = vsub.f32 %v3460, 1.0
      %v3469 = vrcp.pop %v3465
      %v3470 = vmul.f32 %v3468, %v3469
      %v3471 = vsel %vm3462, %v3470, %v3460
      %v3472 = vsel %vm3461, %v3467, %v3471
      %v3473 = vsel %vm3462, 0.7853982, 0.0
      %v3474 = vsel %vm3461, 1.5707964, %v3473
      %v3475 = vmul.f32 %v3472, %v3472
      %v3476 = vmul.f32 %v3475, 0.080537446
      %v3477 = vsub.f32 %v3476, 0.13877685
      %v3478 = vmul.f32 %v3477, %v3475
      %v3479 = vadd.f32 %v3478, 0.19977711
      %v3480 = vmul.f32 %v3479, %v3475
      %v3481 = vsub.f32 %v3480, 0.3333295
      %v3482 = vmul.f32 %v3481, %v3475
      %v3483 = vmul.f32 %v3482, %v3472
      %v3484 = vadd.f32 %v3483, %v3472
      %v3485 = vadd.f32 %v3474, %v3484
      %v3486 = vmul.f32 %v3459, %v3485
      %v3487 = vmul.f32 %v3486, 1.272
      %v3488 = vmul.f32 %v3487, 1.442695
      %v3489 = vpow.pop %v3488
      %v3490 = vmul.f32 %v3489, %v827
      %3492 = vrot.lane.b32.xlu0 %v3453, 64
      %v3493 = vpop.permute.xlu0 %3492
      %v3495 = vadd.f32 %v3490, %v3493
      %v3496 = vld [vmem:[%s556] sm:$0xff]
      %v3497 = vsel %vm829, %v2155, 0.0
      %3498 = vadd.xlane.f32.xlu0 %v3497
      %v3499 = vpop.xlane.xlu0 %3498
      %v3500 = vsel %vm829, %v3487, 0.0
      %3501 = vadd.xlane.f32.xlu0 %v3500
      %v3502 = vpop.xlane.xlu0 %3501
      %v3503 = vadd.f32 %v3499, %v3502
      %v3504 = vadd.f32 %v3496, %v3503
      %vm3505 = vcmask 7168
      %3506 = vst.msk [vmem:[%s556] sm:$0xff] %vm3505, %v3504
      %3507 = vst.msk [vmem:[%s552] sm:$0xff] %vm829, %v2163
      %3509 = vrot.lane.b32.xlu0 %v3495, 64
      %v3510 = vpop.permute.xlu0 %3509
      %vm3512 = vcmask 1048064
      %3513 = vst.msk [vmem:[%s552] sm:$0xff] %vm3512, %v3510
      %v3514 = vld [vmem:[%s552] sm:$0xff]
      %v3515 = vpack.c.bf16 %v3514, %v3514
      %s3516 = smul.u32 %s33, 16
      %s3517 = smul.addr %s3516, 4
      %s3518 = scalar_lea.vmem %s14, %s3517
      %v3519 = vld [vmem:[%s3518] sm:$0xf]
      %v3520 = vld [vmem:[%s3518 + $0x4] sm:$0xf]
      %v3521 = vld [vmem:[%s3518 + $0x8] sm:$0xf]
      %v3522 = vld [vmem:[%s3518 + $0xc] sm:$0xf]
      %v3523 = vld [vmem:[%s3518 + $0x10] sm:$0xf]
      %v3524 = vld [vmem:[%s3518 + $0x14] sm:$0xf]
      %v3525 = vld [vmem:[%s3518 + $0x18] sm:$0xf]
      %v3526 = vld [vmem:[%s3518 + $0x1c] sm:$0xf]
      %v3527 = vld [vmem:[%s3518 + $0x20] sm:$0xf]
      %v3528 = vld [vmem:[%s3518 + $0x24] sm:$0xf]
      %v3529 = vld [vmem:[%s3518 + $0x28] sm:$0xf]
      %v3530 = vld [vmem:[%s3518 + $0x2c] sm:$0xf]
      %v3531 = vld [vmem:[%s3518 + $0x30] sm:$0xf]
      %v3532 = vld [vmem:[%s3518 + $0x34] sm:$0xf]
      %v3533 = vld [vmem:[%s3518 + $0x38] sm:$0xf]
      %v3534 = vld [vmem:[%s3518 + $0x3c] sm:$0xf]
      %v3551 = vunpack.c.l.b16 %v3519
      %v3552 = vunpack.c.l.b16 %v3520
      %v3553 = vunpack.c.l.b16 %v3521
      %v3554 = vunpack.c.l.b16 %v3522
      %v3555 = vunpack.c.l.b16 %v3523
      %v3556 = vunpack.c.l.b16 %v3524
      %v3557 = vunpack.c.l.b16 %v3525
      %v3558 = vunpack.c.l.b16 %v3526
      %v3559 = vunpack.c.l.b16 %v3527
      %v3560 = vunpack.c.l.b16 %v3528
      %v3561 = vunpack.c.l.b16 %v3529
      %v3562 = vunpack.c.l.b16 %v3530
      %v3563 = vunpack.c.l.b16 %v3531
      %v3564 = vunpack.c.l.b16 %v3532
      %v3565 = vunpack.c.l.b16 %v3533
      %v3566 = vunpack.c.l.b16 %v3534
      %v3567 = vpack.c.b16 %v3552, %v3551
      %v3568 = vpack.c.b16 %v3554, %v3553
      %v3569 = vpack.c.b16 %v3556, %v3555
      %v3570 = vpack.c.b16 %v3558, %v3557
      %v3571 = vpack.c.b16 %v3560, %v3559
      %v3572 = vpack.c.b16 %v3562, %v3561
      %v3573 = vpack.c.b16 %v3564, %v3563
      %v3574 = vpack.c.b16 %v3566, %v3565
      %3583 = vmatprep.subr.bf16.mxu0 0
      %3584 = vmatpush1.bf16.msra.mxu0 %v3567
      %3585 = vmatprep.subr.bf16.mxu0 0
      %3586 = vmatpush1.bf16.msra.mxu0 %v3568
      %3587 = vmatprep.subr.bf16.mxu0 0
      %3588 = vmatpush1.bf16.msra.mxu0 %v3569
      %3589 = vmatprep.subr.bf16.mxu0 0
      %3590 = vmatpush1.bf16.msra.mxu0 %v3570
      %3591 = vmatprep.subr.bf16.mxu0 0
      %3592 = vmatpush1.bf16.msra.mxu0 %v3571
      %3593 = vmatprep.subr.bf16.mxu0 0
      %3594 = vmatpush1.bf16.msra.mxu0 %v3572
      %3595 = vmatprep.subr.bf16.mxu0 0
      %3596 = vmatpush1.bf16.msra.mxu0 %v3573
      %3597 = vmatprep.subr.bf16.mxu0 0
      %3598 = vmatpush1.bf16.msra.mxu0 %v3574
      %3599 = vmatprep.subr.bf16.mxu0 0
      %3600 = vmatpush1.bf16.msra.mxu0 0
      %3601 = vmatprep.subr.bf16.mxu0 0
      %3602 = vmatpush1.bf16.msra.mxu0 0
      %3603 = vmatprep.subr.bf16.mxu0 0
      %3604 = vmatpush1.bf16.msra.mxu0 0
      %3605 = vmatprep.subr.bf16.mxu0 0
      %3606 = vmatpush1.bf16.msra.mxu0 0
      %3607 = vmatprep.subr.bf16.mxu0 0
      %3608 = vmatpush1.bf16.msra.mxu0 0
      %3609 = vmatprep.subr.bf16.mxu0 0
      %3610 = vmatpush1.bf16.msra.mxu0 0
      %3611 = vmatprep.subr.bf16.mxu0 0
      %3612 = vmatpush1.bf16.msra.mxu0 0
      %3613 = vmatprep.subr.bf16.mxu0 0
      %3614 = vmatpush1.bf16.msra.mxu0 0
      %3615 = vmatprep.mubr.bf16.mxu0 0
      %3616 = vmatmul.mubr.bf16.gmra.mrb[0].mxu0 %v3515
      %v3617 = vpop.f32.mrb[0].mxu0
      %v3618 = vadd.f32 0.0, %v3617
      %v3619 = vpop.f32.mrb[0].mxu0
      %v3620 = vpop.f32.mrb[0].mxu0
      %v3621 = vpop.f32.mrb[0].mxu0
      %3622 = vdwg.mxu0
      %3623 = vst [vmem:[%s552] sm:$0xff] %v3618
      %p3624 = scmp.lt.s32.totalorder %s32, 0
      %s3625 = scalar_select %p3624, %s32, 0
      %s3626 = smul.addr %s3625, 8
      %s3627 = scalar_lea.vmem %s15, %s3626
      %p3628 = scmp.lt.s32.totalorder %s32, 0
      %s3629 = scalar_select %p3628, %s32, 0
      %s3630 = smul.addr %s3629, 8
      %s3631 = scalar_lea.vmem %s16, %s3630
      // Predicated region
      $region85: #{_lambda_.1} parent=79 // pred_check
        %p3632 = pneg %p383
      $region86: #{_lambda_.1} parent=79 // pred_check_branch
        %3634 = sbr.rel (%p3632) target = $region88
      $region87: #{_lambda_.1} parent=79 // pred_region
        _
      $region88: #{_lambda_.1} parent=79 // pred_fallthru
        _
      // Predicated region
      $region89: #{_lambda_.1} parent=79 // pred_check
        %p3635 = pneg %p409
      $region90: #{_lambda_.1} parent=79 // pred_check_branch
        %3637 = sbr.rel (%p3635) target = $region92
      $region91: #{_lambda_.1} parent=79 // pred_region
        _
      $region92: #{_lambda_.1} parent=79 // pred_fallthru
        _
      // Predicated region
      $region93: #{_lambda_.1} parent=79 // pred_check
        %p3638 = pneg %p383
      $region94: #{_lambda_.1} parent=79 // pred_check_branch
        %3640 = sbr.rel (%p3638) target = $region96
      $region95: #{_lambda_.1} parent=79 // pred_region
        %p3641 = scmp.lt.s32.totalorder %s32, 0
        %s3642 = scalar_select %p3641, %s32, 0
        %s3643 = smul.addr %s3642, 8
        %s3644 = scalar_lea.vmem %s15, %s3643
      $region96: #{_lambda_.1} parent=79 // pred_fallthru
        _
      // Predicated region
      $region97: #{_lambda_.1} parent=79 // pred_check
        %p3645 = pneg %p409
      $region98: #{_lambda_.1} parent=79 // pred_check_branch
        %3647 = sbr.rel (%p3645) target = $region100
      $region99: #{_lambda_.1} parent=79 // pred_region
        %p3648 = scmp.lt.s32.totalorder %s32, 0
        %s3649 = scalar_select %p3648, %s32, 0
        %s3650 = smul.addr %s3649, 8
        %s3651 = scalar_lea.vmem %s16, %s3650
      $region100: #{_lambda_.1} parent=79 // pred_fallthru
        _
    $region80: #{_lambda_.1} parent=5 // pred_fallthru
      _
    %p3652 = scmp.le.s32.totalorder 2, %s23
    // Predicated region
    $region101: #{_lambda_.1} parent=5 // pred_check
      %p3653 = pneg %p3652
    $region102: #{_lambda_.1} parent=5 // pred_check_branch
      %3655 = sbr.rel (%p3653) target = $region104
    $region103: #{_lambda_.1} parent=5 // pred_region
      %s3656 = ssub.s32 %s23, 2
    $region104: #{_lambda_.1} parent=5 // pred_fallthru
      _
  $region6: #{_lambda_.1} parent=0 // loop_footer
    %s27 = sadd.s32 1, %s23
  $region7: #{_lambda_.1} parent=0 // loop_footer_branch
    %22 = sbr.rel target = $region3
  $region8: #{_lambda_.1} parent=0 // loop_exit
    _

</llo_original>
